<compile_context>
chip_gen: v7x
topology: tpu7x:2x2x1
jax: 0.10.0
libtpu: 0.0.40
codegen_flags: <defaults>
</compile_context>

<pallas_src>
import jax
import jax.numpy as jnp
from jax.experimental import pallas as pl
from jax.experimental.pallas import tpu as pltpu  # noqa: F401

# ----------------------- synthetic mesh / config -----------------------
B = 2
H = 16            # latitude
W = 16            # longitude
N_LEVELS = 8      # mesh.n_levels (divisible by 4)
N_PR_VARS = 2     # mesh.n_pr_vars
N_SFC_VARS = 3    # mesh.n_sfc_vars
N_ADDL_VARS = 2
N_CONST_VARS = 2  # len(cvars) from get_constant_vars
LATENT = 32       # config.latent_size
WINDOW = (2, 2, 2)                    # config.window_size -> wpad = WINDOW[2] // 2
SFC_DIMS = (96, 192, 512, LATENT)     # EarthConvEncoder2d conv_dims
TOTAL_SFC = N_SFC_VARS + N_ADDL_VARS + N_CONST_VARS  # 7
N_PR_FLAT = N_LEVELS * N_PR_VARS      # mesh.n_pr

LANE = 128


def _round_up(n, m=LANE):
    return ((n + m - 1) // m) * m


C0P = _round_up(SFC_DIMS[0])   # 96  -> 128
C1P = _round_up(SFC_DIMS[1])   # 192 -> 256
C2P = _round_up(SFC_DIMS[2])   # 512 -> 512
LATP = _round_up(LATENT)       # 32  -> 128
K_PR = N_PR_VARS * 4 * 8 * 8   # 512 (Conv3d kernel (4,8,8), channel-last flatten)
K0 = 4 * TOTAL_SFC             # 28  (2x2 kernel, channel-last flatten)
K0P = _round_up(K0)            # 28  -> 128 (lane-dense stage-0 K)


# ----------------------- fused Pallas kernel -----------------------
def _fused_encoder_kernel(ppr_ref, psfc_ref,
                          wpr_ref, bpr_ref,
                          w0_ref, b0_ref, w1_ref, b1_ref,
                          w2_ref, b2_ref, w3_ref, b3_ref,
                          opr_ref, osfc_ref):
    f32, bf16 = jnp.float32, jnp.bfloat16

    # ---- pressure Conv3d (kernel == stride == (4,8,8)) as one patch-matmul ----
    opr_ref[...] = (jnp.dot(ppr_ref[...], wpr_ref[...], preferred_element_type=f32)
                    + bpr_ref[...])

    # ---- sfc stage 0: 2x2 / stride-2 conv, TOTAL_SFC -> 96 (lanes padded to 128) ----
    y0 = (jnp.dot(psfc_ref[...], w0_ref[...], preferred_element_type=f32)
          + b0_ref[...])
    # TODO(synk): torch nn.GELU defaults to exact (erf) GELU; tanh-approx used here.
    y0 = jax.nn.gelu(y0, approximate=True)

    # Stage-0 rows are ordered (tap=(dh,dw), r, s, tile), so each following stride-2 conv
    # is a sum over its 4 kernel taps of block-row matmuls: intermediates never leave
    # VMEM and no transpose/repack is required.

    # ---- sfc stage 1: 2x2 / stride-2 conv, 96 -> 192 (128 -> 256 padded) ----
    y0_bf = y0.astype(bf16)                       # single cast, sliced per tap below
    m1 = y0_bf.shape[0] // 4
    acc1 = jnp.dot(y0_bf[0:m1], w1_ref[0:C0P, :], preferred_element_type=f32)
    for j in range(1, 4):
        acc1 = acc1 + jnp.dot(y0_bf[j * m1:(j + 1) * m1],
                              w1_ref[j * C0P:(j + 1) * C0P, :],
                              preferred_element_type=f32)
    y1 = jax.nn.gelu(acc1 + b1_ref[...], approximate=True)

    # ---- sfc stage 2: 2x2 / stride-2 conv, 192 -> 512 (256-padded input rows) ----
    y1_bf = y1.astype(bf16)
    m2 = y1_bf.shape[0] // 4
    acc2 = jnp.dot(y1_bf[0:m2], w2_ref[0:C1P, :], preferred_element_type=f32)
    for j in range(1, 4):
        acc2 = acc2 + jnp.dot(y1_bf[j * m2:(j + 1) * m2],
                              w2_ref[j * C1P:(j + 1) * C1P, :],
                              preferred_element_type=f32)
    y2 = jax.nn.gelu(acc2 + b2_ref[...], approximate=True)

    # ---- sfc stage 3: 1x1 conv, 512 -> 32 (lane-padded to 128), no activation ----
    osfc_ref[...] = (jnp.dot(y2.astype(bf16), w3_ref[...], preferred_element_type=f32)
                     + b3_ref[...])


def fused_encoder(params, patches_pr, patches_sfc):
    """Run the whole encoder (pr Conv3d + 4 sfc stages) in a single pallas_call."""
    m_pr = patches_pr.shape[0]
    m0 = patches_sfc.shape[0]
    assert m0 % 16 == 0
    m_tile = m0 // 16   # = B * (H//8) * (W//8)

    flops = 2 * (m_pr * K_PR * LATP
                 + m0 * K0P * C0P
                 + 4 * (m0 // 4) * C0P * C1P
                 + 4 * m_tile * C1P * C2P
                 + m_tile * C2P * LATP)
    transcendentals = m0 * C0P + (m0 // 4) * C1P + m_tile * C2P
    args = (patches_pr, patches_sfc,
            params["pr_w"], params["pr_b"],
            params["sfc0_w"], params["sfc0_b"],
            params["sfc1_w"], params["sfc1_b"],
            params["sfc2_w"], params["sfc2_b"],
            params["sfc3_w"], params["sfc3_b"])
    bytes_accessed = (sum(int(a.size) * a.dtype.itemsize for a in args)
                      + (m_pr + m_tile) * LATP * 4)

    out_pr, out_sfc = pl.pallas_call(
        _fused_encoder_kernel,
        out_shape=(jax.ShapeDtypeStruct((m_pr, LATP), jnp.float32),
                   jax.ShapeDtypeStruct((m_tile, LATP), jnp.float32)),
        cost_estimate=pl.CostEstimate(flops=flops,
                                      transcendentals=transcendentals,
                                      bytes_accessed=bytes_accessed),
    )(*args)
    return out_pr, out_sfc


# ----------------------- im2col glue (channel-last, one-time, tiny) -----------------------
def pr_patches(x_pr_flat):
    # x_pr_flat: (B, H, W, Cpr*D) with (Cpr, D) split, D minor (matches torch .view)
    b, h, w, _ = x_pr_flat.shape
    x = x_pr_flat.reshape(b, h, w, N_PR_VARS, N_LEVELS)
    x = x.transpose(0, 4, 1, 2, 3)                      # (B, D, H, W, Cpr) channel-last
    do, ho, wo = N_LEVELS // 4, h // 8, w // 8
    x = x.reshape(b, do, 4, ho, 8, wo, 8, N_PR_VARS)
    x = x.transpose(0, 1, 3, 5, 2, 4, 6, 7)             # (b, do, ho, wo, kd, kh, kw, C)
    return x.reshape(b * do * ho * wo, K_PR)


def sfc_patches_hier(x):
    # x: (B, H, W, C) channel-last.  Row ordering of the returned patch matrix is
    # (dh, dw, r, s, b, th, tw): the tap index of the *next* 2x2 conv outermost, then its
    # output position (r, s), then the (batch, 8x8-tile) index.  K is (kh, kw, C),
    # zero-padded to K0P so the stage-0 matmul input is lane-dense.
    b, h, w, c = x.shape
    h8, w8 = h // 8, w // 8
    x = x.reshape(b, h8, 2, 2, 2, w8, 2, 2, 2, c)       # (b, th, r, dh, kh, tw, s, dw, kw, C)
    x = x.transpose(3, 7, 2, 6, 0, 1, 5, 4, 8, 9)       # (dh, dw, r, s, b, th, tw, kh, kw, C)
    x = x.reshape(16 * b * h8 * w8, 4 * c)
    return jnp.pad(x, ((0, 0), (0, K0P - 4 * c)))


# ----------------------- module pieces -----------------------
def get_additional_vars(t0):
    # TODO(synk): exact get_additional_vars(t0) (time-of-day / day-of-year features) not
    # provided; synthesize deterministic sin/cos features of t0 over the grid (channel-last).
    hh = jnp.arange(H, dtype=jnp.float32)[:, None]
    ww = jnp.arange(W, dtype=jnp.float32)[None, :]
    phase = t0.astype(jnp.float32)
    a0 = jnp.sin(phase / 24.0 + hh / H * jnp.pi) * jnp.ones((H, W), jnp.float32)
    a1 = jnp.cos(phase / 24.0 + ww / W * 2.0 * jnp.pi) * jnp.ones((H, W), jnp.float32)
    addl = jnp.stack([a0, a1], axis=-1)                 # (H, W, N_ADDL_VARS)
    return jnp.broadcast_to(addl[None], (B, H, W, N_ADDL_VARS))


def embedding_crap(x_pr, x_sfc):
    # x_pr: (B, Dl, Hl, Wl, C) channel-last; x_sfc: (B, Hl, Wl, C) channel-last.
    # oldpr=True: crop latitude rows to :90 (no-op at these synthetic sizes)
    x_pr = x_pr[:, :, :90]
    x_sfc = x_sfc[:, :90]
    x = jnp.concatenate([x_pr, x_sfc[:, None]], axis=1)  # (B, Dl+1, Hl, Wl, C)
    # TODO(synk): posemb_sincos_3d (config.tr_embedding == 'sincos') definition not provided; omitted.
    wpad = WINDOW[2] // 2
    # TODO(synk): earth_pad3d assumed to be circular (wrap) padding along longitude W.
    return jnp.pad(x, ((0, 0), (0, 0), (0, 0), (wpad, wpad), (0, 0)), mode="wrap")


def res_conv_encoder_forward(params, x, t0):
    # config.oldpr = True path of forward()
    b = x.shape[0]

    # --- im2col on the raw inputs (channel-last, stays on the lane axis) ---
    patches_pr = pr_patches(x[..., :N_PR_FLAT]).astype(jnp.bfloat16)

    # TODO(synk): southpole_pad2d definition not provided; treated as identity here.
    x_sfc_in = jnp.concatenate(
        [x[..., N_PR_FLAT:],                                              # (B,H,W,n_sfc)
         get_additional_vars(t0),                                         # (B,H,W,n_addl)
         jnp.broadcast_to(params["const_data"], (b, H, W, N_CONST_VARS))],
        axis=-1)                                                          # (B,H,W,TOTAL_SFC)
    # TODO(synk): EarthConvEncoder2d (residual blocks / pole convs / norm) definition not
    # provided; approximated as stride-2 patch convs (in->96->192->512) + 1x1 conv -> latent
    # with GELU between stages (same 8x downsample / channel schedule), fully fused below.
    patches_sfc = sfc_patches_hier(x_sfc_in).astype(jnp.bfloat16)

    # --- single fused Pallas kernel: pr Conv3d + all 4 sfc stages, VMEM-resident chain ---
    out_pr, out_sfc = fused_encoder(params, patches_pr, patches_sfc)

    h8, w8 = H // 8, W // 8
    x_pr = out_pr[:, :LATENT].reshape(b, N_LEVELS // 4, h8, w8, LATENT)   # (B,Dl,Hl,Wl,C)
    x_sfc = out_sfc[:, :LATENT].reshape(b, h8, w8, LATENT)                # (B,Hl,Wl,C)
    out = embedding_crap(x_pr, x_sfc)
    # TODO(synk): SlideLayers3D windowed transformer (self.tr) definition not provided; omitted.
    return out


# ----------------------- deterministic parameter init -----------------------
def init_params(key):
    keys = jax.random.split(key, 10)
    bf16 = jnp.bfloat16
    p = {}

    def w_pad(k, kin, cout, cout_pad, fan_in, kin_pad=None):
        kin_pad = kin if kin_pad is None else kin_pad
        w = jax.random.normal(k, (kin, cout), jnp.float32) / jnp.sqrt(jnp.float32(fan_in))
        return jnp.pad(w, ((0, kin_pad - kin), (0, cout_pad - cout)))

    def b_pad(k, cout, cout_pad):
        bb = jax.random.normal(k, (cout,), jnp.float32) * 0.01
        return jnp.pad(bb, (0, cout_pad - cout)).reshape(1, cout_pad)

    def tap_w(k, cin, cin_pad, cout, cout_pad, fan_in):
        # 4 kernel taps stacked along K: rows [j*cin_pad, j*cin_pad+cin) hold tap j's
        # (cin, cout) matrix; padded rows/cols are zero so padded channels stay zero.
        kk = jax.random.split(k, 4)
        taps = [jnp.pad(jax.random.normal(kk[j], (cin, cout), jnp.float32)
                        / jnp.sqrt(jnp.float32(fan_in)),
                        ((0, cin_pad - cin), (0, cout_pad - cout)))
                for j in range(4)]
        return jnp.concatenate(taps, axis=0)

    # pr_encoder: nn.Conv3d(Cpr -> latent, kernel=stride=(4,8,8)); weight stored as
    # (K, N_pad) with K flattened in channel-last (kd, kh, kw, Cpr) patch order.
    p["pr_w"] = w_pad(keys[0], K_PR, LATENT, LATP, K_PR).astype(bf16)
    p["pr_b"] = b_pad(keys[1], LATENT, LATP)

    # sfc stage 0: 2x2/s2, TOTAL_SFC -> 96; K flattened (kh, kw, C), zero-padded to K0P
    p["sfc0_w"] = w_pad(keys[2], K0, SFC_DIMS[0], C0P, K0, kin_pad=K0P).astype(bf16)
    p["sfc0_b"] = b_pad(keys[3], SFC_DIMS[0], C0P)
    # sfc stage 1: 2x2/s2, 96 -> 192 (lane-padded 128 -> 256)
    p["sfc1_w"] = tap_w(keys[4], SFC_DIMS[0], C0P, SFC_DIMS[1], C1P, 4 * SFC_DIMS[0]).astype(bf16)
    p["sfc1_b"] = b_pad(keys[5], SFC_DIMS[1], C1P)
    # sfc stage 2: 2x2/s2, 192 -> 512 (lane-padded 256 -> 512)
    p["sfc2_w"] = tap_w(keys[6], SFC_DIMS[1], C1P, SFC_DIMS[2], C2P, 4 * SFC_DIMS[1]).astype(bf16)
    p["sfc2_b"] = b_pad(keys[7], SFC_DIMS[2], C2P)
    # sfc stage 3: 1x1, 512 -> latent (lane-padded to 128)
    p["sfc3_w"] = w_pad(keys[8], SFC_DIMS[2], LATENT, LATP, SFC_DIMS[2]).astype(bf16)
    p["sfc3_b"] = b_pad(keys[9], LATENT, LATP)

    # const_data buffer (deterministic lat/lon features), channel-last (1, H, W, N_CONST_VARS)
    lat = jnp.linspace(-1.0, 1.0, H, dtype=jnp.float32)[:, None] * jnp.ones((H, W), jnp.float32)
    lon = jnp.linspace(0.0, 2.0 * jnp.pi, W, dtype=jnp.float32)[None, :] * jnp.ones((H, W), jnp.float32)
    p["const_data"] = jnp.stack([jnp.sin(lat * jnp.pi / 2.0), jnp.cos(lon)], axis=-1)[None]
    return p


if __name__ == "__main__":
    key = jax.random.PRNGKey(0)
    kx, kp = jax.random.split(key)
    x = jax.random.normal(kx, (B, H, W, N_PR_FLAT + N_SFC_VARS), jnp.float32)  # (2,16,16,19)
    t0 = jnp.array(1234.0, jnp.float32)
    params = init_params(kp)

    fwd = jax.jit(res_conv_encoder_forward)
    out = fwd(params, x, t0)
    jax.block_until_ready(out)

    expected = (B, N_LEVELS // 4 + 1, H // 8, W // 8 + 2 * (WINDOW[2] // 2), LATENT)
    assert out.shape == expected, (out.shape, expected)
    assert jnp.all(jnp.isfinite(out))
    print("KERNEL_OK")
</pallas_src>

<mosaic_0001>
module attributes {stable_mosaic.version = 11 : i64} {
  func.func @_fused_encoder_kernel(%arg0: memref<16x512xbf16, #tpu.memory_space<vmem>>, %arg1: memref<128x128xbf16, #tpu.memory_space<vmem>>, %arg2: memref<512x128xbf16, #tpu.memory_space<vmem>>, %arg3: memref<1x128xf32, #tpu.memory_space<vmem>>, %arg4: memref<128x128xbf16, #tpu.memory_space<vmem>>, %arg5: memref<1x128xf32, #tpu.memory_space<vmem>>, %arg6: memref<512x256xbf16, #tpu.memory_space<vmem>>, %arg7: memref<1x256xf32, #tpu.memory_space<vmem>>, %arg8: memref<1024x512xbf16, #tpu.memory_space<vmem>>, %arg9: memref<1x512xf32, #tpu.memory_space<vmem>>, %arg10: memref<512x128xbf16, #tpu.memory_space<vmem>>, %arg11: memref<1x128xf32, #tpu.memory_space<vmem>>, %arg12: memref<16x128xf32, #tpu.memory_space<vmem>>, %arg13: memref<8x128xf32, #tpu.memory_space<vmem>>) attributes {dimension_semantics = [], scalar_prefetch = 0 : i64, scratch_operands = 0 : i64, tpu.core_type = #tpu.core_type<tc>} {
    %c0 = arith.constant 0 : index
    %c0_0 = arith.constant 0 : index
    %0 = vector.load %arg0[%c0, %c0_0] : memref<16x512xbf16, #tpu.memory_space<vmem>>, vector<16x512xbf16>
    %c0_1 = arith.constant 0 : index
    %c0_2 = arith.constant 0 : index
    %1 = vector.load %arg2[%c0_1, %c0_2] : memref<512x128xbf16, #tpu.memory_space<vmem>>, vector<512x128xbf16>
    %cst = arith.constant dense<0.000000e+00> : vector<16x128xf32>
    %2 = tpu.matmul %0, %1, %cst {dimension_numbers = #tpu.dot_dimension_numbers<[1], [0], [0], [1], [0, 0, 1, 1], [], []>} : vector<16x512xbf16>, vector<512x128xbf16>, vector<16x128xf32> -> vector<16x128xf32>
    %c0_3 = arith.constant 0 : index
    %c0_4 = arith.constant 0 : index
    %3 = vector.load %arg3[%c0_3, %c0_4] : memref<1x128xf32, #tpu.memory_space<vmem>>, vector<1x128xf32>
    %4 = vector.broadcast %3 : vector<1x128xf32> to vector<16x128xf32>
    %5 = arith.addf %2, %4 : vector<16x128xf32>
    %c0_5 = arith.constant 0 : index
    %c0_6 = arith.constant 0 : index
    %6 = vector.load %arg12[%c0_5, %c0_6] : memref<16x128xf32, #tpu.memory_space<vmem>>, vector<16x128xf32>
    tpu.vector_store %arg12[%c0_5, %c0_6], %5 {strides = array<i32>} : memref<16x128xf32, #tpu.memory_space<vmem>>, vector<16x128xf32>,
    %c0_7 = arith.constant 0 : index
    %c0_8 = arith.constant 0 : index
    %7 = vector.load %arg1[%c0_7, %c0_8] : memref<128x128xbf16, #tpu.memory_space<vmem>>, vector<128x128xbf16>
    %c0_9 = arith.constant 0 : index
    %c0_10 = arith.constant 0 : index
    %8 = vector.load %arg4[%c0_9, %c0_10] : memref<128x128xbf16, #tpu.memory_space<vmem>>, vector<128x128xbf16>
    %cst_11 = arith.constant dense<0.000000e+00> : vector<128x128xf32>
    %9 = tpu.matmul %7, %8, %cst_11 {dimension_numbers = #tpu.dot_dimension_numbers<[1], [0], [0], [1], [0, 0, 1, 1], [], []>} : vector<128x128xbf16>, vector<128x128xbf16>, vector<128x128xf32> -> vector<128x128xf32>
    %c0_12 = arith.constant 0 : index
    %c0_13 = arith.constant 0 : index
    %10 = vector.load %arg5[%c0_12, %c0_13] : memref<1x128xf32, #tpu.memory_space<vmem>>, vector<1x128xf32>
    %11 = vector.broadcast %10 : vector<1x128xf32> to vector<128x128xf32>
    %12 = arith.addf %9, %11 : vector<128x128xf32>
    %13 = arith.mulf %12, %12 : vector<128x128xf32>
    %14 = arith.mulf %12, %13 : vector<128x128xf32>
    %cst_14 = arith.constant 4.471500e-02 : f32
    %15 = vector.broadcast %cst_14 : f32 to vector<128x128xf32>
    %16 = arith.mulf %15, %14 : vector<128x128xf32>
    %17 = arith.addf %12, %16 : vector<128x128xf32>
    %cst_15 = arith.constant 0.797884583 : f32
    %18 = vector.broadcast %cst_15 : f32 to vector<128x128xf32>
    %19 = arith.mulf %18, %17 : vector<128x128xf32>
    %20 = math.tanh %19 : vector<128x128xf32>
    %cst_16 = arith.constant 1.000000e+00 : f32
    %21 = vector.broadcast %cst_16 : f32 to vector<128x128xf32>
    %22 = arith.addf %21, %20 : vector<128x128xf32>
    %cst_17 = arith.constant 5.000000e-01 : f32
    %23 = vector.broadcast %cst_17 : f32 to vector<128x128xf32>
    %24 = arith.mulf %23, %22 : vector<128x128xf32>
    %25 = arith.mulf %12, %24 : vector<128x128xf32>
    %26 = arith.truncf %25 : vector<128x128xf32> to vector<128x128xbf16>
    %27 = vector.extract_strided_slice %26 {offsets = [0, 0], sizes = [32, 128], strides = [1, 1]} : vector<128x128xbf16> to vector<32x128xbf16>
    %c0_18 = arith.constant 0 : index
    %c0_19 = arith.constant 0 : index
    %28 = vector.load %arg6[%c0_18, %c0_19] : memref<512x256xbf16, #tpu.memory_space<vmem>>, vector<128x256xbf16>
    %cst_20 = arith.constant dense<0.000000e+00> : vector<32x256xf32>
    %29 = tpu.matmul %27, %28, %cst_20 {dimension_numbers = #tpu.dot_dimension_numbers<[1], [0], [0], [1], [0, 0, 1, 1], [], []>} : vector<32x128xbf16>, vector<128x256xbf16>, vector<32x256xf32> -> vector<32x256xf32>
    %30 = vector.extract_strided_slice %26 {offsets = [32, 0], sizes = [32, 128], strides = [1, 1]} : vector<128x128xbf16> to vector<32x128xbf16>
    %c128 = arith.constant 128 : index
    %c0_21 = arith.constant 0 : index
    %31 = vector.load %arg6[%c128, %c0_21] : memref<512x256xbf16, #tpu.memory_space<vmem>>, vector<128x256xbf16>
    %cst_22 = arith.constant dense<0.000000e+00> : vector<32x256xf32>
    %32 = tpu.matmul %30, %31, %cst_22 {dimension_numbers = #tpu.dot_dimension_numbers<[1], [0], [0], [1], [0, 0, 1, 1], [], []>} : vector<32x128xbf16>, vector<128x256xbf16>, vector<32x256xf32> -> vector<32x256xf32>
    %33 = arith.addf %29, %32 : vector<32x256xf32>
    %34 = vector.extract_strided_slice %26 {offsets = [64, 0], sizes = [32, 128], strides = [1, 1]} : vector<128x128xbf16> to vector<32x128xbf16>
    %c256 = arith.constant 256 : index
    %c0_23 = arith.constant 0 : index
    %35 = vector.load %arg6[%c256, %c0_23] : memref<512x256xbf16, #tpu.memory_space<vmem>>, vector<128x256xbf16>
    %cst_24 = arith.constant dense<0.000000e+00> : vector<32x256xf32>
    %36 = tpu.matmul %34, %35, %cst_24 {dimension_numbers = #tpu.dot_dimension_numbers<[1], [0], [0], [1], [0, 0, 1, 1], [], []>} : vector<32x128xbf16>, vector<128x256xbf16>, vector<32x256xf32> -> vector<32x256xf32>
    %37 = arith.addf %33, %36 : vector<32x256xf32>
    %38 = vector.extract_strided_slice %26 {offsets = [96, 0], sizes = [32, 128], strides = [1, 1]} : vector<128x128xbf16> to vector<32x128xbf16>
    %c384 = arith.constant 384 : index
    %c0_25 = arith.constant 0 : index
    %39 = vector.load %arg6[%c384, %c0_25] : memref<512x256xbf16, #tpu.memory_space<vmem>>, vector<128x256xbf16>
    %cst_26 = arith.constant dense<0.000000e+00> : vector<32x256xf32>
    %40 = tpu.matmul %38, %39, %cst_26 {dimension_numbers = #tpu.dot_dimension_numbers<[1], [0], [0], [1], [0, 0, 1, 1], [], []>} : vector<32x128xbf16>, vector<128x256xbf16>, vector<32x256xf32> -> vector<32x256xf32>
    %41 = arith.addf %37, %40 : vector<32x256xf32>
    %c0_27 = arith.constant 0 : index
    %c0_28 = arith.constant 0 : index
    %42 = vector.load %arg7[%c0_27, %c0_28] : memref<1x256xf32, #tpu.memory_space<vmem>>, vector<1x256xf32>
    %43 = vector.broadcast %42 : vector<1x256xf32> to vector<32x256xf32>
    %44 = arith.addf %41, %43 : vector<32x256xf32>
    %45 = arith.mulf %44, %44 : vector<32x256xf32>
    %46 = arith.mulf %44, %45 : vector<32x256xf32>
    %cst_29 = arith.constant 4.471500e-02 : f32
    %47 = vector.broadcast %cst_29 : f32 to vector<32x256xf32>
    %48 = arith.mulf %47, %46 : vector<32x256xf32>
    %49 = arith.addf %44, %48 : vector<32x256xf32>
    %cst_30 = arith.constant 0.797884583 : f32
    %50 = vector.broadcast %cst_30 : f32 to vector<32x256xf32>
    %51 = arith.mulf %50, %49 : vector<32x256xf32>
    %52 = math.tanh %51 : vector<32x256xf32>
    %cst_31 = arith.constant 1.000000e+00 : f32
    %53 = vector.broadcast %cst_31 : f32 to vector<32x256xf32>
    %54 = arith.addf %53, %52 : vector<32x256xf32>
    %cst_32 = arith.constant 5.000000e-01 : f32
    %55 = vector.broadcast %cst_32 : f32 to vector<32x256xf32>
    %56 = arith.mulf %55, %54 : vector<32x256xf32>
    %57 = arith.mulf %44, %56 : vector<32x256xf32>
    %58 = arith.truncf %57 : vector<32x256xf32> to vector<32x256xbf16>
    %59 = vector.extract_strided_slice %58 {offsets = [0, 0], sizes = [8, 256], strides = [1, 1]} : vector<32x256xbf16> to vector<8x256xbf16>
    %c0_33 = arith.constant 0 : index
    %c0_34 = arith.constant 0 : index
    %60 = vector.load %arg8[%c0_33, %c0_34] : memref<1024x512xbf16, #tpu.memory_space<vmem>>, vector<256x512xbf16>
    %cst_35 = arith.constant dense<0.000000e+00> : vector<8x512xf32>
    %61 = tpu.matmul %59, %60, %cst_35 {dimension_numbers = #tpu.dot_dimension_numbers<[1], [0], [0], [1], [0, 0, 1, 1], [], []>} : vector<8x256xbf16>, vector<256x512xbf16>, vector<8x512xf32> -> vector<8x512xf32>
    %62 = vector.extract_strided_slice %58 {offsets = [8, 0], sizes = [8, 256], strides = [1, 1]} : vector<32x256xbf16> to vector<8x256xbf16>
    %c256_36 = arith.constant 256 : index
    %c0_37 = arith.constant 0 : index
    %63 = vector.load %arg8[%c256_36, %c0_37] : memref<1024x512xbf16, #tpu.memory_space<vmem>>, vector<256x512xbf16>
    %cst_38 = arith.constant dense<0.000000e+00> : vector<8x512xf32>
    %64 = tpu.matmul %62, %63, %cst_38 {dimension_numbers = #tpu.dot_dimension_numbers<[1], [0], [0], [1], [0, 0, 1, 1], [], []>} : vector<8x256xbf16>, vector<256x512xbf16>, vector<8x512xf32> -> vector<8x512xf32>
    %65 = arith.addf %61, %64 : vector<8x512xf32>
    %66 = vector.extract_strided_slice %58 {offsets = [16, 0], sizes = [8, 256], strides = [1, 1]} : vector<32x256xbf16> to vector<8x256xbf16>
    %c512 = arith.constant 512 : index
    %c0_39 = arith.constant 0 : index
    %67 = vector.load %arg8[%c512, %c0_39] : memref<1024x512xbf16, #tpu.memory_space<vmem>>, vector<256x512xbf16>
    %cst_40 = arith.constant dense<0.000000e+00> : vector<8x512xf32>
    %68 = tpu.matmul %66, %67, %cst_40 {dimension_numbers = #tpu.dot_dimension_numbers<[1], [0], [0], [1], [0, 0, 1, 1], [], []>} : vector<8x256xbf16>, vector<256x512xbf16>, vector<8x512xf32> -> vector<8x512xf32>
    %69 = arith.addf %65, %68 : vector<8x512xf32>
    %70 = vector.extract_strided_slice %58 {offsets = [24, 0], sizes = [8, 256], strides = [1, 1]} : vector<32x256xbf16> to vector<8x256xbf16>
    %c768 = arith.constant 768 : index
    %c0_41 = arith.constant 0 : index
    %71 = vector.load %arg8[%c768, %c0_41] : memref<1024x512xbf16, #tpu.memory_space<vmem>>, vector<256x512xbf16>
    %cst_42 = arith.constant dense<0.000000e+00> : vector<8x512xf32>
    %72 = tpu.matmul %70, %71, %cst_42 {dimension_numbers = #tpu.dot_dimension_numbers<[1], [0], [0], [1], [0, 0, 1, 1], [], []>} : vector<8x256xbf16>, vector<256x512xbf16>, vector<8x512xf32> -> vector<8x512xf32>
    %73 = arith.addf %69, %72 : vector<8x512xf32>
    %c0_43 = arith.constant 0 : index
    %c0_44 = arith.constant 0 : index
    %74 = vector.load %arg9[%c0_43, %c0_44] : memref<1x512xf32, #tpu.memory_space<vmem>>, vector<1x512xf32>
    %75 = vector.broadcast %74 : vector<1x512xf32> to vector<8x512xf32>
    %76 = arith.addf %73, %75 : vector<8x512xf32>
    %77 = arith.mulf %76, %76 : vector<8x512xf32>
    %78 = arith.mulf %76, %77 : vector<8x512xf32>
    %cst_45 = arith.constant 4.471500e-02 : f32
    %79 = vector.broadcast %cst_45 : f32 to vector<8x512xf32>
    %80 = arith.mulf %79, %78 : vector<8x512xf32>
    %81 = arith.addf %76, %80 : vector<8x512xf32>
    %cst_46 = arith.constant 0.797884583 : f32
    %82 = vector.broadcast %cst_46 : f32 to vector<8x512xf32>
    %83 = arith.mulf %82, %81 : vector<8x512xf32>
    %84 = math.tanh %83 : vector<8x512xf32>
    %cst_47 = arith.constant 1.000000e+00 : f32
    %85 = vector.broadcast %cst_47 : f32 to vector<8x512xf32>
    %86 = arith.addf %85, %84 : vector<8x512xf32>
    %cst_48 = arith.constant 5.000000e-01 : f32
    %87 = vector.broadcast %cst_48 : f32 to vector<8x512xf32>
    %88 = arith.mulf %87, %86 : vector<8x512xf32>
    %89 = arith.mulf %76, %88 : vector<8x512xf32>
    %90 = arith.truncf %89 : vector<8x512xf32> to vector<8x512xbf16>
    %c0_49 = arith.constant 0 : index
    %c0_50 = arith.constant 0 : index
    %91 = vector.load %arg10[%c0_49, %c0_50] : memref<512x128xbf16, #tpu.memory_space<vmem>>, vector<512x128xbf16>
    %cst_51 = arith.constant dense<0.000000e+00> : vector<8x128xf32>
    %92 = tpu.matmul %90, %91, %cst_51 {dimension_numbers = #tpu.dot_dimension_numbers<[1], [0], [0], [1], [0, 0, 1, 1], [], []>} : vector<8x512xbf16>, vector<512x128xbf16>, vector<8x128xf32> -> vector<8x128xf32>
    %c0_52 = arith.constant 0 : index
    %c0_53 = arith.constant 0 : index
    %93 = vector.load %arg11[%c0_52, %c0_53] : memref<1x128xf32, #tpu.memory_space<vmem>>, vector<1x128xf32>
    %94 = vector.broadcast %93 : vector<1x128xf32> to vector<8x128xf32>
    %95 = arith.addf %92, %94 : vector<8x128xf32>
    %c0_54 = arith.constant 0 : index
    %c0_55 = arith.constant 0 : index
    %96 = vector.load %arg13[%c0_54, %c0_55] : memref<8x128xf32, #tpu.memory_space<vmem>>, vector<8x128xf32>
    tpu.vector_store %arg13[%c0_54, %c0_55], %95 {strides = array<i32>} : memref<8x128xf32, #tpu.memory_space<vmem>>, vector<8x128xf32>,
    return
  }
}

</mosaic_0001>

<llo_original>
// kernel: res_conv_encoder_forward.1
$region0: #{res_conv_encoder_forward.1}
  #allocation0 [shape = 'u32[]', space=smem, size = 0x4, offset = 0x4, fixed_abs, tag = 'smem constant byte address 0x4 - core index']
  #allocation1 [shape = 'u32[144,128]{1,0:T(1,128)}', space=vmem, size = 0x12000, scoped, tag = 'internal scratch']
  %s0 = inlined_call_operand.vmem [shape: bf16[16,512], index: 0, kind: input, shape index: {}]
  %s1 = inlined_call_operand.vmem [shape: bf16[128,128], index: 1, kind: input, shape index: {}]
  %s2 = inlined_call_operand.vmem [shape: bf16[512,128], index: 2, kind: input, shape index: {}]
  %s3 = inlined_call_operand.vmem [shape: f32[1,128], index: 3, kind: input, shape index: {}]
  %s4 = inlined_call_operand.vmem [shape: bf16[128,128], index: 4, kind: input, shape index: {}]
  %s5 = inlined_call_operand.vmem [shape: f32[1,128], index: 5, kind: input, shape index: {}]
  %s6 = inlined_call_operand.vmem [shape: bf16[512,256], index: 6, kind: input, shape index: {}]
  %s7 = inlined_call_operand.vmem [shape: f32[1,256], index: 7, kind: input, shape index: {}]
  %s8 = inlined_call_operand.vmem [shape: bf16[1024,512], index: 8, kind: input, shape index: {}]
  %s9 = inlined_call_operand.vmem [shape: f32[1,512], index: 9, kind: input, shape index: {}]
  %s10 = inlined_call_operand.vmem [shape: bf16[512,128], index: 10, kind: input, shape index: {}]
  %s11 = inlined_call_operand.vmem [shape: f32[1,128], index: 11, kind: input, shape index: {}]
  %s12 = inlined_call_operand.vmem [shape: f32[16,128], index: 12, kind: output, shape index: {0}]
  %s13 = inlined_call_operand.vmem [shape: f32[8,128], index: 13, kind: output, shape index: {1}]
  %14 = xla_tuple %s12, %s13
  %s15 = sld [smem:[#allocation0]]
  $region66: #{res_conv_encoder_forward.1} parent=0
    _
  %s17 = ssub.s32 1, %s15
  %s18 = scalar_select 0, %s17, %s15
  // Predicated region
  $region2: #{res_conv_encoder_forward.1} parent=0 // pred_check
    _
  $region3: #{res_conv_encoder_forward.1} parent=0 // pred_check_branch
    %20 = sbr.rel (0) target = $region5
  $region4: #{res_conv_encoder_forward.1} parent=0 // pred_region
    _
  $region5: #{res_conv_encoder_forward.1} parent=0 // pred_fallthru
    _
  // Predicated region
  $region6: #{res_conv_encoder_forward.1} parent=0 // pred_check
    _
  $region7: #{res_conv_encoder_forward.1} parent=0 // pred_check_branch
    %22 = sbr.rel (0) target = $region9
  $region8: #{res_conv_encoder_forward.1} parent=0 // pred_region
    _
  $region9: #{res_conv_encoder_forward.1} parent=0 // pred_fallthru
    _
  // Predicated region
  $region10: #{res_conv_encoder_forward.1} parent=0 // pred_check
    _
  $region11: #{res_conv_encoder_forward.1} parent=0 // pred_check_branch
    %24 = sbr.rel (0) target = $region13
  $region12: #{res_conv_encoder_forward.1} parent=0 // pred_region
    _
  $region13: #{res_conv_encoder_forward.1} parent=0 // pred_fallthru
    _
  // Predicated region
  $region14: #{res_conv_encoder_forward.1} parent=0 // pred_check
    _
  $region15: #{res_conv_encoder_forward.1} parent=0 // pred_check_branch
    %26 = sbr.rel (0) target = $region17
  $region16: #{res_conv_encoder_forward.1} parent=0 // pred_region
    _
  $region17: #{res_conv_encoder_forward.1} parent=0 // pred_fallthru
    _
  // Predicated region
  $region18: #{res_conv_encoder_forward.1} parent=0 // pred_check
    _
  $region19: #{res_conv_encoder_forward.1} parent=0 // pred_check_branch
    %28 = sbr.rel (0) target = $region21
  $region20: #{res_conv_encoder_forward.1} parent=0 // pred_region
    _
  $region21: #{res_conv_encoder_forward.1} parent=0 // pred_fallthru
    _
  // Predicated region
  $region22: #{res_conv_encoder_forward.1} parent=0 // pred_check
    _
  $region23: #{res_conv_encoder_forward.1} parent=0 // pred_check_branch
    %30 = sbr.rel (0) target = $region25
  $region24: #{res_conv_encoder_forward.1} parent=0 // pred_region
    _
  $region25: #{res_conv_encoder_forward.1} parent=0 // pred_fallthru
    _
  // Predicated region
  $region26: #{res_conv_encoder_forward.1} parent=0 // pred_check
    _
  $region27: #{res_conv_encoder_forward.1} parent=0 // pred_check_branch
    %32 = sbr.rel (0) target = $region29
  $region28: #{res_conv_encoder_forward.1} parent=0 // pred_region
    _
  $region29: #{res_conv_encoder_forward.1} parent=0 // pred_fallthru
    _
  // Predicated region
  $region30: #{res_conv_encoder_forward.1} parent=0 // pred_check
    _
  $region31: #{res_conv_encoder_forward.1} parent=0 // pred_check_branch
    %34 = sbr.rel (0) target = $region33
  $region32: #{res_conv_encoder_forward.1} parent=0 // pred_region
    _
  $region33: #{res_conv_encoder_forward.1} parent=0 // pred_fallthru
    _
  // Predicated region
  $region34: #{res_conv_encoder_forward.1} parent=0 // pred_check
    _
  $region35: #{res_conv_encoder_forward.1} parent=0 // pred_check_branch
    %36 = sbr.rel (0) target = $region37
  $region36: #{res_conv_encoder_forward.1} parent=0 // pred_region
    _
  $region37: #{res_conv_encoder_forward.1} parent=0 // pred_fallthru
    _
  // Predicated region
  $region38: #{res_conv_encoder_forward.1} parent=0 // pred_check
    _
  $region39: #{res_conv_encoder_forward.1} parent=0 // pred_check_branch
    %38 = sbr.rel (0) target = $region41
  $region40: #{res_conv_encoder_forward.1} parent=0 // pred_region
    _
  $region41: #{res_conv_encoder_forward.1} parent=0 // pred_fallthru
    _
  // Predicated region
  $region42: #{res_conv_encoder_forward.1} parent=0 // pred_check
    _
  $region43: #{res_conv_encoder_forward.1} parent=0 // pred_check_branch
    %40 = sbr.rel (0) target = $region45
  $region44: #{res_conv_encoder_forward.1} parent=0 // pred_region
    _
  $region45: #{res_conv_encoder_forward.1} parent=0 // pred_fallthru
    _
  // Predicated region
  $region46: #{res_conv_encoder_forward.1} parent=0 // pred_check
    _
  $region47: #{res_conv_encoder_forward.1} parent=0 // pred_check_branch
    %42 = sbr.rel (0) target = $region49
  $region48: #{res_conv_encoder_forward.1} parent=0 // pred_region
    _
  $region49: #{res_conv_encoder_forward.1} parent=0 // pred_fallthru
    _
  %v44 = vld [vmem:[%s0] sm:$0xff]
  %v45 = vld [vmem:[%s0 + $0x8] sm:$0xff]
  %v46 = vld [vmem:[%s0 + $0x10] sm:$0xff]
  %v47 = vld [vmem:[%s0 + $0x18] sm:$0xff]
  %v48 = vld [vmem:[%s2] sm:$0xf]
  %v49 = vld [vmem:[%s2 + $0x4] sm:$0xf]
  %v50 = vld [vmem:[%s2 + $0x8] sm:$0xf]
  %v51 = vld [vmem:[%s2 + $0xc] sm:$0xf]
  %v52 = vld [vmem:[%s2 + $0x10] sm:$0xf]
  %v53 = vld [vmem:[%s2 + $0x14] sm:$0xf]
  %v54 = vld [vmem:[%s2 + $0x18] sm:$0xf]
  %v55 = vld [vmem:[%s2 + $0x1c] sm:$0xf]
  %v56 = vld [vmem:[%s2 + $0x20] sm:$0xf]
  %v57 = vld [vmem:[%s2 + $0x24] sm:$0xf]
  %v58 = vld [vmem:[%s2 + $0x28] sm:$0xf]
  %v59 = vld [vmem:[%s2 + $0x2c] sm:$0xf]
  %v60 = vld [vmem:[%s2 + $0x30] sm:$0xf]
  %v61 = vld [vmem:[%s2 + $0x34] sm:$0xf]
  %v62 = vld [vmem:[%s2 + $0x38] sm:$0xf]
  %v63 = vld [vmem:[%s2 + $0x3c] sm:$0xf]
  %v64 = vld [vmem:[%s2 + $0x40] sm:$0xf]
  %v65 = vld [vmem:[%s2 + $0x44] sm:$0xf]
  %v66 = vld [vmem:[%s2 + $0x48] sm:$0xf]
  %v67 = vld [vmem:[%s2 + $0x4c] sm:$0xf]
  %v68 = vld [vmem:[%s2 + $0x50] sm:$0xf]
  %v69 = vld [vmem:[%s2 + $0x54] sm:$0xf]
  %v70 = vld [vmem:[%s2 + $0x58] sm:$0xf]
  %v71 = vld [vmem:[%s2 + $0x5c] sm:$0xf]
  %v72 = vld [vmem:[%s2 + $0x60] sm:$0xf]
  %v73 = vld [vmem:[%s2 + $0x64] sm:$0xf]
  %v74 = vld [vmem:[%s2 + $0x68] sm:$0xf]
  %v75 = vld [vmem:[%s2 + $0x6c] sm:$0xf]
  %v76 = vld [vmem:[%s2 + $0x70] sm:$0xf]
  %v77 = vld [vmem:[%s2 + $0x74] sm:$0xf]
  %v78 = vld [vmem:[%s2 + $0x78] sm:$0xf]
  %v79 = vld [vmem:[%s2 + $0x7c] sm:$0xf]
  %v80 = vld [vmem:[%s2 + $0x80] sm:$0xf]
  %v81 = vld [vmem:[%s2 + $0x84] sm:$0xf]
  %v82 = vld [vmem:[%s2 + $0x88] sm:$0xf]
  %v83 = vld [vmem:[%s2 + $0x8c] sm:$0xf]
  %v84 = vld [vmem:[%s2 + $0x90] sm:$0xf]
  %v85 = vld [vmem:[%s2 + $0x94] sm:$0xf]
  %v86 = vld [vmem:[%s2 + $0x98] sm:$0xf]
  %v87 = vld [vmem:[%s2 + $0x9c] sm:$0xf]
  %v88 = vld [vmem:[%s2 + $0xa0] sm:$0xf]
  %v89 = vld [vmem:[%s2 + $0xa4] sm:$0xf]
  %v90 = vld [vmem:[%s2 + $0xa8] sm:$0xf]
  %v91 = vld [vmem:[%s2 + $0xac] sm:$0xf]
  %v92 = vld [vmem:[%s2 + $0xb0] sm:$0xf]
  %v93 = vld [vmem:[%s2 + $0xb4] sm:$0xf]
  %v94 = vld [vmem:[%s2 + $0xb8] sm:$0xf]
  %v95 = vld [vmem:[%s2 + $0xbc] sm:$0xf]
  %v96 = vld [vmem:[%s2 + $0xc0] sm:$0xf]
  %v97 = vld [vmem:[%s2 + $0xc4] sm:$0xf]
  %v98 = vld [vmem:[%s2 + $0xc8] sm:$0xf]
  %v99 = vld [vmem:[%s2 + $0xcc] sm:$0xf]
  %v100 = vld [vmem:[%s2 + $0xd0] sm:$0xf]
  %v101 = vld [vmem:[%s2 + $0xd4] sm:$0xf]
  %v102 = vld [vmem:[%s2 + $0xd8] sm:$0xf]
  %v103 = vld [vmem:[%s2 + $0xdc] sm:$0xf]
  %v104 = vld [vmem:[%s2 + $0xe0] sm:$0xf]
  %v105 = vld [vmem:[%s2 + $0xe4] sm:$0xf]
  %v106 = vld [vmem:[%s2 + $0xe8] sm:$0xf]
  %v107 = vld [vmem:[%s2 + $0xec] sm:$0xf]
  %v108 = vld [vmem:[%s2 + $0xf0] sm:$0xf]
  %v109 = vld [vmem:[%s2 + $0xf4] sm:$0xf]
  %v110 = vld [vmem:[%s2 + $0xf8] sm:$0xf]
  %v111 = vld [vmem:[%s2 + $0xfc] sm:$0xf]
  %v112 = vld [vmem:[%s3] sm:$0x1]
  %v114 = vlaneseq
  %v115 = vshrl.u32 %v114, 7
  %v116 = vsub.s32 0, %v115
  %v117 = vrot.slane %v112, %v116
  %v123 = vunpack.c.l.b16 %v44
  %v124 = vunpack.c.h.b16 %v44
  %v125 = vunpack.c.l.b16 %v45
  %v126 = vunpack.c.h.b16 %v45
  %v127 = vunpack.c.l.b16 %v46
  %v128 = vunpack.c.h.b16 %v46
  %v129 = vunpack.c.l.b16 %v47
  %v130 = vunpack.c.h.b16 %v47
  %v131 = vpack.c.b16 %v127, %v123
  %v132 = vpack.c.b16 %v128, %v124
  %v133 = vpack.c.b16 %v129, %v125
  %v134 = vpack.c.b16 %v130, %v126
  %v203 = vunpack.c.l.b16 %v48
  %v204 = vunpack.c.l.b16 %v49
  %v205 = vunpack.c.l.b16 %v50
  %v206 = vunpack.c.l.b16 %v51
  %v207 = vunpack.c.l.b16 %v52
  %v208 = vunpack.c.l.b16 %v53
  %v209 = vunpack.c.l.b16 %v54
  %v210 = vunpack.c.l.b16 %v55
  %v211 = vunpack.c.l.b16 %v56
  %v212 = vunpack.c.l.b16 %v57
  %v213 = vunpack.c.l.b16 %v58
  %v214 = vunpack.c.l.b16 %v59
  %v215 = vunpack.c.l.b16 %v60
  %v216 = vunpack.c.l.b16 %v61
  %v217 = vunpack.c.l.b16 %v62
  %v218 = vunpack.c.l.b16 %v63
  %v219 = vunpack.c.l.b16 %v64
  %v220 = vunpack.c.l.b16 %v65
  %v221 = vunpack.c.l.b16 %v66
  %v222 = vunpack.c.l.b16 %v67
  %v223 = vunpack.c.l.b16 %v68
  %v224 = vunpack.c.l.b16 %v69
  %v225 = vunpack.c.l.b16 %v70
  %v226 = vunpack.c.l.b16 %v71
  %v227 = vunpack.c.l.b16 %v72
  %v228 = vunpack.c.l.b16 %v73
  %v229 = vunpack.c.l.b16 %v74
  %v230 = vunpack.c.l.b16 %v75
  %v231 = vunpack.c.l.b16 %v76
  %v232 = vunpack.c.l.b16 %v77
  %v233 = vunpack.c.l.b16 %v78
  %v234 = vunpack.c.l.b16 %v79
  %v235 = vunpack.c.l.b16 %v80
  %v236 = vunpack.c.l.b16 %v81
  %v237 = vunpack.c.l.b16 %v82
  %v238 = vunpack.c.l.b16 %v83
  %v239 = vunpack.c.l.b16 %v84
  %v240 = vunpack.c.l.b16 %v85
  %v241 = vunpack.c.l.b16 %v86
  %v242 = vunpack.c.l.b16 %v87
  %v243 = vunpack.c.l.b16 %v88
  %v244 = vunpack.c.l.b16 %v89
  %v245 = vunpack.c.l.b16 %v90
  %v246 = vunpack.c.l.b16 %v91
  %v247 = vunpack.c.l.b16 %v92
  %v248 = vunpack.c.l.b16 %v93
  %v249 = vunpack.c.l.b16 %v94
  %v250 = vunpack.c.l.b16 %v95
  %v251 = vunpack.c.l.b16 %v96
  %v252 = vunpack.c.l.b16 %v97
  %v253 = vunpack.c.l.b16 %v98
  %v254 = vunpack.c.l.b16 %v99
  %v255 = vunpack.c.l.b16 %v100
  %v256 = vunpack.c.l.b16 %v101
  %v257 = vunpack.c.l.b16 %v102
  %v258 = vunpack.c.l.b16 %v103
  %v259 = vunpack.c.l.b16 %v104
  %v260 = vunpack.c.l.b16 %v105
  %v261 = vunpack.c.l.b16 %v106
  %v262 = vunpack.c.l.b16 %v107
  %v263 = vunpack.c.l.b16 %v108
  %v264 = vunpack.c.l.b16 %v109
  %v265 = vunpack.c.l.b16 %v110
  %v266 = vunpack.c.l.b16 %v111
  %v267 = vpack.c.b16 %v204, %v203
  %v268 = vpack.c.b16 %v206, %v205
  %v269 = vpack.c.b16 %v208, %v207
  %v270 = vpack.c.b16 %v210, %v209
  %v271 = vpack.c.b16 %v212, %v211
  %v272 = vpack.c.b16 %v214, %v213
  %v273 = vpack.c.b16 %v216, %v215
  %v274 = vpack.c.b16 %v218, %v217
  %v275 = vpack.c.b16 %v220, %v219
  %v276 = vpack.c.b16 %v222, %v221
  %v277 = vpack.c.b16 %v224, %v223
  %v278 = vpack.c.b16 %v226, %v225
  %v279 = vpack.c.b16 %v228, %v227
  %v280 = vpack.c.b16 %v230, %v229
  %v281 = vpack.c.b16 %v232, %v231
  %v282 = vpack.c.b16 %v234, %v233
  %v283 = vpack.c.b16 %v236, %v235
  %v284 = vpack.c.b16 %v238, %v237
  %v285 = vpack.c.b16 %v240, %v239
  %v286 = vpack.c.b16 %v242, %v241
  %v287 = vpack.c.b16 %v244, %v243
  %v288 = vpack.c.b16 %v246, %v245
  %v289 = vpack.c.b16 %v248, %v247
  %v290 = vpack.c.b16 %v250, %v249
  %v291 = vpack.c.b16 %v252, %v251
  %v292 = vpack.c.b16 %v254, %v253
  %v293 = vpack.c.b16 %v256, %v255
  %v294 = vpack.c.b16 %v258, %v257
  %v295 = vpack.c.b16 %v260, %v259
  %v296 = vpack.c.b16 %v262, %v261
  %v297 = vpack.c.b16 %v264, %v263
  %v298 = vpack.c.b16 %v266, %v265
  %331 = vmatprep.subr.bf16.mxu0 0
  %332 = vmatpush1.bf16.msra.mxu0 %v267
  %333 = vmatprep.subr.bf16.mxu0 0
  %334 = vmatpush1.bf16.msra.mxu0 %v268
  %335 = vmatprep.subr.bf16.mxu0 0
  %336 = vmatpush1.bf16.msra.mxu0 %v269
  %337 = vmatprep.subr.bf16.mxu0 0
  %338 = vmatpush1.bf16.msra.mxu0 %v270
  %339 = vmatprep.subr.bf16.mxu0 0
  %340 = vmatpush1.bf16.msra.mxu0 %v271
  %341 = vmatprep.subr.bf16.mxu0 0
  %342 = vmatpush1.bf16.msra.mxu0 %v272
  %343 = vmatprep.subr.bf16.mxu0 0
  %344 = vmatpush1.bf16.msra.mxu0 %v273
  %345 = vmatprep.subr.bf16.mxu0 0
  %346 = vmatpush1.bf16.msra.mxu0 %v274
  %347 = vmatprep.subr.bf16.mxu0 0
  %348 = vmatpush1.bf16.msra.mxu0 %v275
  %349 = vmatprep.subr.bf16.mxu0 0
  %350 = vmatpush1.bf16.msra.mxu0 %v276
  %351 = vmatprep.subr.bf16.mxu0 0
  %352 = vmatpush1.bf16.msra.mxu0 %v277
  %353 = vmatprep.subr.bf16.mxu0 0
  %354 = vmatpush1.bf16.msra.mxu0 %v278
  %355 = vmatprep.subr.bf16.mxu0 0
  %356 = vmatpush1.bf16.msra.mxu0 %v279
  %357 = vmatprep.subr.bf16.mxu0 0
  %358 = vmatpush1.bf16.msra.mxu0 %v280
  %359 = vmatprep.subr.bf16.mxu0 0
  %360 = vmatpush1.bf16.msra.mxu0 %v281
  %361 = vmatprep.subr.bf16.mxu0 0
  %362 = vmatpush1.bf16.msra.mxu0 %v282
  %363 = vmatprep.mubr.bf16.mxu0 %v132
  %364 = vmatmul.mubr.bf16.gmra.mrb[0].mxu0 %v131
  %v365 = vpop.f32.mrb[0].mxu0
  %v366 = vadd.f32 %v117, %v365
  %v367 = vpop.f32.mrb[0].mxu0
  %v368 = vpop.f32.mrb[0].mxu0
  %v369 = vadd.f32 %v117, %v368
  %v370 = vpop.f32.mrb[0].mxu0
  %371 = vdwg.mxu0
  %372 = vmatprep.subr.bf16.mxu0 0
  %373 = vmatpush1.bf16.msra.mxu0 %v283
  %374 = vmatprep.subr.bf16.mxu0 0
  %375 = vmatpush1.bf16.msra.mxu0 %v284
  %376 = vmatprep.subr.bf16.mxu0 0
  %377 = vmatpush1.bf16.msra.mxu0 %v285
  %378 = vmatprep.subr.bf16.mxu0 0
  %379 = vmatpush1.bf16.msra.mxu0 %v286
  %380 = vmatprep.subr.bf16.mxu0 0
  %381 = vmatpush1.bf16.msra.mxu0 %v287
  %382 = vmatprep.subr.bf16.mxu0 0
  %383 = vmatpush1.bf16.msra.mxu0 %v288
  %384 = vmatprep.subr.bf16.mxu0 0
  %385 = vmatpush1.bf16.msra.mxu0 %v289
  %386 = vmatprep.subr.bf16.mxu0 0
  %387 = vmatpush1.bf16.msra.mxu0 %v290
  %388 = vmatprep.subr.bf16.mxu0 0
  %389 = vmatpush1.bf16.msra.mxu0 %v291
  %390 = vmatprep.subr.bf16.mxu0 0
  %391 = vmatpush1.bf16.msra.mxu0 %v292
  %392 = vmatprep.subr.bf16.mxu0 0
  %393 = vmatpush1.bf16.msra.mxu0 %v293
  %394 = vmatprep.subr.bf16.mxu0 0
  %395 = vmatpush1.bf16.msra.mxu0 %v294
  %396 = vmatprep.subr.bf16.mxu0 0
  %397 = vmatpush1.bf16.msra.mxu0 %v295
  %398 = vmatprep.subr.bf16.mxu0 0
  %399 = vmatpush1.bf16.msra.mxu0 %v296
  %400 = vmatprep.subr.bf16.mxu0 0
  %401 = vmatpush1.bf16.msra.mxu0 %v297
  %402 = vmatprep.subr.bf16.mxu0 0
  %403 = vmatpush1.bf16.msra.mxu0 %v298
  %404 = vmatprep.mubr.bf16.mxu0 %v134
  %405 = vmatmul.mubr.bf16.gmra.mrb[0].mxu0 %v133
  %v406 = vpop.f32.mrb[0].mxu0
  %v407 = vadd.f32 %v366, %v406
  %v408 = vpop.f32.mrb[0].mxu0
  %v409 = vpop.f32.mrb[0].mxu0
  %v410 = vadd.f32 %v369, %v409
  %v411 = vpop.f32.mrb[0].mxu0
  %412 = vdwg.mxu0
  %413 = vst [vmem:[%s12] sm:$0xff] %v407
  %414 = vst [vmem:[%s12 + $0x8] sm:$0xff] %v410
  %v415 = vld [vmem:[%s1] sm:$0xf]
  %v416 = vld [vmem:[%s1 + $0x4] sm:$0xf]
  %v417 = vld [vmem:[%s1 + $0x8] sm:$0xf]
  %v418 = vld [vmem:[%s1 + $0xc] sm:$0xf]
  %v419 = vld [vmem:[%s1 + $0x10] sm:$0xf]
  %v420 = vld [vmem:[%s1 + $0x14] sm:$0xf]
  %v421 = vld [vmem:[%s1 + $0x18] sm:$0xf]
  %v422 = vld [vmem:[%s1 + $0x1c] sm:$0xf]
  %v423 = vld [vmem:[%s1 + $0x20] sm:$0xf]
  %v424 = vld [vmem:[%s1 + $0x24] sm:$0xf]
  %v425 = vld [vmem:[%s1 + $0x28] sm:$0xf]
  %v426 = vld [vmem:[%s1 + $0x2c] sm:$0xf]
  %v427 = vld [vmem:[%s1 + $0x30] sm:$0xf]
  %v428 = vld [vmem:[%s1 + $0x34] sm:$0xf]
  %v429 = vld [vmem:[%s1 + $0x38] sm:$0xf]
  %v430 = vld [vmem:[%s1 + $0x3c] sm:$0xf]
  %v431 = vld [vmem:[%s4] sm:$0xf]
  %v432 = vld [vmem:[%s4 + $0x4] sm:$0xf]
  %v433 = vld [vmem:[%s4 + $0x8] sm:$0xf]
  %v434 = vld [vmem:[%s4 + $0xc] sm:$0xf]
  %v435 = vld [vmem:[%s4 + $0x10] sm:$0xf]
  %v436 = vld [vmem:[%s4 + $0x14] sm:$0xf]
  %v437 = vld [vmem:[%s4 + $0x18] sm:$0xf]
  %v438 = vld [vmem:[%s4 + $0x1c] sm:$0xf]
  %v439 = vld [vmem:[%s4 + $0x20] sm:$0xf]
  %v440 = vld [vmem:[%s4 + $0x24] sm:$0xf]
  %v441 = vld [vmem:[%s4 + $0x28] sm:$0xf]
  %v442 = vld [vmem:[%s4 + $0x2c] sm:$0xf]
  %v443 = vld [vmem:[%s4 + $0x30] sm:$0xf]
  %v444 = vld [vmem:[%s4 + $0x34] sm:$0xf]
  %v445 = vld [vmem:[%s4 + $0x38] sm:$0xf]
  %v446 = vld [vmem:[%s4 + $0x3c] sm:$0xf]
  %v447 = vld [vmem:[%s5] sm:$0x1]
  %v449 = vlaneseq
  %v450 = vshrl.u32 %v449, 7
  %v451 = vsub.s32 0, %v450
  %v452 = vrot.slane %v447, %v451
  %v470 = vunpack.c.l.b16 %v415
  %v471 = vunpack.c.l.b16 %v416
  %v472 = vunpack.c.l.b16 %v417
  %v473 = vunpack.c.l.b16 %v418
  %v474 = vunpack.c.l.b16 %v419
  %v475 = vunpack.c.l.b16 %v420
  %v476 = vunpack.c.l.b16 %v421
  %v477 = vunpack.c.l.b16 %v422
  %v478 = vunpack.c.l.b16 %v423
  %v479 = vunpack.c.l.b16 %v424
  %v480 = vunpack.c.l.b16 %v425
  %v481 = vunpack.c.l.b16 %v426
  %v482 = vunpack.c.l.b16 %v427
  %v483 = vunpack.c.l.b16 %v428
  %v484 = vunpack.c.l.b16 %v429
  %v485 = vunpack.c.l.b16 %v430
  %v486 = vpack.c.b16 %v471, %v470
  %v487 = vpack.c.b16 %v473, %v472
  %v488 = vpack.c.b16 %v475, %v474
  %v489 = vpack.c.b16 %v477, %v476
  %v490 = vpack.c.b16 %v479, %v478
  %v491 = vpack.c.b16 %v481, %v480
  %v492 = vpack.c.b16 %v483, %v482
  %v493 = vpack.c.b16 %v485, %v484
  %v518 = vunpack.c.l.b16 %v431
  %v519 = vunpack.c.l.b16 %v432
  %v520 = vunpack.c.l.b16 %v433
  %v521 = vunpack.c.l.b16 %v434
  %v522 = vunpack.c.l.b16 %v435
  %v523 = vunpack.c.l.b16 %v436
  %v524 = vunpack.c.l.b16 %v437
  %v525 = vunpack.c.l.b16 %v438
  %v526 = vunpack.c.l.b16 %v439
  %v527 = vunpack.c.l.b16 %v440
  %v528 = vunpack.c.l.b16 %v441
  %v529 = vunpack.c.l.b16 %v442
  %v530 = vunpack.c.l.b16 %v443
  %v531 = vunpack.c.l.b16 %v444
  %v532 = vunpack.c.l.b16 %v445
  %v533 = vunpack.c.l.b16 %v446
  %v534 = vpack.c.b16 %v519, %v518
  %v535 = vpack.c.b16 %v521, %v520
  %v536 = vpack.c.b16 %v523, %v522
  %v537 = vpack.c.b16 %v525, %v524
  %v538 = vpack.c.b16 %v527, %v526
  %v539 = vpack.c.b16 %v529, %v528
  %v540 = vpack.c.b16 %v531, %v530
  %v541 = vpack.c.b16 %v533, %v532
  %550 = vmatprep.subr.bf16.mxu0 0
  %551 = vmatpush1.bf16.msra.mxu0 %v534
  %552 = vmatprep.subr.bf16.mxu0 0
  %553 = vmatpush1.bf16.msra.mxu0 %v535
  %554 = vmatprep.subr.bf16.mxu0 0
  %555 = vmatpush1.bf16.msra.mxu0 %v536
  %556 = vmatprep.subr.bf16.mxu0 0
  %557 = vmatpush1.bf16.msra.mxu0 %v537
  %558 = vmatprep.subr.bf16.mxu0 0
  %559 = vmatpush1.bf16.msra.mxu0 %v538
  %560 = vmatprep.subr.bf16.mxu0 0
  %561 = vmatpush1.bf16.msra.mxu0 %v539
  %562 = vmatprep.subr.bf16.mxu0 0
  %563 = vmatpush1.bf16.msra.mxu0 %v540
  %564 = vmatprep.subr.bf16.mxu0 0
  %565 = vmatpush1.bf16.msra.mxu0 %v541
  %566 = vmatprep.subr.bf16.mxu0 0
  %567 = vmatpush1.bf16.msra.mxu0 0
  %568 = vmatprep.subr.bf16.mxu0 0
  %569 = vmatpush1.bf16.msra.mxu0 0
  %570 = vmatprep.subr.bf16.mxu0 0
  %571 = vmatpush1.bf16.msra.mxu0 0
  %572 = vmatprep.subr.bf16.mxu0 0
  %573 = vmatpush1.bf16.msra.mxu0 0
  %574 = vmatprep.subr.bf16.mxu0 0
  %575 = vmatpush1.bf16.msra.mxu0 0
  %576 = vmatprep.subr.bf16.mxu0 0
  %577 = vmatpush1.bf16.msra.mxu0 0
  %578 = vmatprep.subr.bf16.mxu0 0
  %579 = vmatpush1.bf16.msra.mxu0 0
  %580 = vmatprep.subr.bf16.mxu0 0
  %581 = vmatpush1.bf16.msra.mxu0 0
  %582 = vmatprep.mubr.bf16.mxu0 0
  %583 = vmatmul.mubr.bf16.gmra.mrb[0].mxu0 %v486
  %v584 = vpop.f32.mrb[0].mxu0
  %v585 = vadd.f32 %v452, %v584
  %v586 = vpop.f32.mrb[0].mxu0
  %v587 = vpop.f32.mrb[0].mxu0
  %v588 = vadd.f32 %v452, %v587
  %v589 = vpop.f32.mrb[0].mxu0
  %590 = vmatprep.mubr.bf16.mxu0 0
  %591 = vmatmul.mubr.bf16.gmra.mrb[0].mxu0 %v487
  %v592 = vpop.f32.mrb[0].mxu0
  %v593 = vadd.f32 %v452, %v592
  %v594 = vpop.f32.mrb[0].mxu0
  %v595 = vpop.f32.mrb[0].mxu0
  %v596 = vadd.f32 %v452, %v595
  %v597 = vpop.f32.mrb[0].mxu0
  %598 = vmatprep.mubr.bf16.mxu0 0
  %599 = vmatmul.mubr.bf16.gmra.mrb[0].mxu0 %v488
  %v600 = vpop.f32.mrb[0].mxu0
  %v601 = vadd.f32 %v452, %v600
  %v602 = vpop.f32.mrb[0].mxu0
  %v603 = vpop.f32.mrb[0].mxu0
  %v604 = vadd.f32 %v452, %v603
  %v605 = vpop.f32.mrb[0].mxu0
  %606 = vmatprep.mubr.bf16.mxu0 0
  %607 = vmatmul.mubr.bf16.gmra.mrb[0].mxu0 %v489
  %v608 = vpop.f32.mrb[0].mxu0
  %v609 = vadd.f32 %v452, %v608
  %v610 = vpop.f32.mrb[0].mxu0
  %v611 = vpop.f32.mrb[0].mxu0
  %v612 = vadd.f32 %v452, %v611
  %v613 = vpop.f32.mrb[0].mxu0
  %614 = vmatprep.mubr.bf16.mxu0 0
  %615 = vmatmul.mubr.bf16.gmra.mrb[0].mxu0 %v490
  %v616 = vpop.f32.mrb[0].mxu0
  %v617 = vadd.f32 %v452, %v616
  %v618 = vpop.f32.mrb[0].mxu0
  %v619 = vpop.f32.mrb[0].mxu0
  %v620 = vadd.f32 %v452, %v619
  %v621 = vpop.f32.mrb[0].mxu0
  %622 = vmatprep.mubr.bf16.mxu0 0
  %623 = vmatmul.mubr.bf16.gmra.mrb[0].mxu0 %v491
  %v624 = vpop.f32.mrb[0].mxu0
  %v625 = vadd.f32 %v452, %v624
  %v626 = vpop.f32.mrb[0].mxu0
  %v627 = vpop.f32.mrb[0].mxu0
  %v628 = vadd.f32 %v452, %v627
  %v629 = vpop.f32.mrb[0].mxu0
  %630 = vmatprep.mubr.bf16.mxu0 0
  %631 = vmatmul.mubr.bf16.gmra.mrb[0].mxu0 %v492
  %v632 = vpop.f32.mrb[0].mxu0
  %v633 = vadd.f32 %v452, %v632
  %v634 = vpop.f32.mrb[0].mxu0
  %v635 = vpop.f32.mrb[0].mxu0
  %v636 = vadd.f32 %v452, %v635
  %v637 = vpop.f32.mrb[0].mxu0
  %638 = vmatprep.mubr.bf16.mxu0 0
  %639 = vmatmul.mubr.bf16.gmra.mrb[0].mxu0 %v493
  %v640 = vpop.f32.mrb[0].mxu0
  %v641 = vadd.f32 %v452, %v640
  %v642 = vpop.f32.mrb[0].mxu0
  %v643 = vpop.f32.mrb[0].mxu0
  %v644 = vadd.f32 %v452, %v643
  %v645 = vpop.f32.mrb[0].mxu0
  %646 = vdwg.mxu0
  %v647 = vmul.f32 %v585, %v585
  %v648 = vmul.f32 %v588, %v588
  %v649 = vmul.f32 %v593, %v593
  %v650 = vmul.f32 %v596, %v596
  %v651 = vmul.f32 %v601, %v601
  %v652 = vmul.f32 %v604, %v604
  %v653 = vmul.f32 %v609, %v609
  %v654 = vmul.f32 %v612, %v612
  %v655 = vmul.f32 %v617, %v617
  %v656 = vmul.f32 %v620, %v620
  %v657 = vmul.f32 %v625, %v625
  %v658 = vmul.f32 %v628, %v628
  %v659 = vmul.f32 %v633, %v633
  %v660 = vmul.f32 %v636, %v636
  %v661 = vmul.f32 %v641, %v641
  %v662 = vmul.f32 %v644, %v644
  %v663 = vmul.f32 %v585, %v647
  %v664 = vmul.f32 %v588, %v648
  %v665 = vmul.f32 %v593, %v649
  %v666 = vmul.f32 %v596, %v650
  %v667 = vmul.f32 %v601, %v651
  %v668 = vmul.f32 %v604, %v652
  %v669 = vmul.f32 %v609, %v653
  %v670 = vmul.f32 %v612, %v654
  %v671 = vmul.f32 %v617, %v655
  %v672 = vmul.f32 %v620, %v656
  %v673 = vmul.f32 %v625, %v657
  %v674 = vmul.f32 %v628, %v658
  %v675 = vmul.f32 %v633, %v659
  %v676 = vmul.f32 %v636, %v660
  %v677 = vmul.f32 %v641, %v661
  %v678 = vmul.f32 %v644, %v662
  %v679 = vmul.f32 %v663, 0.044715
  %v680 = vmul.f32 %v664, 0.044715
  %v681 = vmul.f32 %v665, 0.044715
  %v682 = vmul.f32 %v666, 0.044715
  %v683 = vmul.f32 %v667, 0.044715
  %v684 = vmul.f32 %v668, 0.044715
  %v685 = vmul.f32 %v669, 0.044715
  %v686 = vmul.f32 %v670, 0.044715
  %v687 = vmul.f32 %v671, 0.044715
  %v688 = vmul.f32 %v672, 0.044715
  %v689 = vmul.f32 %v673, 0.044715
  %v690 = vmul.f32 %v674, 0.044715
  %v691 = vmul.f32 %v675, 0.044715
  %v692 = vmul.f32 %v676, 0.044715
  %v693 = vmul.f32 %v677, 0.044715
  %v694 = vmul.f32 %v678, 0.044715
  %v695 = vadd.f32 %v585, %v679
  %v696 = vadd.f32 %v588, %v680
  %v697 = vadd.f32 %v593, %v681
  %v698 = vadd.f32 %v596, %v682
  %v699 = vadd.f32 %v601, %v683
  %v700 = vadd.f32 %v604, %v684
  %v701 = vadd.f32 %v609, %v685
  %v702 = vadd.f32 %v612, %v686
  %v703 = vadd.f32 %v617, %v687
  %v704 = vadd.f32 %v620, %v688
  %v705 = vadd.f32 %v625, %v689
  %v706 = vadd.f32 %v628, %v690
  %v707 = vadd.f32 %v633, %v691
  %v708 = vadd.f32 %v636, %v692
  %v709 = vadd.f32 %v641, %v693
  %v710 = vadd.f32 %v644, %v694
  %v711 = vmul.f32 %v695, 0.7978846
  %v712 = vmul.f32 %v696, 0.7978846
  %v713 = vmul.f32 %v697, 0.7978846
  %v714 = vmul.f32 %v698, 0.7978846
  %v715 = vmul.f32 %v699, 0.7978846
  %v716 = vmul.f32 %v700, 0.7978846
  %v717 = vmul.f32 %v701, 0.7978846
  %v718 = vmul.f32 %v702, 0.7978846
  %v719 = vmul.f32 %v703, 0.7978846
  %v720 = vmul.f32 %v704, 0.7978846
  %v721 = vmul.f32 %v705, 0.7978846
  %v722 = vmul.f32 %v706, 0.7978846
  %v723 = vmul.f32 %v707, 0.7978846
  %v724 = vmul.f32 %v708, 0.7978846
  %v725 = vmul.f32 %v709, 0.7978846
  %v726 = vmul.f32 %v710, 0.7978846
  %v727 = vtanh.pop %v711
  %v728 = vtanh.pop %v712
  %v729 = vtanh.pop %v713
  %v730 = vtanh.pop %v714
  %v731 = vtanh.pop %v715
  %v732 = vtanh.pop %v716
  %v733 = vtanh.pop %v717
  %v734 = vtanh.pop %v718
  %v735 = vtanh.pop %v719
  %v736 = vtanh.pop %v720
  %v737 = vtanh.pop %v721
  %v738 = vtanh.pop %v722
  %v739 = vtanh.pop %v723
  %v740 = vtanh.pop %v724
  %v741 = vtanh.pop %v725
  %v742 = vtanh.pop %v726
  %v743 = vadd.f32 %v727, 1.0
  %v744 = vadd.f32 %v728, 1.0
  %v745 = vadd.f32 %v729, 1.0
  %v746 = vadd.f32 %v730, 1.0
  %v747 = vadd.f32 %v731, 1.0
  %v748 = vadd.f32 %v732, 1.0
  %v749 = vadd.f32 %v733, 1.0
  %v750 = vadd.f32 %v734, 1.0
  %v751 = vadd.f32 %v735, 1.0
  %v752 = vadd.f32 %v736, 1.0
  %v753 = vadd.f32 %v737, 1.0
  %v754 = vadd.f32 %v738, 1.0
  %v755 = vadd.f32 %v739, 1.0
  %v756 = vadd.f32 %v740, 1.0
  %v757 = vadd.f32 %v741, 1.0
  %v758 = vadd.f32 %v742, 1.0
  %v759 = vmul.f32 %v743, 0.5
  %v760 = vmul.f32 %v744, 0.5
  %v761 = vmul.f32 %v745, 0.5
  %v762 = vmul.f32 %v746, 0.5
  %v763 = vmul.f32 %v747, 0.5
  %v764 = vmul.f32 %v748, 0.5
  %v765 = vmul.f32 %v749, 0.5
  %v766 = vmul.f32 %v750, 0.5
  %v767 = vmul.f32 %v751, 0.5
  %v768 = vmul.f32 %v752, 0.5
  %v769 = vmul.f32 %v753, 0.5
  %v770 = vmul.f32 %v754, 0.5
  %v771 = vmul.f32 %v755, 0.5
  %v772 = vmul.f32 %v756, 0.5
  %v773 = vmul.f32 %v757, 0.5
  %v774 = vmul.f32 %v758, 0.5
  %v775 = vmul.f32 %v585, %v759
  %v776 = vmul.f32 %v588, %v760
  %v777 = vmul.f32 %v593, %v761
  %v778 = vmul.f32 %v596, %v762
  %v779 = vmul.f32 %v601, %v763
  %v780 = vmul.f32 %v604, %v764
  %v781 = vmul.f32 %v609, %v765
  %v782 = vmul.f32 %v612, %v766
  %v783 = vmul.f32 %v617, %v767
  %v784 = vmul.f32 %v620, %v768
  %v785 = vmul.f32 %v625, %v769
  %v786 = vmul.f32 %v628, %v770
  %v787 = vmul.f32 %v633, %v771
  %v788 = vmul.f32 %v636, %v772
  %v789 = vmul.f32 %v641, %v773
  %v790 = vmul.f32 %v644, %v774
  %v791 = vpack.c.bf16 %v776, %v775
  %v792 = vpack.c.bf16 %v778, %v777
  %v793 = vpack.c.bf16 %v780, %v779
  %v794 = vpack.c.bf16 %v782, %v781
  %v795 = vpack.c.bf16 %v784, %v783
  %v796 = vpack.c.bf16 %v786, %v785
  %v797 = vpack.c.bf16 %v788, %v787
  %v798 = vpack.c.bf16 %v790, %v789
  %v799 = vld [vmem:[%s6] sm:$0xff]
  %v800 = vld [vmem:[%s6 + $0x8] sm:$0xff]
  %v801 = vld [vmem:[%s6 + $0x10] sm:$0xff]
  %v802 = vld [vmem:[%s6 + $0x18] sm:$0xff]
  %v803 = vld [vmem:[%s6 + $0x20] sm:$0xff]
  %v804 = vld [vmem:[%s6 + $0x28] sm:$0xff]
  %v805 = vld [vmem:[%s6 + $0x30] sm:$0xff]
  %v806 = vld [vmem:[%s6 + $0x38] sm:$0xff]
  %v807 = vld [vmem:[%s6 + $0x40] sm:$0xff]
  %v808 = vld [vmem:[%s6 + $0x48] sm:$0xff]
  %v809 = vld [vmem:[%s6 + $0x50] sm:$0xff]
  %v810 = vld [vmem:[%s6 + $0x58] sm:$0xff]
  %v811 = vld [vmem:[%s6 + $0x60] sm:$0xff]
  %v812 = vld [vmem:[%s6 + $0x68] sm:$0xff]
  %v813 = vld [vmem:[%s6 + $0x70] sm:$0xff]
  %v814 = vld [vmem:[%s6 + $0x78] sm:$0xff]
  %v815 = vld [vmem:[%s6 + $0x80] sm:$0xff]
  %v816 = vld [vmem:[%s6 + $0x88] sm:$0xff]
  %v817 = vld [vmem:[%s6 + $0x90] sm:$0xff]
  %v818 = vld [vmem:[%s6 + $0x98] sm:$0xff]
  %v819 = vld [vmem:[%s6 + $0xa0] sm:$0xff]
  %v820 = vld [vmem:[%s6 + $0xa8] sm:$0xff]
  %v821 = vld [vmem:[%s6 + $0xb0] sm:$0xff]
  %v822 = vld [vmem:[%s6 + $0xb8] sm:$0xff]
  %v823 = vld [vmem:[%s6 + $0xc0] sm:$0xff]
  %v824 = vld [vmem:[%s6 + $0xc8] sm:$0xff]
  %v825 = vld [vmem:[%s6 + $0xd0] sm:$0xff]
  %v826 = vld [vmem:[%s6 + $0xd8] sm:$0xff]
  %v827 = vld [vmem:[%s6 + $0xe0] sm:$0xff]
  %v828 = vld [vmem:[%s6 + $0xe8] sm:$0xff]
  %v829 = vld [vmem:[%s6 + $0xf0] sm:$0xff]
  %v830 = vld [vmem:[%s6 + $0xf8] sm:$0xff]
  %v847 = vunpack.c.l.b16 %v815
  %v848 = vunpack.c.h.b16 %v815
  %v849 = vunpack.c.l.b16 %v816
  %v850 = vunpack.c.h.b16 %v816
  %v851 = vunpack.c.l.b16 %v817
  %v852 = vunpack.c.h.b16 %v817
  %v853 = vunpack.c.l.b16 %v818
  %v854 = vunpack.c.h.b16 %v818
  %v855 = vunpack.c.l.b16 %v819
  %v856 = vunpack.c.h.b16 %v819
  %v857 = vunpack.c.l.b16 %v820
  %v858 = vunpack.c.h.b16 %v820
  %v859 = vunpack.c.l.b16 %v821
  %v860 = vunpack.c.h.b16 %v821
  %v861 = vunpack.c.l.b16 %v822
  %v862 = vunpack.c.h.b16 %v822
  %v863 = vunpack.c.l.b16 %v823
  %v864 = vunpack.c.h.b16 %v823
  %v865 = vunpack.c.l.b16 %v824
  %v866 = vunpack.c.h.b16 %v824
  %v867 = vunpack.c.l.b16 %v825
  %v868 = vunpack.c.h.b16 %v825
  %v869 = vunpack.c.l.b16 %v826
  %v870 = vunpack.c.h.b16 %v826
  %v871 = vunpack.c.l.b16 %v827
  %v872 = vunpack.c.h.b16 %v827
  %v873 = vunpack.c.l.b16 %v828
  %v874 = vunpack.c.h.b16 %v828
  %v875 = vunpack.c.l.b16 %v829
  %v876 = vunpack.c.h.b16 %v829
  %v877 = vunpack.c.l.b16 %v830
  %v878 = vunpack.c.h.b16 %v830
  %v879 = vpack.c.b16 %v849, %v847
  %v880 = vpack.c.b16 %v850, %v848
  %v881 = vpack.c.b16 %v853, %v851
  %v882 = vpack.c.b16 %v854, %v852
  %v883 = vpack.c.b16 %v857, %v855
  %v884 = vpack.c.b16 %v858, %v856
  %v885 = vpack.c.b16 %v861, %v859
  %v886 = vpack.c.b16 %v862, %v860
  %v887 = vpack.c.b16 %v865, %v863
  %v888 = vpack.c.b16 %v866, %v864
  %v889 = vpack.c.b16 %v869, %v867
  %v890 = vpack.c.b16 %v870, %v868
  %v891 = vpack.c.b16 %v873, %v871
  %v892 = vpack.c.b16 %v874, %v872
  %v893 = vpack.c.b16 %v877, %v875
  %v894 = vpack.c.b16 %v878, %v876
  %911 = vmatprep.subr.bf16.mxu0 %v880
  %912 = vmatpush1.bf16.msra.mxu0 %v879
  %913 = vmatprep.subr.bf16.mxu0 %v882
  %914 = vmatpush1.bf16.msra.mxu0 %v881
  %915 = vmatprep.subr.bf16.mxu0 %v884
  %916 = vmatpush1.bf16.msra.mxu0 %v883
  %917 = vmatprep.subr.bf16.mxu0 %v886
  %918 = vmatpush1.bf16.msra.mxu0 %v885
  %919 = vmatprep.subr.bf16.mxu0 %v888
  %920 = vmatpush1.bf16.msra.mxu0 %v887
  %921 = vmatprep.subr.bf16.mxu0 %v890
  %922 = vmatpush1.bf16.msra.mxu0 %v889
  %923 = vmatprep.subr.bf16.mxu0 %v892
  %924 = vmatpush1.bf16.msra.mxu0 %v891
  %925 = vmatprep.subr.bf16.mxu0 %v894
  %926 = vmatpush1.bf16.msra.mxu0 %v893
  %927 = vmatprep.subr.bf16.mxu0 0
  %928 = vmatpush1.bf16.msra.mxu0 0
  %929 = vmatprep.subr.bf16.mxu0 0
  %930 = vmatpush1.bf16.msra.mxu0 0
  %931 = vmatprep.subr.bf16.mxu0 0
  %932 = vmatpush1.bf16.msra.mxu0 0
  %933 = vmatprep.subr.bf16.mxu0 0
  %934 = vmatpush1.bf16.msra.mxu0 0
  %935 = vmatprep.subr.bf16.mxu0 0
  %936 = vmatpush1.bf16.msra.mxu0 0
  %937 = vmatprep.subr.bf16.mxu0 0
  %938 = vmatpush1.bf16.msra.mxu0 0
  %939 = vmatprep.subr.bf16.mxu0 0
  %940 = vmatpush1.bf16.msra.mxu0 0
  %941 = vmatprep.subr.bf16.mxu0 0
  %942 = vmatpush1.bf16.msra.mxu0 0
  %943 = vmatprep.mubr.bf16.mxu0 0
  %944 = vmatmul.mubr.bf16.gmra.mrb[0].mxu0 %v793
  %v945 = vpop.f32.mrb[0].mxu0
  %v946 = vadd.f32 0.0, %v945
  %v947 = vpop.f32.mrb[0].mxu0
  %v948 = vadd.f32 0.0, %v947
  %v949 = vpop.f32.mrb[0].mxu0
  %v950 = vadd.f32 0.0, %v949
  %v951 = vpop.f32.mrb[0].mxu0
  %v952 = vadd.f32 0.0, %v951
  %953 = vmatprep.mubr.bf16.mxu0 0
  %954 = vmatmul.mubr.bf16.gmra.mrb[0].mxu0 %v794
  %v955 = vpop.f32.mrb[0].mxu0
  %v956 = vadd.f32 0.0, %v955
  %v957 = vpop.f32.mrb[0].mxu0
  %v958 = vadd.f32 0.0, %v957
  %v959 = vpop.f32.mrb[0].mxu0
  %v960 = vadd.f32 0.0, %v959
  %v961 = vpop.f32.mrb[0].mxu0
  %v962 = vadd.f32 0.0, %v961
  %963 = vdwg.mxu0
  %v980 = vunpack.c.l.b16 %v799
  %v981 = vunpack.c.h.b16 %v799
  %v982 = vunpack.c.l.b16 %v800
  %v983 = vunpack.c.h.b16 %v800
  %v984 = vunpack.c.l.b16 %v801
  %v985 = vunpack.c.h.b16 %v801
  %v986 = vunpack.c.l.b16 %v802
  %v987 = vunpack.c.h.b16 %v802
  %v988 = vunpack.c.l.b16 %v803
  %v989 = vunpack.c.h.b16 %v803
  %v990 = vunpack.c.l.b16 %v804
  %v991 = vunpack.c.h.b16 %v804
  %v992 = vunpack.c.l.b16 %v805
  %v993 = vunpack.c.h.b16 %v805
  %v994 = vunpack.c.l.b16 %v806
  %v995 = vunpack.c.h.b16 %v806
  %v996 = vunpack.c.l.b16 %v807
  %v997 = vunpack.c.h.b16 %v807
  %v998 = vunpack.c.l.b16 %v808
  %v999 = vunpack.c.h.b16 %v808
  %v1000 = vunpack.c.l.b16 %v809
  %v1001 = vunpack.c.h.b16 %v809
  %v1002 = vunpack.c.l.b16 %v810
  %v1003 = vunpack.c.h.b16 %v810
  %v1004 = vunpack.c.l.b16 %v811
  %v1005 = vunpack.c.h.b16 %v811
  %v1006 = vunpack.c.l.b16 %v812
  %v1007 = vunpack.c.h.b16 %v812
  %v1008 = vunpack.c.l.b16 %v813
  %v1009 = vunpack.c.h.b16 %v813
  %v1010 = vunpack.c.l.b16 %v814
  %v1011 = vunpack.c.h.b16 %v814
  %v1012 = vpack.c.b16 %v982, %v980
  %v1013 = vpack.c.b16 %v983, %v981
  %v1014 = vpack.c.b16 %v986, %v984
  %v1015 = vpack.c.b16 %v987, %v985
  %v1016 = vpack.c.b16 %v990, %v988
  %v1017 = vpack.c.b16 %v991, %v989
  %v1018 = vpack.c.b16 %v994, %v992
  %v1019 = vpack.c.b16 %v995, %v993
  %v1020 = vpack.c.b16 %v998, %v996
  %v1021 = vpack.c.b16 %v999, %v997
  %v1022 = vpack.c.b16 %v1002, %v1000
  %v1023 = vpack.c.b16 %v1003, %v1001
  %v1024 = vpack.c.b16 %v1006, %v1004
  %v1025 = vpack.c.b16 %v1007, %v1005
  %v1026 = vpack.c.b16 %v1010, %v1008
  %v1027 = vpack.c.b16 %v1011, %v1009
  %1044 = vmatprep.subr.bf16.mxu0 %v1013
  %1045 = vmatpush1.bf16.msra.mxu0 %v1012
  %1046 = vmatprep.subr.bf16.mxu0 %v1015
  %1047 = vmatpush1.bf16.msra.mxu0 %v1014
  %1048 = vmatprep.subr.bf16.mxu0 %v1017
  %1049 = vmatpush1.bf16.msra.mxu0 %v1016
  %1050 = vmatprep.subr.bf16.mxu0 %v1019
  %1051 = vmatpush1.bf16.msra.mxu0 %v1018
  %1052 = vmatprep.subr.bf16.mxu0 %v1021
  %1053 = vmatpush1.bf16.msra.mxu0 %v1020
  %1054 = vmatprep.subr.bf16.mxu0 %v1023
  %1055 = vmatpush1.bf16.msra.mxu0 %v1022
  %1056 = vmatprep.subr.bf16.mxu0 %v1025
  %1057 = vmatpush1.bf16.msra.mxu0 %v1024
  %1058 = vmatprep.subr.bf16.mxu0 %v1027
  %1059 = vmatpush1.bf16.msra.mxu0 %v1026
  %1060 = vmatprep.subr.bf16.mxu0 0
  %1061 = vmatpush1.bf16.msra.mxu0 0
  %1062 = vmatprep.subr.bf16.mxu0 0
  %1063 = vmatpush1.bf16.msra.mxu0 0
  %1064 = vmatprep.subr.bf16.mxu0 0
  %1065 = vmatpush1.bf16.msra.mxu0 0
  %1066 = vmatprep.subr.bf16.mxu0 0
  %1067 = vmatpush1.bf16.msra.mxu0 0
  %1068 = vmatprep.subr.bf16.mxu0 0
  %1069 = vmatpush1.bf16.msra.mxu0 0
  %1070 = vmatprep.subr.bf16.mxu0 0
  %1071 = vmatpush1.bf16.msra.mxu0 0
  %1072 = vmatprep.subr.bf16.mxu0 0
  %1073 = vmatpush1.bf16.msra.mxu0 0
  %1074 = vmatprep.subr.bf16.mxu0 0
  %1075 = vmatpush1.bf16.msra.mxu0 0
  %1076 = vmatprep.mubr.bf16.mxu0 0
  %1077 = vmatmul.mubr.bf16.gmra.mrb[0].mxu0 %v791
  %v1078 = vpop.f32.mrb[0].mxu0
  %v1079 = vadd.f32 %v946, %v1078
  %v1080 = vpop.f32.mrb[0].mxu0
  %v1081 = vadd.f32 %v948, %v1080
  %v1082 = vpop.f32.mrb[0].mxu0
  %v1083 = vadd.f32 %v950, %v1082
  %v1084 = vpop.f32.mrb[0].mxu0
  %v1085 = vadd.f32 %v952, %v1084
  %1086 = vmatprep.mubr.bf16.mxu0 0
  %1087 = vmatmul.mubr.bf16.gmra.mrb[0].mxu0 %v792
  %v1088 = vpop.f32.mrb[0].mxu0
  %v1089 = vadd.f32 %v956, %v1088
  %v1090 = vpop.f32.mrb[0].mxu0
  %v1091 = vadd.f32 %v958, %v1090
  %v1092 = vpop.f32.mrb[0].mxu0
  %v1093 = vadd.f32 %v960, %v1092
  %v1094 = vpop.f32.mrb[0].mxu0
  %v1095 = vadd.f32 %v962, %v1094
  %1096 = vdwg.mxu0
  %v1097 = vld [vmem:[%s6 + $0x100] sm:$0xff]
  %v1098 = vld [vmem:[%s6 + $0x108] sm:$0xff]
  %v1099 = vld [vmem:[%s6 + $0x110] sm:$0xff]
  %v1100 = vld [vmem:[%s6 + $0x118] sm:$0xff]
  %v1101 = vld [vmem:[%s6 + $0x120] sm:$0xff]
  %v1102 = vld [vmem:[%s6 + $0x128] sm:$0xff]
  %v1103 = vld [vmem:[%s6 + $0x130] sm:$0xff]
  %v1104 = vld [vmem:[%s6 + $0x138] sm:$0xff]
  %v1105 = vld [vmem:[%s6 + $0x140] sm:$0xff]
  %v1106 = vld [vmem:[%s6 + $0x148] sm:$0xff]
  %v1107 = vld [vmem:[%s6 + $0x150] sm:$0xff]
  %v1108 = vld [vmem:[%s6 + $0x158] sm:$0xff]
  %v1109 = vld [vmem:[%s6 + $0x160] sm:$0xff]
  %v1110 = vld [vmem:[%s6 + $0x168] sm:$0xff]
  %v1111 = vld [vmem:[%s6 + $0x170] sm:$0xff]
  %v1112 = vld [vmem:[%s6 + $0x178] sm:$0xff]
  %v1129 = vunpack.c.l.b16 %v1097
  %v1130 = vunpack.c.h.b16 %v1097
  %v1131 = vunpack.c.l.b16 %v1098
  %v1132 = vunpack.c.h.b16 %v1098
  %v1133 = vunpack.c.l.b16 %v1099
  %v1134 = vunpack.c.h.b16 %v1099
  %v1135 = vunpack.c.l.b16 %v1100
  %v1136 = vunpack.c.h.b16 %v1100
  %v1137 = vunpack.c.l.b16 %v1101
  %v1138 = vunpack.c.h.b16 %v1101
  %v1139 = vunpack.c.l.b16 %v1102
  %v1140 = vunpack.c.h.b16 %v1102
  %v1141 = vunpack.c.l.b16 %v1103
  %v1142 = vunpack.c.h.b16 %v1103
  %v1143 = vunpack.c.l.b16 %v1104
  %v1144 = vunpack.c.h.b16 %v1104
  %v1145 = vunpack.c.l.b16 %v1105
  %v1146 = vunpack.c.h.b16 %v1105
  %v1147 = vunpack.c.l.b16 %v1106
  %v1148 = vunpack.c.h.b16 %v1106
  %v1149 = vunpack.c.l.b16 %v1107
  %v1150 = vunpack.c.h.b16 %v1107
  %v1151 = vunpack.c.l.b16 %v1108
  %v1152 = vunpack.c.h.b16 %v1108
  %v1153 = vunpack.c.l.b16 %v1109
  %v1154 = vunpack.c.h.b16 %v1109
  %v1155 = vunpack.c.l.b16 %v1110
  %v1156 = vunpack.c.h.b16 %v1110
  %v1157 = vunpack.c.l.b16 %v1111
  %v1158 = vunpack.c.h.b16 %v1111
  %v1159 = vunpack.c.l.b16 %v1112
  %v1160 = vunpack.c.h.b16 %v1112
  %v1161 = vpack.c.b16 %v1131, %v1129
  %v1162 = vpack.c.b16 %v1132, %v1130
  %v1163 = vpack.c.b16 %v1135, %v1133
  %v1164 = vpack.c.b16 %v1136, %v1134
  %v1165 = vpack.c.b16 %v1139, %v1137
  %v1166 = vpack.c.b16 %v1140, %v1138
  %v1167 = vpack.c.b16 %v1143, %v1141
  %v1168 = vpack.c.b16 %v1144, %v1142
  %v1169 = vpack.c.b16 %v1147, %v1145
  %v1170 = vpack.c.b16 %v1148, %v1146
  %v1171 = vpack.c.b16 %v1151, %v1149
  %v1172 = vpack.c.b16 %v1152, %v1150
  %v1173 = vpack.c.b16 %v1155, %v1153
  %v1174 = vpack.c.b16 %v1156, %v1154
  %v1175 = vpack.c.b16 %v1159, %v1157
  %v1176 = vpack.c.b16 %v1160, %v1158
  %1193 = vmatprep.subr.bf16.mxu0 %v1162
  %1194 = vmatpush1.bf16.msra.mxu0 %v1161
  %1195 = vmatprep.subr.bf16.mxu0 %v1164
  %1196 = vmatpush1.bf16.msra.mxu0 %v1163
  %1197 = vmatprep.subr.bf16.mxu0 %v1166
  %1198 = vmatpush1.bf16.msra.mxu0 %v1165
  %1199 = vmatprep.subr.bf16.mxu0 %v1168
  %1200 = vmatpush1.bf16.msra.mxu0 %v1167
  %1201 = vmatprep.subr.bf16.mxu0 %v1170
  %1202 = vmatpush1.bf16.msra.mxu0 %v1169
  %1203 = vmatprep.subr.bf16.mxu0 %v1172
  %1204 = vmatpush1.bf16.msra.mxu0 %v1171
  %1205 = vmatprep.subr.bf16.mxu0 %v1174
  %1206 = vmatpush1.bf16.msra.mxu0 %v1173
  %1207 = vmatprep.subr.bf16.mxu0 %v1176
  %1208 = vmatpush1.bf16.msra.mxu0 %v1175
  %1209 = vmatprep.subr.bf16.mxu0 0
  %1210 = vmatpush1.bf16.msra.mxu0 0
  %1211 = vmatprep.subr.bf16.mxu0 0
  %1212 = vmatpush1.bf16.msra.mxu0 0
  %1213 = vmatprep.subr.bf16.mxu0 0
  %1214 = vmatpush1.bf16.msra.mxu0 0
  %1215 = vmatprep.subr.bf16.mxu0 0
  %1216 = vmatpush1.bf16.msra.mxu0 0
  %1217 = vmatprep.subr.bf16.mxu0 0
  %1218 = vmatpush1.bf16.msra.mxu0 0
  %1219 = vmatprep.subr.bf16.mxu0 0
  %1220 = vmatpush1.bf16.msra.mxu0 0
  %1221 = vmatprep.subr.bf16.mxu0 0
  %1222 = vmatpush1.bf16.msra.mxu0 0
  %1223 = vmatprep.subr.bf16.mxu0 0
  %1224 = vmatpush1.bf16.msra.mxu0 0
  %1225 = vmatprep.mubr.bf16.mxu0 0
  %1226 = vmatmul.mubr.bf16.gmra.mrb[0].mxu0 %v795
  %v1227 = vpop.f32.mrb[0].mxu0
  %v1228 = vadd.f32 0.0, %v1227
  %v1229 = vpop.f32.mrb[0].mxu0
  %v1230 = vadd.f32 0.0, %v1229
  %v1231 = vpop.f32.mrb[0].mxu0
  %v1232 = vadd.f32 0.0, %v1231
  %v1233 = vpop.f32.mrb[0].mxu0
  %v1234 = vadd.f32 0.0, %v1233
  %1235 = vmatprep.mubr.bf16.mxu0 0
  %1236 = vmatmul.mubr.bf16.gmra.mrb[0].mxu0 %v796
  %v1237 = vpop.f32.mrb[0].mxu0
  %v1238 = vadd.f32 0.0, %v1237
  %v1239 = vpop.f32.mrb[0].mxu0
  %v1240 = vadd.f32 0.0, %v1239
  %v1241 = vpop.f32.mrb[0].mxu0
  %v1242 = vadd.f32 0.0, %v1241
  %v1243 = vpop.f32.mrb[0].mxu0
  %v1244 = vadd.f32 0.0, %v1243
  %1245 = vdwg.mxu0
  %v1246 = vadd.f32 %v1079, %v1228
  %v1247 = vadd.f32 %v1081, %v1230
  %v1248 = vadd.f32 %v1083, %v1232
  %v1249 = vadd.f32 %v1085, %v1234
  %v1250 = vadd.f32 %v1089, %v1238
  %v1251 = vadd.f32 %v1091, %v1240
  %v1252 = vadd.f32 %v1093, %v1242
  %v1253 = vadd.f32 %v1095, %v1244
  %v1254 = vld [vmem:[%s6 + $0x180] sm:$0xff]
  %v1255 = vld [vmem:[%s6 + $0x188] sm:$0xff]
  %v1256 = vld [vmem:[%s6 + $0x190] sm:$0xff]
  %v1257 = vld [vmem:[%s6 + $0x198] sm:$0xff]
  %v1258 = vld [vmem:[%s6 + $0x1a0] sm:$0xff]
  %v1259 = vld [vmem:[%s6 + $0x1a8] sm:$0xff]
  %v1260 = vld [vmem:[%s6 + $0x1b0] sm:$0xff]
  %v1261 = vld [vmem:[%s6 + $0x1b8] sm:$0xff]
  %v1262 = vld [vmem:[%s6 + $0x1c0] sm:$0xff]
  %v1263 = vld [vmem:[%s6 + $0x1c8] sm:$0xff]
  %v1264 = vld [vmem:[%s6 + $0x1d0] sm:$0xff]
  %v1265 = vld [vmem:[%s6 + $0x1d8] sm:$0xff]
  %v1266 = vld [vmem:[%s6 + $0x1e0] sm:$0xff]
  %v1267 = vld [vmem:[%s6 + $0x1e8] sm:$0xff]
  %v1268 = vld [vmem:[%s6 + $0x1f0] sm:$0xff]
  %v1269 = vld [vmem:[%s6 + $0x1f8] sm:$0xff]
  %v1286 = vunpack.c.l.b16 %v1254
  %v1287 = vunpack.c.h.b16 %v1254
  %v1288 = vunpack.c.l.b16 %v1255
  %v1289 = vunpack.c.h.b16 %v1255
  %v1290 = vunpack.c.l.b16 %v1256
  %v1291 = vunpack.c.h.b16 %v1256
  %v1292 = vunpack.c.l.b16 %v1257
  %v1293 = vunpack.c.h.b16 %v1257
  %v1294 = vunpack.c.l.b16 %v1258
  %v1295 = vunpack.c.h.b16 %v1258
  %v1296 = vunpack.c.l.b16 %v1259
  %v1297 = vunpack.c.h.b16 %v1259
  %v1298 = vunpack.c.l.b16 %v1260
  %v1299 = vunpack.c.h.b16 %v1260
  %v1300 = vunpack.c.l.b16 %v1261
  %v1301 = vunpack.c.h.b16 %v1261
  %v1302 = vunpack.c.l.b16 %v1262
  %v1303 = vunpack.c.h.b16 %v1262
  %v1304 = vunpack.c.l.b16 %v1263
  %v1305 = vunpack.c.h.b16 %v1263
  %v1306 = vunpack.c.l.b16 %v1264
  %v1307 = vunpack.c.h.b16 %v1264
  %v1308 = vunpack.c.l.b16 %v1265
  %v1309 = vunpack.c.h.b16 %v1265
  %v1310 = vunpack.c.l.b16 %v1266
  %v1311 = vunpack.c.h.b16 %v1266
  %v1312 = vunpack.c.l.b16 %v1267
  %v1313 = vunpack.c.h.b16 %v1267
  %v1314 = vunpack.c.l.b16 %v1268
  %v1315 = vunpack.c.h.b16 %v1268
  %v1316 = vunpack.c.l.b16 %v1269
  %v1317 = vunpack.c.h.b16 %v1269
  %v1318 = vpack.c.b16 %v1288, %v1286
  %v1319 = vpack.c.b16 %v1289, %v1287
  %v1320 = vpack.c.b16 %v1292, %v1290
  %v1321 = vpack.c.b16 %v1293, %v1291
  %v1322 = vpack.c.b16 %v1296, %v1294
  %v1323 = vpack.c.b16 %v1297, %v1295
  %v1324 = vpack.c.b16 %v1300, %v1298
  %v1325 = vpack.c.b16 %v1301, %v1299
  %v1326 = vpack.c.b16 %v1304, %v1302
  %v1327 = vpack.c.b16 %v1305, %v1303
  %v1328 = vpack.c.b16 %v1308, %v1306
  %v1329 = vpack.c.b16 %v1309, %v1307
  %v1330 = vpack.c.b16 %v1312, %v1310
  %v1331 = vpack.c.b16 %v1313, %v1311
  %v1332 = vpack.c.b16 %v1316, %v1314
  %v1333 = vpack.c.b16 %v1317, %v1315
  %1350 = vmatprep.subr.bf16.mxu0 %v1319
  %1351 = vmatpush1.bf16.msra.mxu0 %v1318
  %1352 = vmatprep.subr.bf16.mxu0 %v1321
  %1353 = vmatpush1.bf16.msra.mxu0 %v1320
  %1354 = vmatprep.subr.bf16.mxu0 %v1323
  %1355 = vmatpush1.bf16.msra.mxu0 %v1322
  %1356 = vmatprep.subr.bf16.mxu0 %v1325
  %1357 = vmatpush1.bf16.msra.mxu0 %v1324
  %1358 = vmatprep.subr.bf16.mxu0 %v1327
  %1359 = vmatpush1.bf16.msra.mxu0 %v1326
  %1360 = vmatprep.subr.bf16.mxu0 %v1329
  %1361 = vmatpush1.bf16.msra.mxu0 %v1328
  %1362 = vmatprep.subr.bf16.mxu0 %v1331
  %1363 = vmatpush1.bf16.msra.mxu0 %v1330
  %1364 = vmatprep.subr.bf16.mxu0 %v1333
  %1365 = vmatpush1.bf16.msra.mxu0 %v1332
  %1366 = vmatprep.subr.bf16.mxu0 0
  %1367 = vmatpush1.bf16.msra.mxu0 0
  %1368 = vmatprep.subr.bf16.mxu0 0
  %1369 = vmatpush1.bf16.msra.mxu0 0
  %1370 = vmatprep.subr.bf16.mxu0 0
  %1371 = vmatpush1.bf16.msra.mxu0 0
  %1372 = vmatprep.subr.bf16.mxu0 0
  %1373 = vmatpush1.bf16.msra.mxu0 0
  %1374 = vmatprep.subr.bf16.mxu0 0
  %1375 = vmatpush1.bf16.msra.mxu0 0
  %1376 = vmatprep.subr.bf16.mxu0 0
  %1377 = vmatpush1.bf16.msra.mxu0 0
  %1378 = vmatprep.subr.bf16.mxu0 0
  %1379 = vmatpush1.bf16.msra.mxu0 0
  %1380 = vmatprep.subr.bf16.mxu0 0
  %1381 = vmatpush1.bf16.msra.mxu0 0
  %1382 = vmatprep.mubr.bf16.mxu0 0
  %1383 = vmatmul.mubr.bf16.gmra.mrb[0].mxu0 %v797
  %v1384 = vpop.f32.mrb[0].mxu0
  %v1385 = vadd.f32 0.0, %v1384
  %v1386 = vpop.f32.mrb[0].mxu0
  %v1387 = vadd.f32 0.0, %v1386
  %v1388 = vpop.f32.mrb[0].mxu0
  %v1389 = vadd.f32 0.0, %v1388
  %v1390 = vpop.f32.mrb[0].mxu0
  %v1391 = vadd.f32 0.0, %v1390
  %1392 = vmatprep.mubr.bf16.mxu0 0
  %1393 = vmatmul.mubr.bf16.gmra.mrb[0].mxu0 %v798
  %v1394 = vpop.f32.mrb[0].mxu0
  %v1395 = vadd.f32 0.0, %v1394
  %v1396 = vpop.f32.mrb[0].mxu0
  %v1397 = vadd.f32 0.0, %v1396
  %v1398 = vpop.f32.mrb[0].mxu0
  %v1399 = vadd.f32 0.0, %v1398
  %v1400 = vpop.f32.mrb[0].mxu0
  %v1401 = vadd.f32 0.0, %v1400
  %1402 = vdwg.mxu0
  %v1403 = vadd.f32 %v1246, %v1385
  %v1404 = vadd.f32 %v1247, %v1387
  %v1405 = vadd.f32 %v1248, %v1389
  %v1406 = vadd.f32 %v1249, %v1391
  %v1407 = vadd.f32 %v1250, %v1395
  %v1408 = vadd.f32 %v1251, %v1397
  %v1409 = vadd.f32 %v1252, %v1399
  %v1410 = vadd.f32 %v1253, %v1401
  %v1411 = vld [vmem:[%s7] sm:$0x3]
  %v1413 = vlaneseq
  %v1414 = vshrl.u32 %v1413, 7
  %v1415 = vsub.s32 0, %v1414
  %v1416 = vrot.slane %v1411, %v1415
  %v1417 = vlaneseq
  %v1418 = vshrl.u32 %v1417, 7
  %v1419 = vsub.s32 1, %v1418
  %v1420 = vrot.slane %v1411, %v1419
  %v1423 = vadd.f32 %v1403, %v1416
  %v1424 = vadd.f32 %v1404, %v1420
  %v1425 = vadd.f32 %v1405, %v1416
  %v1426 = vadd.f32 %v1406, %v1420
  %v1427 = vadd.f32 %v1407, %v1416
  %v1428 = vadd.f32 %v1408, %v1420
  %v1429 = vadd.f32 %v1409, %v1416
  %v1430 = vadd.f32 %v1410, %v1420
  %v1431 = vmul.f32 %v1423, %v1423
  %v1432 = vmul.f32 %v1424, %v1424
  %v1433 = vmul.f32 %v1425, %v1425
  %v1434 = vmul.f32 %v1426, %v1426
  %v1435 = vmul.f32 %v1427, %v1427
  %v1436 = vmul.f32 %v1428, %v1428
  %v1437 = vmul.f32 %v1429, %v1429
  %v1438 = vmul.f32 %v1430, %v1430
  %v1439 = vmul.f32 %v1423, %v1431
  %v1440 = vmul.f32 %v1424, %v1432
  %v1441 = vmul.f32 %v1425, %v1433
  %v1442 = vmul.f32 %v1426, %v1434
  %v1443 = vmul.f32 %v1427, %v1435
  %v1444 = vmul.f32 %v1428, %v1436
  %v1445 = vmul.f32 %v1429, %v1437
  %v1446 = vmul.f32 %v1430, %v1438
  %v1447 = vmul.f32 %v1439, 0.044715
  %v1448 = vmul.f32 %v1440, 0.044715
  %v1449 = vmul.f32 %v1441, 0.044715
  %v1450 = vmul.f32 %v1442, 0.044715
  %v1451 = vmul.f32 %v1443, 0.044715
  %v1452 = vmul.f32 %v1444, 0.044715
  %v1453 = vmul.f32 %v1445, 0.044715
  %v1454 = vmul.f32 %v1446, 0.044715
  %v1455 = vadd.f32 %v1423, %v1447
  %v1456 = vadd.f32 %v1424, %v1448
  %v1457 = vadd.f32 %v1425, %v1449
  %v1458 = vadd.f32 %v1426, %v1450
  %v1459 = vadd.f32 %v1427, %v1451
  %v1460 = vadd.f32 %v1428, %v1452
  %v1461 = vadd.f32 %v1429, %v1453
  %v1462 = vadd.f32 %v1430, %v1454
  %v1463 = vmul.f32 %v1455, 0.7978846
  %v1464 = vmul.f32 %v1456, 0.7978846
  %v1465 = vmul.f32 %v1457, 0.7978846
  %v1466 = vmul.f32 %v1458, 0.7978846
  %v1467 = vmul.f32 %v1459, 0.7978846
  %v1468 = vmul.f32 %v1460, 0.7978846
  %v1469 = vmul.f32 %v1461, 0.7978846
  %v1470 = vmul.f32 %v1462, 0.7978846
  %v1471 = vtanh.pop %v1463
  %v1472 = vtanh.pop %v1464
  %v1473 = vtanh.pop %v1465
  %v1474 = vtanh.pop %v1466
  %v1475 = vtanh.pop %v1467
  %v1476 = vtanh.pop %v1468
  %v1477 = vtanh.pop %v1469
  %v1478 = vtanh.pop %v1470
  %v1479 = vadd.f32 %v1471, 1.0
  %v1480 = vadd.f32 %v1472, 1.0
  %v1481 = vadd.f32 %v1473, 1.0
  %v1482 = vadd.f32 %v1474, 1.0
  %v1483 = vadd.f32 %v1475, 1.0
  %v1484 = vadd.f32 %v1476, 1.0
  %v1485 = vadd.f32 %v1477, 1.0
  %v1486 = vadd.f32 %v1478, 1.0
  %v1487 = vmul.f32 %v1479, 0.5
  %v1488 = vmul.f32 %v1480, 0.5
  %v1489 = vmul.f32 %v1481, 0.5
  %v1490 = vmul.f32 %v1482, 0.5
  %v1491 = vmul.f32 %v1483, 0.5
  %v1492 = vmul.f32 %v1484, 0.5
  %v1493 = vmul.f32 %v1485, 0.5
  %v1494 = vmul.f32 %v1486, 0.5
  %v1495 = vmul.f32 %v1423, %v1487
  %v1496 = vmul.f32 %v1424, %v1488
  %v1497 = vmul.f32 %v1425, %v1489
  %v1498 = vmul.f32 %v1426, %v1490
  %v1499 = vmul.f32 %v1427, %v1491
  %v1500 = vmul.f32 %v1428, %v1492
  %v1501 = vmul.f32 %v1429, %v1493
  %v1502 = vmul.f32 %v1430, %v1494
  %v1503 = vpack.c.bf16 %v1497, %v1495
  %v1504 = vpack.c.bf16 %v1498, %v1496
  %v1505 = vpack.c.bf16 %v1501, %v1499
  %v1506 = vpack.c.bf16 %v1502, %v1500
  %v1507 = vld [vmem:[%s8] sm:$0xff]
  %v1508 = vld [vmem:[%s8 + $0x8] sm:$0xff]
  %v1509 = vld [vmem:[%s8 + $0x10] sm:$0xff]
  %v1510 = vld [vmem:[%s8 + $0x18] sm:$0xff]
  %v1511 = vld [vmem:[%s8 + $0x20] sm:$0xff]
  %v1512 = vld [vmem:[%s8 + $0x28] sm:$0xff]
  %v1513 = vld [vmem:[%s8 + $0x30] sm:$0xff]
  %v1514 = vld [vmem:[%s8 + $0x38] sm:$0xff]
  %v1515 = vld [vmem:[%s8 + $0x40] sm:$0xff]
  %v1516 = vld [vmem:[%s8 + $0x48] sm:$0xff]
  %v1517 = vld [vmem:[%s8 + $0x50] sm:$0xff]
  %v1518 = vld [vmem:[%s8 + $0x58] sm:$0xff]
  %v1519 = vld [vmem:[%s8 + $0x60] sm:$0xff]
  %v1520 = vld [vmem:[%s8 + $0x68] sm:$0xff]
  %v1521 = vld [vmem:[%s8 + $0x70] sm:$0xff]
  %v1522 = vld [vmem:[%s8 + $0x78] sm:$0xff]
  %v1523 = vld [vmem:[%s8 + $0x80] sm:$0xff]
  %v1524 = vld [vmem:[%s8 + $0x88] sm:$0xff]
  %v1525 = vld [vmem:[%s8 + $0x90] sm:$0xff]
  %v1526 = vld [vmem:[%s8 + $0x98] sm:$0xff]
  %v1527 = vld [vmem:[%s8 + $0xa0] sm:$0xff]
  %v1528 = vld [vmem:[%s8 + $0xa8] sm:$0xff]
  %v1529 = vld [vmem:[%s8 + $0xb0] sm:$0xff]
  %v1530 = vld [vmem:[%s8 + $0xb8] sm:$0xff]
  %v1531 = vld [vmem:[%s8 + $0xc0] sm:$0xff]
  %v1532 = vld [vmem:[%s8 + $0xc8] sm:$0xff]
  %v1533 = vld [vmem:[%s8 + $0xd0] sm:$0xff]
  %v1534 = vld [vmem:[%s8 + $0xd8] sm:$0xff]
  %v1535 = vld [vmem:[%s8 + $0xe0] sm:$0xff]
  %v1536 = vld [vmem:[%s8 + $0xe8] sm:$0xff]
  %v1537 = vld [vmem:[%s8 + $0xf0] sm:$0xff]
  %v1538 = vld [vmem:[%s8 + $0xf8] sm:$0xff]
  %v1539 = vld [vmem:[%s8 + $0x100] sm:$0xff]
  %v1540 = vld [vmem:[%s8 + $0x108] sm:$0xff]
  %v1541 = vld [vmem:[%s8 + $0x110] sm:$0xff]
  %v1542 = vld [vmem:[%s8 + $0x118] sm:$0xff]
  %v1543 = vld [vmem:[%s8 + $0x120] sm:$0xff]
  %v1544 = vld [vmem:[%s8 + $0x128] sm:$0xff]
  %v1545 = vld [vmem:[%s8 + $0x130] sm:$0xff]
  %v1546 = vld [vmem:[%s8 + $0x138] sm:$0xff]
  %v1547 = vld [vmem:[%s8 + $0x140] sm:$0xff]
  %v1548 = vld [vmem:[%s8 + $0x148] sm:$0xff]
  %v1549 = vld [vmem:[%s8 + $0x150] sm:$0xff]
  %v1550 = vld [vmem:[%s8 + $0x158] sm:$0xff]
  %v1551 = vld [vmem:[%s8 + $0x160] sm:$0xff]
  %v1552 = vld [vmem:[%s8 + $0x168] sm:$0xff]
  %v1553 = vld [vmem:[%s8 + $0x170] sm:$0xff]
  %v1554 = vld [vmem:[%s8 + $0x178] sm:$0xff]
  %v1555 = vld [vmem:[%s8 + $0x180] sm:$0xff]
  %v1556 = vld [vmem:[%s8 + $0x188] sm:$0xff]
  %v1557 = vld [vmem:[%s8 + $0x190] sm:$0xff]
  %v1558 = vld [vmem:[%s8 + $0x198] sm:$0xff]
  %v1559 = vld [vmem:[%s8 + $0x1a0] sm:$0xff]
  %v1560 = vld [vmem:[%s8 + $0x1a8] sm:$0xff]
  %v1561 = vld [vmem:[%s8 + $0x1b0] sm:$0xff]
  %v1562 = vld [vmem:[%s8 + $0x1b8] sm:$0xff]
  %v1563 = vld [vmem:[%s8 + $0x1c0] sm:$0xff]
  %v1564 = vld [vmem:[%s8 + $0x1c8] sm:$0xff]
  %v1565 = vld [vmem:[%s8 + $0x1d0] sm:$0xff]
  %v1566 = vld [vmem:[%s8 + $0x1d8] sm:$0xff]
  %v1567 = vld [vmem:[%s8 + $0x1e0] sm:$0xff]
  %v1568 = vld [vmem:[%s8 + $0x1e8] sm:$0xff]
  %v1569 = vld [vmem:[%s8 + $0x1f0] sm:$0xff]
  %v1570 = vld [vmem:[%s8 + $0x1f8] sm:$0xff]
  %v1571 = vld [vmem:[%s8 + $0x200] sm:$0xff]
  %v1572 = vld [vmem:[%s8 + $0x208] sm:$0xff]
  %v1573 = vld [vmem:[%s8 + $0x210] sm:$0xff]
  %v1574 = vld [vmem:[%s8 + $0x218] sm:$0xff]
  %v1575 = vld [vmem:[%s8 + $0x220] sm:$0xff]
  %v1576 = vld [vmem:[%s8 + $0x228] sm:$0xff]
  %v1577 = vld [vmem:[%s8 + $0x230] sm:$0xff]
  %v1578 = vld [vmem:[%s8 + $0x238] sm:$0xff]
  %v1579 = vld [vmem:[%s8 + $0x240] sm:$0xff]
  %v1580 = vld [vmem:[%s8 + $0x248] sm:$0xff]
  %v1581 = vld [vmem:[%s8 + $0x250] sm:$0xff]
  %v1582 = vld [vmem:[%s8 + $0x258] sm:$0xff]
  %v1583 = vld [vmem:[%s8 + $0x260] sm:$0xff]
  %v1584 = vld [vmem:[%s8 + $0x268] sm:$0xff]
  %v1585 = vld [vmem:[%s8 + $0x270] sm:$0xff]
  %v1586 = vld [vmem:[%s8 + $0x278] sm:$0xff]
  %v1587 = vld [vmem:[%s8 + $0x280] sm:$0xff]
  %v1588 = vld [vmem:[%s8 + $0x288] sm:$0xff]
  %v1589 = vld [vmem:[%s8 + $0x290] sm:$0xff]
  %v1590 = vld [vmem:[%s8 + $0x298] sm:$0xff]
  %v1591 = vld [vmem:[%s8 + $0x2a0] sm:$0xff]
  %v1592 = vld [vmem:[%s8 + $0x2a8] sm:$0xff]
  %v1593 = vld [vmem:[%s8 + $0x2b0] sm:$0xff]
  %v1594 = vld [vmem:[%s8 + $0x2b8] sm:$0xff]
  %v1595 = vld [vmem:[%s8 + $0x2c0] sm:$0xff]
  %v1596 = vld [vmem:[%s8 + $0x2c8] sm:$0xff]
  %v1597 = vld [vmem:[%s8 + $0x2d0] sm:$0xff]
  %v1598 = vld [vmem:[%s8 + $0x2d8] sm:$0xff]
  %v1599 = vld [vmem:[%s8 + $0x2e0] sm:$0xff]
  %v1600 = vld [vmem:[%s8 + $0x2e8] sm:$0xff]
  %v1601 = vld [vmem:[%s8 + $0x2f0] sm:$0xff]
  %v1602 = vld [vmem:[%s8 + $0x2f8] sm:$0xff]
  %v1603 = vld [vmem:[%s8 + $0x300] sm:$0xff]
  %v1604 = vld [vmem:[%s8 + $0x308] sm:$0xff]
  %v1605 = vld [vmem:[%s8 + $0x310] sm:$0xff]
  %v1606 = vld [vmem:[%s8 + $0x318] sm:$0xff]
  %v1607 = vld [vmem:[%s8 + $0x320] sm:$0xff]
  %v1608 = vld [vmem:[%s8 + $0x328] sm:$0xff]
  %v1609 = vld [vmem:[%s8 + $0x330] sm:$0xff]
  %v1610 = vld [vmem:[%s8 + $0x338] sm:$0xff]
  %v1611 = vld [vmem:[%s8 + $0x340] sm:$0xff]
  %v1612 = vld [vmem:[%s8 + $0x348] sm:$0xff]
  %v1613 = vld [vmem:[%s8 + $0x350] sm:$0xff]
  %v1614 = vld [vmem:[%s8 + $0x358] sm:$0xff]
  %v1615 = vld [vmem:[%s8 + $0x360] sm:$0xff]
  %v1616 = vld [vmem:[%s8 + $0x368] sm:$0xff]
  %v1617 = vld [vmem:[%s8 + $0x370] sm:$0xff]
  %v1618 = vld [vmem:[%s8 + $0x378] sm:$0xff]
  %v1619 = vld [vmem:[%s8 + $0x380] sm:$0xff]
  %v1620 = vld [vmem:[%s8 + $0x388] sm:$0xff]
  %v1621 = vld [vmem:[%s8 + $0x390] sm:$0xff]
  %v1622 = vld [vmem:[%s8 + $0x398] sm:$0xff]
  %v1623 = vld [vmem:[%s8 + $0x3a0] sm:$0xff]
  %v1624 = vld [vmem:[%s8 + $0x3a8] sm:$0xff]
  %v1625 = vld [vmem:[%s8 + $0x3b0] sm:$0xff]
  %v1626 = vld [vmem:[%s8 + $0x3b8] sm:$0xff]
  %v1627 = vld [vmem:[%s8 + $0x3c0] sm:$0xff]
  %v1628 = vld [vmem:[%s8 + $0x3c8] sm:$0xff]
  %v1629 = vld [vmem:[%s8 + $0x3d0] sm:$0xff]
  %v1630 = vld [vmem:[%s8 + $0x3d8] sm:$0xff]
  %v1631 = vld [vmem:[%s8 + $0x3e0] sm:$0xff]
  %v1632 = vld [vmem:[%s8 + $0x3e8] sm:$0xff]
  %v1633 = vld [vmem:[%s8 + $0x3f0] sm:$0xff]
  %v1634 = vld [vmem:[%s8 + $0x3f8] sm:$0xff]
  %v1637 = vrot.slane %v1503, 4
  %v1638 = vrot.slane %v1504, 4
  %v1705 = vunpack.c.l.b16 %v1571
  %v1706 = vunpack.c.h.b16 %v1571
  %v1707 = vunpack.c.l.b16 %v1572
  %v1708 = vunpack.c.h.b16 %v1572
  %v1709 = vunpack.c.l.b16 %v1573
  %v1710 = vunpack.c.h.b16 %v1573
  %v1711 = vunpack.c.l.b16 %v1574
  %v1712 = vunpack.c.h.b16 %v1574
  %v1713 = vunpack.c.l.b16 %v1575
  %v1714 = vunpack.c.h.b16 %v1575
  %v1715 = vunpack.c.l.b16 %v1576
  %v1716 = vunpack.c.h.b16 %v1576
  %v1717 = vunpack.c.l.b16 %v1577
  %v1718 = vunpack.c.h.b16 %v1577
  %v1719 = vunpack.c.l.b16 %v1578
  %v1720 = vunpack.c.h.b16 %v1578
  %v1721 = vunpack.c.l.b16 %v1579
  %v1722 = vunpack.c.h.b16 %v1579
  %v1723 = vunpack.c.l.b16 %v1580
  %v1724 = vunpack.c.h.b16 %v1580
  %v1725 = vunpack.c.l.b16 %v1581
  %v1726 = vunpack.c.h.b16 %v1581
  %v1727 = vunpack.c.l.b16 %v1582
  %v1728 = vunpack.c.h.b16 %v1582
  %v1729 = vunpack.c.l.b16 %v1583
  %v1730 = vunpack.c.h.b16 %v1583
  %v1731 = vunpack.c.l.b16 %v1584
  %v1732 = vunpack.c.h.b16 %v1584
  %v1733 = vunpack.c.l.b16 %v1585
  %v1734 = vunpack.c.h.b16 %v1585
  %v1735 = vunpack.c.l.b16 %v1586
  %v1736 = vunpack.c.h.b16 %v1586
  %v1737 = vunpack.c.l.b16 %v1587
  %v1738 = vunpack.c.h.b16 %v1587
  %v1739 = vunpack.c.l.b16 %v1588
  %v1740 = vunpack.c.h.b16 %v1588
  %v1741 = vunpack.c.l.b16 %v1589
  %v1742 = vunpack.c.h.b16 %v1589
  %v1743 = vunpack.c.l.b16 %v1590
  %v1744 = vunpack.c.h.b16 %v1590
  %v1745 = vunpack.c.l.b16 %v1591
  %v1746 = vunpack.c.h.b16 %v1591
  %v1747 = vunpack.c.l.b16 %v1592
  %v1748 = vunpack.c.h.b16 %v1592
  %v1749 = vunpack.c.l.b16 %v1593
  %v1750 = vunpack.c.h.b16 %v1593
  %v1751 = vunpack.c.l.b16 %v1594
  %v1752 = vunpack.c.h.b16 %v1594
  %v1753 = vunpack.c.l.b16 %v1595
  %v1754 = vunpack.c.h.b16 %v1595
  %v1755 = vunpack.c.l.b16 %v1596
  %v1756 = vunpack.c.h.b16 %v1596
  %v1757 = vunpack.c.l.b16 %v1597
  %v1758 = vunpack.c.h.b16 %v1597
  %v1759 = vunpack.c.l.b16 %v1598
  %v1760 = vunpack.c.h.b16 %v1598
  %v1761 = vunpack.c.l.b16 %v1599
  %v1762 = vunpack.c.h.b16 %v1599
  %v1763 = vunpack.c.l.b16 %v1600
  %v1764 = vunpack.c.h.b16 %v1600
  %v1765 = vunpack.c.l.b16 %v1601
  %v1766 = vunpack.c.h.b16 %v1601
  %v1767 = vunpack.c.l.b16 %v1602
  %v1768 = vunpack.c.h.b16 %v1602
  %v1769 = vunpack.c.l.b16 %v1603
  %v1770 = vunpack.c.h.b16 %v1603
  %v1771 = vunpack.c.l.b16 %v1604
  %v1772 = vunpack.c.h.b16 %v1604
  %v1773 = vunpack.c.l.b16 %v1605
  %v1774 = vunpack.c.h.b16 %v1605
  %v1775 = vunpack.c.l.b16 %v1606
  %v1776 = vunpack.c.h.b16 %v1606
  %v1777 = vunpack.c.l.b16 %v1607
  %v1778 = vunpack.c.h.b16 %v1607
  %v1779 = vunpack.c.l.b16 %v1608
  %v1780 = vunpack.c.h.b16 %v1608
  %v1781 = vunpack.c.l.b16 %v1609
  %v1782 = vunpack.c.h.b16 %v1609
  %v1783 = vunpack.c.l.b16 %v1610
  %v1784 = vunpack.c.h.b16 %v1610
  %v1785 = vunpack.c.l.b16 %v1611
  %v1786 = vunpack.c.h.b16 %v1611
  %v1787 = vunpack.c.l.b16 %v1612
  %v1788 = vunpack.c.h.b16 %v1612
  %v1789 = vunpack.c.l.b16 %v1613
  %v1790 = vunpack.c.h.b16 %v1613
  %v1791 = vunpack.c.l.b16 %v1614
  %v1792 = vunpack.c.h.b16 %v1614
  %v1793 = vunpack.c.l.b16 %v1615
  %v1794 = vunpack.c.h.b16 %v1615
  %v1795 = vunpack.c.l.b16 %v1616
  %v1796 = vunpack.c.h.b16 %v1616
  %v1797 = vunpack.c.l.b16 %v1617
  %v1798 = vunpack.c.h.b16 %v1617
  %v1799 = vunpack.c.l.b16 %v1618
  %v1800 = vunpack.c.h.b16 %v1618
  %v1801 = vunpack.c.l.b16 %v1619
  %v1802 = vunpack.c.h.b16 %v1619
  %v1803 = vunpack.c.l.b16 %v1620
  %v1804 = vunpack.c.h.b16 %v1620
  %v1805 = vunpack.c.l.b16 %v1621
  %v1806 = vunpack.c.h.b16 %v1621
  %v1807 = vunpack.c.l.b16 %v1622
  %v1808 = vunpack.c.h.b16 %v1622
  %v1809 = vunpack.c.l.b16 %v1623
  %v1810 = vunpack.c.h.b16 %v1623
  %v1811 = vunpack.c.l.b16 %v1624
  %v1812 = vunpack.c.h.b16 %v1624
  %v1813 = vunpack.c.l.b16 %v1625
  %v1814 = vunpack.c.h.b16 %v1625
  %v1815 = vunpack.c.l.b16 %v1626
  %v1816 = vunpack.c.h.b16 %v1626
  %v1817 = vunpack.c.l.b16 %v1627
  %v1818 = vunpack.c.h.b16 %v1627
  %v1819 = vunpack.c.l.b16 %v1628
  %v1820 = vunpack.c.h.b16 %v1628
  %v1821 = vunpack.c.l.b16 %v1629
  %v1822 = vunpack.c.h.b16 %v1629
  %v1823 = vunpack.c.l.b16 %v1630
  %v1824 = vunpack.c.h.b16 %v1630
  %v1825 = vunpack.c.l.b16 %v1631
  %v1826 = vunpack.c.h.b16 %v1631
  %v1827 = vunpack.c.l.b16 %v1632
  %v1828 = vunpack.c.h.b16 %v1632
  %v1829 = vunpack.c.l.b16 %v1633
  %v1830 = vunpack.c.h.b16 %v1633
  %v1831 = vunpack.c.l.b16 %v1634
  %v1832 = vunpack.c.h.b16 %v1634
  %v1833 = vpack.c.b16 %v1709, %v1705
  %v1834 = vpack.c.b16 %v1710, %v1706
  %v1835 = vpack.c.b16 %v1711, %v1707
  %v1836 = vpack.c.b16 %v1712, %v1708
  %v1837 = vpack.c.b16 %v1717, %v1713
  %v1838 = vpack.c.b16 %v1718, %v1714
  %v1839 = vpack.c.b16 %v1719, %v1715
  %v1840 = vpack.c.b16 %v1720, %v1716
  %v1841 = vpack.c.b16 %v1725, %v1721
  %v1842 = vpack.c.b16 %v1726, %v1722
  %v1843 = vpack.c.b16 %v1727, %v1723
  %v1844 = vpack.c.b16 %v1728, %v1724
  %v1845 = vpack.c.b16 %v1733, %v1729
  %v1846 = vpack.c.b16 %v1734, %v1730
  %v1847 = vpack.c.b16 %v1735, %v1731
  %v1848 = vpack.c.b16 %v1736, %v1732
  %v1849 = vpack.c.b16 %v1741, %v1737
  %v1850 = vpack.c.b16 %v1742, %v1738
  %v1851 = vpack.c.b16 %v1743, %v1739
  %v1852 = vpack.c.b16 %v1744, %v1740
  %v1853 = vpack.c.b16 %v1749, %v1745
  %v1854 = vpack.c.b16 %v1750, %v1746
  %v1855 = vpack.c.b16 %v1751, %v1747
  %v1856 = vpack.c.b16 %v1752, %v1748
  %v1857 = vpack.c.b16 %v1757, %v1753
  %v1858 = vpack.c.b16 %v1758, %v1754
  %v1859 = vpack.c.b16 %v1759, %v1755
  %v1860 = vpack.c.b16 %v1760, %v1756
  %v1861 = vpack.c.b16 %v1765, %v1761
  %v1862 = vpack.c.b16 %v1766, %v1762
  %v1863 = vpack.c.b16 %v1767, %v1763
  %v1864 = vpack.c.b16 %v1768, %v1764
  %v1865 = vpack.c.b16 %v1773, %v1769
  %v1866 = vpack.c.b16 %v1774, %v1770
  %v1867 = vpack.c.b16 %v1775, %v1771
  %v1868 = vpack.c.b16 %v1776, %v1772
  %v1869 = vpack.c.b16 %v1781, %v1777
  %v1870 = vpack.c.b16 %v1782, %v1778
  %v1871 = vpack.c.b16 %v1783, %v1779
  %v1872 = vpack.c.b16 %v1784, %v1780
  %v1873 = vpack.c.b16 %v1789, %v1785
  %v1874 = vpack.c.b16 %v1790, %v1786
  %v1875 = vpack.c.b16 %v1791, %v1787
  %v1876 = vpack.c.b16 %v1792, %v1788
  %v1877 = vpack.c.b16 %v1797, %v1793
  %v1878 = vpack.c.b16 %v1798, %v1794
  %v1879 = vpack.c.b16 %v1799, %v1795
  %v1880 = vpack.c.b16 %v1800, %v1796
  %v1881 = vpack.c.b16 %v1805, %v1801
  %v1882 = vpack.c.b16 %v1806, %v1802
  %v1883 = vpack.c.b16 %v1807, %v1803
  %v1884 = vpack.c.b16 %v1808, %v1804
  %v1885 = vpack.c.b16 %v1813, %v1809
  %v1886 = vpack.c.b16 %v1814, %v1810
  %v1887 = vpack.c.b16 %v1815, %v1811
  %v1888 = vpack.c.b16 %v1816, %v1812
  %v1889 = vpack.c.b16 %v1821, %v1817
  %v1890 = vpack.c.b16 %v1822, %v1818
  %v1891 = vpack.c.b16 %v1823, %v1819
  %v1892 = vpack.c.b16 %v1824, %v1820
  %v1893 = vpack.c.b16 %v1829, %v1825
  %v1894 = vpack.c.b16 %v1830, %v1826
  %v1895 = vpack.c.b16 %v1831, %v1827
  %v1896 = vpack.c.b16 %v1832, %v1828
  %1961 = vmatprep.subr.bf16.mxu0 %v1834
  %1962 = vmatpush1.bf16.msra.mxu0 %v1833
  %1963 = vmatprep.subr.bf16.mxu0 %v1838
  %1964 = vmatpush1.bf16.msra.mxu0 %v1837
  %1965 = vmatprep.subr.bf16.mxu0 %v1842
  %1966 = vmatpush1.bf16.msra.mxu0 %v1841
  %1967 = vmatprep.subr.bf16.mxu0 %v1846
  %1968 = vmatpush1.bf16.msra.mxu0 %v1845
  %1969 = vmatprep.subr.bf16.mxu0 %v1850
  %1970 = vmatpush1.bf16.msra.mxu0 %v1849
  %1971 = vmatprep.subr.bf16.mxu0 %v1854
  %1972 = vmatpush1.bf16.msra.mxu0 %v1853
  %1973 = vmatprep.subr.bf16.mxu0 %v1858
  %1974 = vmatpush1.bf16.msra.mxu0 %v1857
  %1975 = vmatprep.subr.bf16.mxu0 %v1862
  %1976 = vmatpush1.bf16.msra.mxu0 %v1861
  %1977 = vmatprep.subr.bf16.mxu0 %v1866
  %1978 = vmatpush1.bf16.msra.mxu0 %v1865
  %1979 = vmatprep.subr.bf16.mxu0 %v1870
  %1980 = vmatpush1.bf16.msra.mxu0 %v1869
  %1981 = vmatprep.subr.bf16.mxu0 %v1874
  %1982 = vmatpush1.bf16.msra.mxu0 %v1873
  %1983 = vmatprep.subr.bf16.mxu0 %v1878
  %1984 = vmatpush1.bf16.msra.mxu0 %v1877
  %1985 = vmatprep.subr.bf16.mxu0 %v1882
  %1986 = vmatpush1.bf16.msra.mxu0 %v1881
  %1987 = vmatprep.subr.bf16.mxu0 %v1886
  %1988 = vmatpush1.bf16.msra.mxu0 %v1885
  %1989 = vmatprep.subr.bf16.mxu0 %v1890
  %1990 = vmatpush1.bf16.msra.mxu0 %v1889
  %1991 = vmatprep.subr.bf16.mxu0 %v1894
  %1992 = vmatpush1.bf16.msra.mxu0 %v1893
  %1993 = vmatprep.mubr.bf16.mxu0 %v1638
  %1994 = vmatmul.mubr.bf16.gmra.mrb[0].mxu0 %v1637
  %v1995 = vpop.f32.mrb[0].mxu0
  %v1996 = vadd.f32 0.0, %v1995
  %v1997 = vpop.f32.mrb[0].mxu0
  %v1998 = vadd.f32 0.0, %v1997
  %v1999 = vpop.f32.mrb[0].mxu0
  %v2000 = vpop.f32.mrb[0].mxu0
  %2001 = vdwg.mxu0
  %2002 = vmatprep.subr.bf16.mxu0 %v1836
  %2003 = vmatpush1.bf16.msra.mxu0 %v1835
  %2004 = vmatprep.subr.bf16.mxu0 %v1840
  %2005 = vmatpush1.bf16.msra.mxu0 %v1839
  %2006 = vmatprep.subr.bf16.mxu0 %v1844
  %2007 = vmatpush1.bf16.msra.mxu0 %v1843
  %2008 = vmatprep.subr.bf16.mxu0 %v1848
  %2009 = vmatpush1.bf16.msra.mxu0 %v1847
  %2010 = vmatprep.subr.bf16.mxu0 %v1852
  %2011 = vmatpush1.bf16.msra.mxu0 %v1851
  %2012 = vmatprep.subr.bf16.mxu0 %v1856
  %2013 = vmatpush1.bf16.msra.mxu0 %v1855
  %2014 = vmatprep.subr.bf16.mxu0 %v1860
  %2015 = vmatpush1.bf16.msra.mxu0 %v1859
  %2016 = vmatprep.subr.bf16.mxu0 %v1864
  %2017 = vmatpush1.bf16.msra.mxu0 %v1863
  %2018 = vmatprep.subr.bf16.mxu0 %v1868
  %2019 = vmatpush1.bf16.msra.mxu0 %v1867
  %2020 = vmatprep.subr.bf16.mxu0 %v1872
  %2021 = vmatpush1.bf16.msra.mxu0 %v1871
  %2022 = vmatprep.subr.bf16.mxu0 %v1876
  %2023 = vmatpush1.bf16.msra.mxu0 %v1875
  %2024 = vmatprep.subr.bf16.mxu0 %v1880
  %2025 = vmatpush1.bf16.msra.mxu0 %v1879
  %2026 = vmatprep.subr.bf16.mxu0 %v1884
  %2027 = vmatpush1.bf16.msra.mxu0 %v1883
  %2028 = vmatprep.subr.bf16.mxu0 %v1888
  %2029 = vmatpush1.bf16.msra.mxu0 %v1887
  %2030 = vmatprep.subr.bf16.mxu0 %v1892
  %2031 = vmatpush1.bf16.msra.mxu0 %v1891
  %2032 = vmatprep.subr.bf16.mxu0 %v1896
  %2033 = vmatpush1.bf16.msra.mxu0 %v1895
  %2034 = vmatprep.mubr.bf16.mxu0 %v1638
  %2035 = vmatmul.mubr.bf16.gmra.mrb[0].mxu0 %v1637
  %v2036 = vpop.f32.mrb[0].mxu0
  %v2037 = vadd.f32 0.0, %v2036
  %v2038 = vpop.f32.mrb[0].mxu0
  %v2039 = vadd.f32 0.0, %v2038
  %v2040 = vpop.f32.mrb[0].mxu0
  %v2041 = vpop.f32.mrb[0].mxu0
  %2042 = vdwg.mxu0
  %v2107 = vunpack.c.l.b16 %v1507
  %v2108 = vunpack.c.h.b16 %v1507
  %v2109 = vunpack.c.l.b16 %v1508
  %v2110 = vunpack.c.h.b16 %v1508
  %v2111 = vunpack.c.l.b16 %v1509
  %v2112 = vunpack.c.h.b16 %v1509
  %v2113 = vunpack.c.l.b16 %v1510
  %v2114 = vunpack.c.h.b16 %v1510
  %v2115 = vunpack.c.l.b16 %v1511
  %v2116 = vunpack.c.h.b16 %v1511
  %v2117 = vunpack.c.l.b16 %v1512
  %v2118 = vunpack.c.h.b16 %v1512
  %v2119 = vunpack.c.l.b16 %v1513
  %v2120 = vunpack.c.h.b16 %v1513
  %v2121 = vunpack.c.l.b16 %v1514
  %v2122 = vunpack.c.h.b16 %v1514
  %v2123 = vunpack.c.l.b16 %v1515
  %v2124 = vunpack.c.h.b16 %v1515
  %v2125 = vunpack.c.l.b16 %v1516
  %v2126 = vunpack.c.h.b16 %v1516
  %v2127 = vunpack.c.l.b16 %v1517
  %v2128 = vunpack.c.h.b16 %v1517
  %v2129 = vunpack.c.l.b16 %v1518
  %v2130 = vunpack.c.h.b16 %v1518
  %v2131 = vunpack.c.l.b16 %v1519
  %v2132 = vunpack.c.h.b16 %v1519
  %v2133 = vunpack.c.l.b16 %v1520
  %v2134 = vunpack.c.h.b16 %v1520
  %v2135 = vunpack.c.l.b16 %v1521
  %v2136 = vunpack.c.h.b16 %v1521
  %v2137 = vunpack.c.l.b16 %v1522
  %v2138 = vunpack.c.h.b16 %v1522
  %v2139 = vunpack.c.l.b16 %v1523
  %v2140 = vunpack.c.h.b16 %v1523
  %v2141 = vunpack.c.l.b16 %v1524
  %v2142 = vunpack.c.h.b16 %v1524
  %v2143 = vunpack.c.l.b16 %v1525
  %v2144 = vunpack.c.h.b16 %v1525
  %v2145 = vunpack.c.l.b16 %v1526
  %v2146 = vunpack.c.h.b16 %v1526
  %v2147 = vunpack.c.l.b16 %v1527
  %v2148 = vunpack.c.h.b16 %v1527
  %v2149 = vunpack.c.l.b16 %v1528
  %v2150 = vunpack.c.h.b16 %v1528
  %v2151 = vunpack.c.l.b16 %v1529
  %v2152 = vunpack.c.h.b16 %v1529
  %v2153 = vunpack.c.l.b16 %v1530
  %v2154 = vunpack.c.h.b16 %v1530
  %v2155 = vunpack.c.l.b16 %v1531
  %v2156 = vunpack.c.h.b16 %v1531
  %v2157 = vunpack.c.l.b16 %v1532
  %v2158 = vunpack.c.h.b16 %v1532
  %v2159 = vunpack.c.l.b16 %v1533
  %v2160 = vunpack.c.h.b16 %v1533
  %v2161 = vunpack.c.l.b16 %v1534
  %v2162 = vunpack.c.h.b16 %v1534
  %v2163 = vunpack.c.l.b16 %v1535
  %v2164 = vunpack.c.h.b16 %v1535
  %v2165 = vunpack.c.l.b16 %v1536
  %v2166 = vunpack.c.h.b16 %v1536
  %v2167 = vunpack.c.l.b16 %v1537
  %v2168 = vunpack.c.h.b16 %v1537
  %v2169 = vunpack.c.l.b16 %v1538
  %v2170 = vunpack.c.h.b16 %v1538
  %v2171 = vunpack.c.l.b16 %v1539
  %v2172 = vunpack.c.h.b16 %v1539
  %v2173 = vunpack.c.l.b16 %v1540
  %v2174 = vunpack.c.h.b16 %v1540
  %v2175 = vunpack.c.l.b16 %v1541
  %v2176 = vunpack.c.h.b16 %v1541
  %v2177 = vunpack.c.l.b16 %v1542
  %v2178 = vunpack.c.h.b16 %v1542
  %v2179 = vunpack.c.l.b16 %v1543
  %v2180 = vunpack.c.h.b16 %v1543
  %v2181 = vunpack.c.l.b16 %v1544
  %v2182 = vunpack.c.h.b16 %v1544
  %v2183 = vunpack.c.l.b16 %v1545
  %v2184 = vunpack.c.h.b16 %v1545
  %v2185 = vunpack.c.l.b16 %v1546
  %v2186 = vunpack.c.h.b16 %v1546
  %v2187 = vunpack.c.l.b16 %v1547
  %v2188 = vunpack.c.h.b16 %v1547
  %v2189 = vunpack.c.l.b16 %v1548
  %v2190 = vunpack.c.h.b16 %v1548
  %v2191 = vunpack.c.l.b16 %v1549
  %v2192 = vunpack.c.h.b16 %v1549
  %v2193 = vunpack.c.l.b16 %v1550
  %v2194 = vunpack.c.h.b16 %v1550
  %v2195 = vunpack.c.l.b16 %v1551
  %v2196 = vunpack.c.h.b16 %v1551
  %v2197 = vunpack.c.l.b16 %v1552
  %v2198 = vunpack.c.h.b16 %v1552
  %v2199 = vunpack.c.l.b16 %v1553
  %v2200 = vunpack.c.h.b16 %v1553
  %v2201 = vunpack.c.l.b16 %v1554
  %v2202 = vunpack.c.h.b16 %v1554
  %v2203 = vunpack.c.l.b16 %v1555
  %v2204 = vunpack.c.h.b16 %v1555
  %v2205 = vunpack.c.l.b16 %v1556
  %v2206 = vunpack.c.h.b16 %v1556
  %v2207 = vunpack.c.l.b16 %v1557
  %v2208 = vunpack.c.h.b16 %v1557
  %v2209 = vunpack.c.l.b16 %v1558
  %v2210 = vunpack.c.h.b16 %v1558
  %v2211 = vunpack.c.l.b16 %v1559
  %v2212 = vunpack.c.h.b16 %v1559
  %v2213 = vunpack.c.l.b16 %v1560
  %v2214 = vunpack.c.h.b16 %v1560
  %v2215 = vunpack.c.l.b16 %v1561
  %v2216 = vunpack.c.h.b16 %v1561
  %v2217 = vunpack.c.l.b16 %v1562
  %v2218 = vunpack.c.h.b16 %v1562
  %v2219 = vunpack.c.l.b16 %v1563
  %v2220 = vunpack.c.h.b16 %v1563
  %v2221 = vunpack.c.l.b16 %v1564
  %v2222 = vunpack.c.h.b16 %v1564
  %v2223 = vunpack.c.l.b16 %v1565
  %v2224 = vunpack.c.h.b16 %v1565
  %v2225 = vunpack.c.l.b16 %v1566
  %v2226 = vunpack.c.h.b16 %v1566
  %v2227 = vunpack.c.l.b16 %v1567
  %v2228 = vunpack.c.h.b16 %v1567
  %v2229 = vunpack.c.l.b16 %v1568
  %v2230 = vunpack.c.h.b16 %v1568
  %v2231 = vunpack.c.l.b16 %v1569
  %v2232 = vunpack.c.h.b16 %v1569
  %v2233 = vunpack.c.l.b16 %v1570
  %v2234 = vunpack.c.h.b16 %v1570
  %v2235 = vpack.c.b16 %v2111, %v2107
  %v2236 = vpack.c.b16 %v2112, %v2108
  %v2237 = vpack.c.b16 %v2113, %v2109
  %v2238 = vpack.c.b16 %v2114, %v2110
  %v2239 = vpack.c.b16 %v2119, %v2115
  %v2240 = vpack.c.b16 %v2120, %v2116
  %v2241 = vpack.c.b16 %v2121, %v2117
  %v2242 = vpack.c.b16 %v2122, %v2118
  %v2243 = vpack.c.b16 %v2127, %v2123
  %v2244 = vpack.c.b16 %v2128, %v2124
  %v2245 = vpack.c.b16 %v2129, %v2125
  %v2246 = vpack.c.b16 %v2130, %v2126
  %v2247 = vpack.c.b16 %v2135, %v2131
  %v2248 = vpack.c.b16 %v2136, %v2132
  %v2249 = vpack.c.b16 %v2137, %v2133
  %v2250 = vpack.c.b16 %v2138, %v2134
  %v2251 = vpack.c.b16 %v2143, %v2139
  %v2252 = vpack.c.b16 %v2144, %v2140
  %v2253 = vpack.c.b16 %v2145, %v2141
  %v2254 = vpack.c.b16 %v2146, %v2142
  %v2255 = vpack.c.b16 %v2151, %v2147
  %v2256 = vpack.c.b16 %v2152, %v2148
  %v2257 = vpack.c.b16 %v2153, %v2149
  %v2258 = vpack.c.b16 %v2154, %v2150
  %v2259 = vpack.c.b16 %v2159, %v2155
  %v2260 = vpack.c.b16 %v2160, %v2156
  %v2261 = vpack.c.b16 %v2161, %v2157
  %v2262 = vpack.c.b16 %v2162, %v2158
  %v2263 = vpack.c.b16 %v2167, %v2163
  %v2264 = vpack.c.b16 %v2168, %v2164
  %v2265 = vpack.c.b16 %v2169, %v2165
  %v2266 = vpack.c.b16 %v2170, %v2166
  %v2267 = vpack.c.b16 %v2175, %v2171
  %v2268 = vpack.c.b16 %v2176, %v2172
  %v2269 = vpack.c.b16 %v2177, %v2173
  %v2270 = vpack.c.b16 %v2178, %v2174
  %v2271 = vpack.c.b16 %v2183, %v2179
  %v2272 = vpack.c.b16 %v2184, %v2180
  %v2273 = vpack.c.b16 %v2185, %v2181
  %v2274 = vpack.c.b16 %v2186, %v2182
  %v2275 = vpack.c.b16 %v2191, %v2187
  %v2276 = vpack.c.b16 %v2192, %v2188
  %v2277 = vpack.c.b16 %v2193, %v2189
  %v2278 = vpack.c.b16 %v2194, %v2190
  %v2279 = vpack.c.b16 %v2199, %v2195
  %v2280 = vpack.c.b16 %v2200, %v2196
  %v2281 = vpack.c.b16 %v2201, %v2197
  %v2282 = vpack.c.b16 %v2202, %v2198
  %v2283 = vpack.c.b16 %v2207, %v2203
  %v2284 = vpack.c.b16 %v2208, %v2204
  %v2285 = vpack.c.b16 %v2209, %v2205
  %v2286 = vpack.c.b16 %v2210, %v2206
  %v2287 = vpack.c.b16 %v2215, %v2211
  %v2288 = vpack.c.b16 %v2216, %v2212
  %v2289 = vpack.c.b16 %v2217, %v2213
  %v2290 = vpack.c.b16 %v2218, %v2214
  %v2291 = vpack.c.b16 %v2223, %v2219
  %v2292 = vpack.c.b16 %v2224, %v2220
  %v2293 = vpack.c.b16 %v2225, %v2221
  %v2294 = vpack.c.b16 %v2226, %v2222
  %v2295 = vpack.c.b16 %v2231, %v2227
  %v2296 = vpack.c.b16 %v2232, %v2228
  %v2297 = vpack.c.b16 %v2233, %v2229
  %v2298 = vpack.c.b16 %v2234, %v2230
  %2363 = vmatprep.subr.bf16.mxu0 %v2236
  %2364 = vmatpush1.bf16.msra.mxu0 %v2235
  %2365 = vmatprep.subr.bf16.mxu0 %v2240
  %2366 = vmatpush1.bf16.msra.mxu0 %v2239
  %2367 = vmatprep.subr.bf16.mxu0 %v2244
  %2368 = vmatpush1.bf16.msra.mxu0 %v2243
  %2369 = vmatprep.subr.bf16.mxu0 %v2248
  %2370 = vmatpush1.bf16.msra.mxu0 %v2247
  %2371 = vmatprep.subr.bf16.mxu0 %v2252
  %2372 = vmatpush1.bf16.msra.mxu0 %v2251
  %2373 = vmatprep.subr.bf16.mxu0 %v2256
  %2374 = vmatpush1.bf16.msra.mxu0 %v2255
  %2375 = vmatprep.subr.bf16.mxu0 %v2260
  %2376 = vmatpush1.bf16.msra.mxu0 %v2259
  %2377 = vmatprep.subr.bf16.mxu0 %v2264
  %2378 = vmatpush1.bf16.msra.mxu0 %v2263
  %2379 = vmatprep.subr.bf16.mxu0 %v2268
  %2380 = vmatpush1.bf16.msra.mxu0 %v2267
  %2381 = vmatprep.subr.bf16.mxu0 %v2272
  %2382 = vmatpush1.bf16.msra.mxu0 %v2271
  %2383 = vmatprep.subr.bf16.mxu0 %v2276
  %2384 = vmatpush1.bf16.msra.mxu0 %v2275
  %2385 = vmatprep.subr.bf16.mxu0 %v2280
  %2386 = vmatpush1.bf16.msra.mxu0 %v2279
  %2387 = vmatprep.subr.bf16.mxu0 %v2284
  %2388 = vmatpush1.bf16.msra.mxu0 %v2283
  %2389 = vmatprep.subr.bf16.mxu0 %v2288
  %2390 = vmatpush1.bf16.msra.mxu0 %v2287
  %2391 = vmatprep.subr.bf16.mxu0 %v2292
  %2392 = vmatpush1.bf16.msra.mxu0 %v2291
  %2393 = vmatprep.subr.bf16.mxu0 %v2296
  %2394 = vmatpush1.bf16.msra.mxu0 %v2295
  %2395 = vmatprep.mubr.bf16.mxu0 %v1504
  %2396 = vmatmul.mubr.bf16.gmra.mrb[0].mxu0 %v1503
  %v2397 = vpop.f32.mrb[0].mxu0
  %v2398 = vadd.f32 %v1996, %v2397
  %v2399 = vpop.f32.mrb[0].mxu0
  %v2400 = vadd.f32 %v1998, %v2399
  %v2401 = vpop.f32.mrb[0].mxu0
  %v2402 = vpop.f32.mrb[0].mxu0
  %2403 = vdwg.mxu0
  %2404 = vmatprep.subr.bf16.mxu0 %v2238
  %2405 = vmatpush1.bf16.msra.mxu0 %v2237
  %2406 = vmatprep.subr.bf16.mxu0 %v2242
  %2407 = vmatpush1.bf16.msra.mxu0 %v2241
  %2408 = vmatprep.subr.bf16.mxu0 %v2246
  %2409 = vmatpush1.bf16.msra.mxu0 %v2245
  %2410 = vmatprep.subr.bf16.mxu0 %v2250
  %2411 = vmatpush1.bf16.msra.mxu0 %v2249
  %2412 = vmatprep.subr.bf16.mxu0 %v2254
  %2413 = vmatpush1.bf16.msra.mxu0 %v2253
  %2414 = vmatprep.subr.bf16.mxu0 %v2258
  %2415 = vmatpush1.bf16.msra.mxu0 %v2257
  %2416 = vmatprep.subr.bf16.mxu0 %v2262
  %2417 = vmatpush1.bf16.msra.mxu0 %v2261
  %2418 = vmatprep.subr.bf16.mxu0 %v2266
  %2419 = vmatpush1.bf16.msra.mxu0 %v2265
  %2420 = vmatprep.subr.bf16.mxu0 %v2270
  %2421 = vmatpush1.bf16.msra.mxu0 %v2269
  %2422 = vmatprep.subr.bf16.mxu0 %v2274
  %2423 = vmatpush1.bf16.msra.mxu0 %v2273
  %2424 = vmatprep.subr.bf16.mxu0 %v2278
  %2425 = vmatpush1.bf16.msra.mxu0 %v2277
  %2426 = vmatprep.subr.bf16.mxu0 %v2282
  %2427 = vmatpush1.bf16.msra.mxu0 %v2281
  %2428 = vmatprep.subr.bf16.mxu0 %v2286
  %2429 = vmatpush1.bf16.msra.mxu0 %v2285
  %2430 = vmatprep.subr.bf16.mxu0 %v2290
  %2431 = vmatpush1.bf16.msra.mxu0 %v2289
  %2432 = vmatprep.subr.bf16.mxu0 %v2294
  %2433 = vmatpush1.bf16.msra.mxu0 %v2293
  %2434 = vmatprep.subr.bf16.mxu0 %v2298
  %2435 = vmatpush1.bf16.msra.mxu0 %v2297
  %2436 = vmatprep.mubr.bf16.mxu0 %v1504
  %2437 = vmatmul.mubr.bf16.gmra.mrb[0].mxu0 %v1503
  %v2438 = vpop.f32.mrb[0].mxu0
  %v2439 = vadd.f32 %v2037, %v2438
  %v2440 = vpop.f32.mrb[0].mxu0
  %v2441 = vadd.f32 %v2039, %v2440
  %v2442 = vpop.f32.mrb[0].mxu0
  %v2443 = vpop.f32.mrb[0].mxu0
  %2444 = vdwg.mxu0
  %v2445 = vld [vmem:[%s8 + $0x400] sm:$0xff]
  %v2446 = vld [vmem:[%s8 + $0x408] sm:$0xff]
  %v2447 = vld [vmem:[%s8 + $0x410] sm:$0xff]
  %v2448 = vld [vmem:[%s8 + $0x418] sm:$0xff]
  %v2449 = vld [vmem:[%s8 + $0x420] sm:$0xff]
  %v2450 = vld [vmem:[%s8 + $0x428] sm:$0xff]
  %v2451 = vld [vmem:[%s8 + $0x430] sm:$0xff]
  %v2452 = vld [vmem:[%s8 + $0x438] sm:$0xff]
  %v2453 = vld [vmem:[%s8 + $0x440] sm:$0xff]
  %v2454 = vld [vmem:[%s8 + $0x448] sm:$0xff]
  %v2455 = vld [vmem:[%s8 + $0x450] sm:$0xff]
  %v2456 = vld [vmem:[%s8 + $0x458] sm:$0xff]
  %v2457 = vld [vmem:[%s8 + $0x460] sm:$0xff]
  %v2458 = vld [vmem:[%s8 + $0x468] sm:$0xff]
  %v2459 = vld [vmem:[%s8 + $0x470] sm:$0xff]
  %v2460 = vld [vmem:[%s8 + $0x478] sm:$0xff]
  %v2461 = vld [vmem:[%s8 + $0x480] sm:$0xff]
  %v2462 = vld [vmem:[%s8 + $0x488] sm:$0xff]
  %v2463 = vld [vmem:[%s8 + $0x490] sm:$0xff]
  %v2464 = vld [vmem:[%s8 + $0x498] sm:$0xff]
  %v2465 = vld [vmem:[%s8 + $0x4a0] sm:$0xff]
  %v2466 = vld [vmem:[%s8 + $0x4a8] sm:$0xff]
  %v2467 = vld [vmem:[%s8 + $0x4b0] sm:$0xff]
  %v2468 = vld [vmem:[%s8 + $0x4b8] sm:$0xff]
  %v2469 = vld [vmem:[%s8 + $0x4c0] sm:$0xff]
  %v2470 = vld [vmem:[%s8 + $0x4c8] sm:$0xff]
  %v2471 = vld [vmem:[%s8 + $0x4d0] sm:$0xff]
  %v2472 = vld [vmem:[%s8 + $0x4d8] sm:$0xff]
  %v2473 = vld [vmem:[%s8 + $0x4e0] sm:$0xff]
  %v2474 = vld [vmem:[%s8 + $0x4e8] sm:$0xff]
  %v2475 = vld [vmem:[%s8 + $0x4f0] sm:$0xff]
  %v2476 = vld [vmem:[%s8 + $0x4f8] sm:$0xff]
  %v2477 = vld [vmem:[%s8 + $0x500] sm:$0xff]
  %v2478 = vld [vmem:[%s8 + $0x508] sm:$0xff]
  %v2479 = vld [vmem:[%s8 + $0x510] sm:$0xff]
  %v2480 = vld [vmem:[%s8 + $0x518] sm:$0xff]
  %v2481 = vld [vmem:[%s8 + $0x520] sm:$0xff]
  %v2482 = vld [vmem:[%s8 + $0x528] sm:$0xff]
  %v2483 = vld [vmem:[%s8 + $0x530] sm:$0xff]
  %v2484 = vld [vmem:[%s8 + $0x538] sm:$0xff]
  %v2485 = vld [vmem:[%s8 + $0x540] sm:$0xff]
  %v2486 = vld [vmem:[%s8 + $0x548] sm:$0xff]
  %v2487 = vld [vmem:[%s8 + $0x550] sm:$0xff]
  %v2488 = vld [vmem:[%s8 + $0x558] sm:$0xff]
  %v2489 = vld [vmem:[%s8 + $0x560] sm:$0xff]
  %v2490 = vld [vmem:[%s8 + $0x568] sm:$0xff]
  %v2491 = vld [vmem:[%s8 + $0x570] sm:$0xff]
  %v2492 = vld [vmem:[%s8 + $0x578] sm:$0xff]
  %v2493 = vld [vmem:[%s8 + $0x580] sm:$0xff]
  %v2494 = vld [vmem:[%s8 + $0x588] sm:$0xff]
  %v2495 = vld [vmem:[%s8 + $0x590] sm:$0xff]
  %v2496 = vld [vmem:[%s8 + $0x598] sm:$0xff]
  %v2497 = vld [vmem:[%s8 + $0x5a0] sm:$0xff]
  %v2498 = vld [vmem:[%s8 + $0x5a8] sm:$0xff]
  %v2499 = vld [vmem:[%s8 + $0x5b0] sm:$0xff]
  %v2500 = vld [vmem:[%s8 + $0x5b8] sm:$0xff]
  %v2501 = vld [vmem:[%s8 + $0x5c0] sm:$0xff]
  %v2502 = vld [vmem:[%s8 + $0x5c8] sm:$0xff]
  %v2503 = vld [vmem:[%s8 + $0x5d0] sm:$0xff]
  %v2504 = vld [vmem:[%s8 + $0x5d8] sm:$0xff]
  %v2505 = vld [vmem:[%s8 + $0x5e0] sm:$0xff]
  %v2506 = vld [vmem:[%s8 + $0x5e8] sm:$0xff]
  %v2507 = vld [vmem:[%s8 + $0x5f0] sm:$0xff]
  %v2508 = vld [vmem:[%s8 + $0x5f8] sm:$0xff]
  %v2573 = vunpack.c.l.b16 %v2445
  %v2574 = vunpack.c.h.b16 %v2445
  %v2575 = vunpack.c.l.b16 %v2446
  %v2576 = vunpack.c.h.b16 %v2446
  %v2577 = vunpack.c.l.b16 %v2447
  %v2578 = vunpack.c.h.b16 %v2447
  %v2579 = vunpack.c.l.b16 %v2448
  %v2580 = vunpack.c.h.b16 %v2448
  %v2581 = vunpack.c.l.b16 %v2449
  %v2582 = vunpack.c.h.b16 %v2449
  %v2583 = vunpack.c.l.b16 %v2450
  %v2584 = vunpack.c.h.b16 %v2450
  %v2585 = vunpack.c.l.b16 %v2451
  %v2586 = vunpack.c.h.b16 %v2451
  %v2587 = vunpack.c.l.b16 %v2452
  %v2588 = vunpack.c.h.b16 %v2452
  %v2589 = vunpack.c.l.b16 %v2453
  %v2590 = vunpack.c.h.b16 %v2453
  %v2591 = vunpack.c.l.b16 %v2454
  %v2592 = vunpack.c.h.b16 %v2454
  %v2593 = vunpack.c.l.b16 %v2455
  %v2594 = vunpack.c.h.b16 %v2455
  %v2595 = vunpack.c.l.b16 %v2456
  %v2596 = vunpack.c.h.b16 %v2456
  %v2597 = vunpack.c.l.b16 %v2457
  %v2598 = vunpack.c.h.b16 %v2457
  %v2599 = vunpack.c.l.b16 %v2458
  %v2600 = vunpack.c.h.b16 %v2458
  %v2601 = vunpack.c.l.b16 %v2459
  %v2602 = vunpack.c.h.b16 %v2459
  %v2603 = vunpack.c.l.b16 %v2460
  %v2604 = vunpack.c.h.b16 %v2460
  %v2605 = vunpack.c.l.b16 %v2461
  %v2606 = vunpack.c.h.b16 %v2461
  %v2607 = vunpack.c.l.b16 %v2462
  %v2608 = vunpack.c.h.b16 %v2462
  %v2609 = vunpack.c.l.b16 %v2463
  %v2610 = vunpack.c.h.b16 %v2463
  %v2611 = vunpack.c.l.b16 %v2464
  %v2612 = vunpack.c.h.b16 %v2464
  %v2613 = vunpack.c.l.b16 %v2465
  %v2614 = vunpack.c.h.b16 %v2465
  %v2615 = vunpack.c.l.b16 %v2466
  %v2616 = vunpack.c.h.b16 %v2466
  %v2617 = vunpack.c.l.b16 %v2467
  %v2618 = vunpack.c.h.b16 %v2467
  %v2619 = vunpack.c.l.b16 %v2468
  %v2620 = vunpack.c.h.b16 %v2468
  %v2621 = vunpack.c.l.b16 %v2469
  %v2622 = vunpack.c.h.b16 %v2469
  %v2623 = vunpack.c.l.b16 %v2470
  %v2624 = vunpack.c.h.b16 %v2470
  %v2625 = vunpack.c.l.b16 %v2471
  %v2626 = vunpack.c.h.b16 %v2471
  %v2627 = vunpack.c.l.b16 %v2472
  %v2628 = vunpack.c.h.b16 %v2472
  %v2629 = vunpack.c.l.b16 %v2473
  %v2630 = vunpack.c.h.b16 %v2473
  %v2631 = vunpack.c.l.b16 %v2474
  %v2632 = vunpack.c.h.b16 %v2474
  %v2633 = vunpack.c.l.b16 %v2475
  %v2634 = vunpack.c.h.b16 %v2475
  %v2635 = vunpack.c.l.b16 %v2476
  %v2636 = vunpack.c.h.b16 %v2476
  %v2637 = vunpack.c.l.b16 %v2477
  %v2638 = vunpack.c.h.b16 %v2477
  %v2639 = vunpack.c.l.b16 %v2478
  %v2640 = vunpack.c.h.b16 %v2478
  %v2641 = vunpack.c.l.b16 %v2479
  %v2642 = vunpack.c.h.b16 %v2479
  %v2643 = vunpack.c.l.b16 %v2480
  %v2644 = vunpack.c.h.b16 %v2480
  %v2645 = vunpack.c.l.b16 %v2481
  %v2646 = vunpack.c.h.b16 %v2481
  %v2647 = vunpack.c.l.b16 %v2482
  %v2648 = vunpack.c.h.b16 %v2482
  %v2649 = vunpack.c.l.b16 %v2483
  %v2650 = vunpack.c.h.b16 %v2483
  %v2651 = vunpack.c.l.b16 %v2484
  %v2652 = vunpack.c.h.b16 %v2484
  %v2653 = vunpack.c.l.b16 %v2485
  %v2654 = vunpack.c.h.b16 %v2485
  %v2655 = vunpack.c.l.b16 %v2486
  %v2656 = vunpack.c.h.b16 %v2486
  %v2657 = vunpack.c.l.b16 %v2487
  %v2658 = vunpack.c.h.b16 %v2487
  %v2659 = vunpack.c.l.b16 %v2488
  %v2660 = vunpack.c.h.b16 %v2488
  %v2661 = vunpack.c.l.b16 %v2489
  %v2662 = vunpack.c.h.b16 %v2489
  %v2663 = vunpack.c.l.b16 %v2490
  %v2664 = vunpack.c.h.b16 %v2490
  %v2665 = vunpack.c.l.b16 %v2491
  %v2666 = vunpack.c.h.b16 %v2491
  %v2667 = vunpack.c.l.b16 %v2492
  %v2668 = vunpack.c.h.b16 %v2492
  %v2669 = vunpack.c.l.b16 %v2493
  %v2670 = vunpack.c.h.b16 %v2493
  %v2671 = vunpack.c.l.b16 %v2494
  %v2672 = vunpack.c.h.b16 %v2494
  %v2673 = vunpack.c.l.b16 %v2495
  %v2674 = vunpack.c.h.b16 %v2495
  %v2675 = vunpack.c.l.b16 %v2496
  %v2676 = vunpack.c.h.b16 %v2496
  %v2677 = vunpack.c.l.b16 %v2497
  %v2678 = vunpack.c.h.b16 %v2497
  %v2679 = vunpack.c.l.b16 %v2498
  %v2680 = vunpack.c.h.b16 %v2498
  %v2681 = vunpack.c.l.b16 %v2499
  %v2682 = vunpack.c.h.b16 %v2499
  %v2683 = vunpack.c.l.b16 %v2500
  %v2684 = vunpack.c.h.b16 %v2500
  %v2685 = vunpack.c.l.b16 %v2501
  %v2686 = vunpack.c.h.b16 %v2501
  %v2687 = vunpack.c.l.b16 %v2502
  %v2688 = vunpack.c.h.b16 %v2502
  %v2689 = vunpack.c.l.b16 %v2503
  %v2690 = vunpack.c.h.b16 %v2503
  %v2691 = vunpack.c.l.b16 %v2504
  %v2692 = vunpack.c.h.b16 %v2504
  %v2693 = vunpack.c.l.b16 %v2505
  %v2694 = vunpack.c.h.b16 %v2505
  %v2695 = vunpack.c.l.b16 %v2506
  %v2696 = vunpack.c.h.b16 %v2506
  %v2697 = vunpack.c.l.b16 %v2507
  %v2698 = vunpack.c.h.b16 %v2507
  %v2699 = vunpack.c.l.b16 %v2508
  %v2700 = vunpack.c.h.b16 %v2508
  %v2701 = vpack.c.b16 %v2577, %v2573
  %v2702 = vpack.c.b16 %v2578, %v2574
  %v2703 = vpack.c.b16 %v2579, %v2575
  %v2704 = vpack.c.b16 %v2580, %v2576
  %v2705 = vpack.c.b16 %v2585, %v2581
  %v2706 = vpack.c.b16 %v2586, %v2582
  %v2707 = vpack.c.b16 %v2587, %v2583
  %v2708 = vpack.c.b16 %v2588, %v2584
  %v2709 = vpack.c.b16 %v2593, %v2589
  %v2710 = vpack.c.b16 %v2594, %v2590
  %v2711 = vpack.c.b16 %v2595, %v2591
  %v2712 = vpack.c.b16 %v2596, %v2592
  %v2713 = vpack.c.b16 %v2601, %v2597
  %v2714 = vpack.c.b16 %v2602, %v2598
  %v2715 = vpack.c.b16 %v2603, %v2599
  %v2716 = vpack.c.b16 %v2604, %v2600
  %v2717 = vpack.c.b16 %v2609, %v2605
  %v2718 = vpack.c.b16 %v2610, %v2606
  %v2719 = vpack.c.b16 %v2611, %v2607
  %v2720 = vpack.c.b16 %v2612, %v2608
  %v2721 = vpack.c.b16 %v2617, %v2613
  %v2722 = vpack.c.b16 %v2618, %v2614
  %v2723 = vpack.c.b16 %v2619, %v2615
  %v2724 = vpack.c.b16 %v2620, %v2616
  %v2725 = vpack.c.b16 %v2625, %v2621
  %v2726 = vpack.c.b16 %v2626, %v2622
  %v2727 = vpack.c.b16 %v2627, %v2623
  %v2728 = vpack.c.b16 %v2628, %v2624
  %v2729 = vpack.c.b16 %v2633, %v2629
  %v2730 = vpack.c.b16 %v2634, %v2630
  %v2731 = vpack.c.b16 %v2635, %v2631
  %v2732 = vpack.c.b16 %v2636, %v2632
  %v2733 = vpack.c.b16 %v2641, %v2637
  %v2734 = vpack.c.b16 %v2642, %v2638
  %v2735 = vpack.c.b16 %v2643, %v2639
  %v2736 = vpack.c.b16 %v2644, %v2640
  %v2737 = vpack.c.b16 %v2649, %v2645
  %v2738 = vpack.c.b16 %v2650, %v2646
  %v2739 = vpack.c.b16 %v2651, %v2647
  %v2740 = vpack.c.b16 %v2652, %v2648
  %v2741 = vpack.c.b16 %v2657, %v2653
  %v2742 = vpack.c.b16 %v2658, %v2654
  %v2743 = vpack.c.b16 %v2659, %v2655
  %v2744 = vpack.c.b16 %v2660, %v2656
  %v2745 = vpack.c.b16 %v2665, %v2661
  %v2746 = vpack.c.b16 %v2666, %v2662
  %v2747 = vpack.c.b16 %v2667, %v2663
  %v2748 = vpack.c.b16 %v2668, %v2664
  %v2749 = vpack.c.b16 %v2673, %v2669
  %v2750 = vpack.c.b16 %v2674, %v2670
  %v2751 = vpack.c.b16 %v2675, %v2671
  %v2752 = vpack.c.b16 %v2676, %v2672
  %v2753 = vpack.c.b16 %v2681, %v2677
  %v2754 = vpack.c.b16 %v2682, %v2678
  %v2755 = vpack.c.b16 %v2683, %v2679
  %v2756 = vpack.c.b16 %v2684, %v2680
  %v2757 = vpack.c.b16 %v2689, %v2685
  %v2758 = vpack.c.b16 %v2690, %v2686
  %v2759 = vpack.c.b16 %v2691, %v2687
  %v2760 = vpack.c.b16 %v2692, %v2688
  %v2761 = vpack.c.b16 %v2697, %v2693
  %v2762 = vpack.c.b16 %v2698, %v2694
  %v2763 = vpack.c.b16 %v2699, %v2695
  %v2764 = vpack.c.b16 %v2700, %v2696
  %2829 = vmatprep.subr.bf16.mxu0 %v2702
  %2830 = vmatpush1.bf16.msra.mxu0 %v2701
  %2831 = vmatprep.subr.bf16.mxu0 %v2706
  %2832 = vmatpush1.bf16.msra.mxu0 %v2705
  %2833 = vmatprep.subr.bf16.mxu0 %v2710
  %2834 = vmatpush1.bf16.msra.mxu0 %v2709
  %2835 = vmatprep.subr.bf16.mxu0 %v2714
  %2836 = vmatpush1.bf16.msra.mxu0 %v2713
  %2837 = vmatprep.subr.bf16.mxu0 %v2718
  %2838 = vmatpush1.bf16.msra.mxu0 %v2717
  %2839 = vmatprep.subr.bf16.mxu0 %v2722
  %2840 = vmatpush1.bf16.msra.mxu0 %v2721
  %2841 = vmatprep.subr.bf16.mxu0 %v2726
  %2842 = vmatpush1.bf16.msra.mxu0 %v2725
  %2843 = vmatprep.subr.bf16.mxu0 %v2730
  %2844 = vmatpush1.bf16.msra.mxu0 %v2729
  %2845 = vmatprep.subr.bf16.mxu0 %v2734
  %2846 = vmatpush1.bf16.msra.mxu0 %v2733
  %2847 = vmatprep.subr.bf16.mxu0 %v2738
  %2848 = vmatpush1.bf16.msra.mxu0 %v2737
  %2849 = vmatprep.subr.bf16.mxu0 %v2742
  %2850 = vmatpush1.bf16.msra.mxu0 %v2741
  %2851 = vmatprep.subr.bf16.mxu0 %v2746
  %2852 = vmatpush1.bf16.msra.mxu0 %v2745
  %2853 = vmatprep.subr.bf16.mxu0 %v2750
  %2854 = vmatpush1.bf16.msra.mxu0 %v2749
  %2855 = vmatprep.subr.bf16.mxu0 %v2754
  %2856 = vmatpush1.bf16.msra.mxu0 %v2753
  %2857 = vmatprep.subr.bf16.mxu0 %v2758
  %2858 = vmatpush1.bf16.msra.mxu0 %v2757
  %2859 = vmatprep.subr.bf16.mxu0 %v2762
  %2860 = vmatpush1.bf16.msra.mxu0 %v2761
  %2861 = vmatprep.mubr.bf16.mxu0 %v1506
  %2862 = vmatmul.mubr.bf16.gmra.mrb[0].mxu0 %v1505
  %v2863 = vpop.f32.mrb[0].mxu0
  %v2864 = vadd.f32 0.0, %v2863
  %v2865 = vpop.f32.mrb[0].mxu0
  %v2866 = vadd.f32 0.0, %v2865
  %v2867 = vpop.f32.mrb[0].mxu0
  %v2868 = vpop.f32.mrb[0].mxu0
  %2869 = vdwg.mxu0
  %2870 = vmatprep.subr.bf16.mxu0 %v2704
  %2871 = vmatpush1.bf16.msra.mxu0 %v2703
  %2872 = vmatprep.subr.bf16.mxu0 %v2708
  %2873 = vmatpush1.bf16.msra.mxu0 %v2707
  %2874 = vmatprep.subr.bf16.mxu0 %v2712
  %2875 = vmatpush1.bf16.msra.mxu0 %v2711
  %2876 = vmatprep.subr.bf16.mxu0 %v2716
  %2877 = vmatpush1.bf16.msra.mxu0 %v2715
  %2878 = vmatprep.subr.bf16.mxu0 %v2720
  %2879 = vmatpush1.bf16.msra.mxu0 %v2719
  %2880 = vmatprep.subr.bf16.mxu0 %v2724
  %2881 = vmatpush1.bf16.msra.mxu0 %v2723
  %2882 = vmatprep.subr.bf16.mxu0 %v2728
  %2883 = vmatpush1.bf16.msra.mxu0 %v2727
  %2884 = vmatprep.subr.bf16.mxu0 %v2732
  %2885 = vmatpush1.bf16.msra.mxu0 %v2731
  %2886 = vmatprep.subr.bf16.mxu0 %v2736
  %2887 = vmatpush1.bf16.msra.mxu0 %v2735
  %2888 = vmatprep.subr.bf16.mxu0 %v2740
  %2889 = vmatpush1.bf16.msra.mxu0 %v2739
  %2890 = vmatprep.subr.bf16.mxu0 %v2744
  %2891 = vmatpush1.bf16.msra.mxu0 %v2743
  %2892 = vmatprep.subr.bf16.mxu0 %v2748
  %2893 = vmatpush1.bf16.msra.mxu0 %v2747
  %2894 = vmatprep.subr.bf16.mxu0 %v2752
  %2895 = vmatpush1.bf16.msra.mxu0 %v2751
  %2896 = vmatprep.subr.bf16.mxu0 %v2756
  %2897 = vmatpush1.bf16.msra.mxu0 %v2755
  %2898 = vmatprep.subr.bf16.mxu0 %v2760
  %2899 = vmatpush1.bf16.msra.mxu0 %v2759
  %2900 = vmatprep.subr.bf16.mxu0 %v2764
  %2901 = vmatpush1.bf16.msra.mxu0 %v2763
  %2902 = vmatprep.mubr.bf16.mxu0 %v1506
  %2903 = vmatmul.mubr.bf16.gmra.mrb[0].mxu0 %v1505
  %v2904 = vpop.f32.mrb[0].mxu0
  %v2905 = vadd.f32 0.0, %v2904
  %v2906 = vpop.f32.mrb[0].mxu0
  %v2907 = vadd.f32 0.0, %v2906
  %v2908 = vpop.f32.mrb[0].mxu0
  %v2909 = vpop.f32.mrb[0].mxu0
  %2910 = vdwg.mxu0
  %v2911 = vadd.f32 %v2398, %v2864
  %v2912 = vadd.f32 %v2400, %v2866
  %v2913 = vadd.f32 %v2439, %v2905
  %v2914 = vadd.f32 %v2441, %v2907
  %v2915 = vld [vmem:[%s8 + $0x600] sm:$0xff]
  %v2916 = vld [vmem:[%s8 + $0x608] sm:$0xff]
  %v2917 = vld [vmem:[%s8 + $0x610] sm:$0xff]
  %v2918 = vld [vmem:[%s8 + $0x618] sm:$0xff]
  %v2919 = vld [vmem:[%s8 + $0x620] sm:$0xff]
  %v2920 = vld [vmem:[%s8 + $0x628] sm:$0xff]
  %v2921 = vld [vmem:[%s8 + $0x630] sm:$0xff]
  %v2922 = vld [vmem:[%s8 + $0x638] sm:$0xff]
  %v2923 = vld [vmem:[%s8 + $0x640] sm:$0xff]
  %v2924 = vld [vmem:[%s8 + $0x648] sm:$0xff]
  %v2925 = vld [vmem:[%s8 + $0x650] sm:$0xff]
  %v2926 = vld [vmem:[%s8 + $0x658] sm:$0xff]
  %v2927 = vld [vmem:[%s8 + $0x660] sm:$0xff]
  %v2928 = vld [vmem:[%s8 + $0x668] sm:$0xff]
  %v2929 = vld [vmem:[%s8 + $0x670] sm:$0xff]
  %v2930 = vld [vmem:[%s8 + $0x678] sm:$0xff]
  %v2931 = vld [vmem:[%s8 + $0x680] sm:$0xff]
  %v2932 = vld [vmem:[%s8 + $0x688] sm:$0xff]
  %v2933 = vld [vmem:[%s8 + $0x690] sm:$0xff]
  %v2934 = vld [vmem:[%s8 + $0x698] sm:$0xff]
  %v2935 = vld [vmem:[%s8 + $0x6a0] sm:$0xff]
  %v2936 = vld [vmem:[%s8 + $0x6a8] sm:$0xff]
  %v2937 = vld [vmem:[%s8 + $0x6b0] sm:$0xff]
  %v2938 = vld [vmem:[%s8 + $0x6b8] sm:$0xff]
  %v2939 = vld [vmem:[%s8 + $0x6c0] sm:$0xff]
  %v2940 = vld [vmem:[%s8 + $0x6c8] sm:$0xff]
  %v2941 = vld [vmem:[%s8 + $0x6d0] sm:$0xff]
  %v2942 = vld [vmem:[%s8 + $0x6d8] sm:$0xff]
  %v2943 = vld [vmem:[%s8 + $0x6e0] sm:$0xff]
  %v2944 = vld [vmem:[%s8 + $0x6e8] sm:$0xff]
  %v2945 = vld [vmem:[%s8 + $0x6f0] sm:$0xff]
  %v2946 = vld [vmem:[%s8 + $0x6f8] sm:$0xff]
  %v2947 = vld [vmem:[%s8 + $0x700] sm:$0xff]
  %v2948 = vld [vmem:[%s8 + $0x708] sm:$0xff]
  %v2949 = vld [vmem:[%s8 + $0x710] sm:$0xff]
  %v2950 = vld [vmem:[%s8 + $0x718] sm:$0xff]
  %v2951 = vld [vmem:[%s8 + $0x720] sm:$0xff]
  %v2952 = vld [vmem:[%s8 + $0x728] sm:$0xff]
  %v2953 = vld [vmem:[%s8 + $0x730] sm:$0xff]
  %v2954 = vld [vmem:[%s8 + $0x738] sm:$0xff]
  %v2955 = vld [vmem:[%s8 + $0x740] sm:$0xff]
  %v2956 = vld [vmem:[%s8 + $0x748] sm:$0xff]
  %v2957 = vld [vmem:[%s8 + $0x750] sm:$0xff]
  %v2958 = vld [vmem:[%s8 + $0x758] sm:$0xff]
  %v2959 = vld [vmem:[%s8 + $0x760] sm:$0xff]
  %v2960 = vld [vmem:[%s8 + $0x768] sm:$0xff]
  %v2961 = vld [vmem:[%s8 + $0x770] sm:$0xff]
  %v2962 = vld [vmem:[%s8 + $0x778] sm:$0xff]
  %v2963 = vld [vmem:[%s8 + $0x780] sm:$0xff]
  %v2964 = vld [vmem:[%s8 + $0x788] sm:$0xff]
  %v2965 = vld [vmem:[%s8 + $0x790] sm:$0xff]
  %v2966 = vld [vmem:[%s8 + $0x798] sm:$0xff]
  %v2967 = vld [vmem:[%s8 + $0x7a0] sm:$0xff]
  %v2968 = vld [vmem:[%s8 + $0x7a8] sm:$0xff]
  %v2969 = vld [vmem:[%s8 + $0x7b0] sm:$0xff]
  %v2970 = vld [vmem:[%s8 + $0x7b8] sm:$0xff]
  %v2971 = vld [vmem:[%s8 + $0x7c0] sm:$0xff]
  %v2972 = vld [vmem:[%s8 + $0x7c8] sm:$0xff]
  %v2973 = vld [vmem:[%s8 + $0x7d0] sm:$0xff]
  %v2974 = vld [vmem:[%s8 + $0x7d8] sm:$0xff]
  %v2975 = vld [vmem:[%s8 + $0x7e0] sm:$0xff]
  %v2976 = vld [vmem:[%s8 + $0x7e8] sm:$0xff]
  %v2977 = vld [vmem:[%s8 + $0x7f0] sm:$0xff]
  %v2978 = vld [vmem:[%s8 + $0x7f8] sm:$0xff]
  %v2981 = vrot.slane %v1505, 4
  %v2982 = vrot.slane %v1506, 4
  %v3049 = vunpack.c.l.b16 %v2915
  %v3050 = vunpack.c.h.b16 %v2915
  %v3051 = vunpack.c.l.b16 %v2916
  %v3052 = vunpack.c.h.b16 %v2916
  %v3053 = vunpack.c.l.b16 %v2917
  %v3054 = vunpack.c.h.b16 %v2917
  %v3055 = vunpack.c.l.b16 %v2918
  %v3056 = vunpack.c.h.b16 %v2918
  %v3057 = vunpack.c.l.b16 %v2919
  %v3058 = vunpack.c.h.b16 %v2919
  %v3059 = vunpack.c.l.b16 %v2920
  %v3060 = vunpack.c.h.b16 %v2920
  %v3061 = vunpack.c.l.b16 %v2921
  %v3062 = vunpack.c.h.b16 %v2921
  %v3063 = vunpack.c.l.b16 %v2922
  %v3064 = vunpack.c.h.b16 %v2922
  %v3065 = vunpack.c.l.b16 %v2923
  %v3066 = vunpack.c.h.b16 %v2923
  %v3067 = vunpack.c.l.b16 %v2924
  %v3068 = vunpack.c.h.b16 %v2924
  %v3069 = vunpack.c.l.b16 %v2925
  %v3070 = vunpack.c.h.b16 %v2925
  %v3071 = vunpack.c.l.b16 %v2926
  %v3072 = vunpack.c.h.b16 %v2926
  %v3073 = vunpack.c.l.b16 %v2927
  %v3074 = vunpack.c.h.b16 %v2927
  %v3075 = vunpack.c.l.b16 %v2928
  %v3076 = vunpack.c.h.b16 %v2928
  %v3077 = vunpack.c.l.b16 %v2929
  %v3078 = vunpack.c.h.b16 %v2929
  %v3079 = vunpack.c.l.b16 %v2930
  %v3080 = vunpack.c.h.b16 %v2930
  %v3081 = vunpack.c.l.b16 %v2931
  %v3082 = vunpack.c.h.b16 %v2931
  %v3083 = vunpack.c.l.b16 %v2932
  %v3084 = vunpack.c.h.b16 %v2932
  %v3085 = vunpack.c.l.b16 %v2933
  %v3086 = vunpack.c.h.b16 %v2933
  %v3087 = vunpack.c.l.b16 %v2934
  %v3088 = vunpack.c.h.b16 %v2934
  %v3089 = vunpack.c.l.b16 %v2935
  %v3090 = vunpack.c.h.b16 %v2935
  %v3091 = vunpack.c.l.b16 %v2936
  %v3092 = vunpack.c.h.b16 %v2936
  %v3093 = vunpack.c.l.b16 %v2937
  %v3094 = vunpack.c.h.b16 %v2937
  %v3095 = vunpack.c.l.b16 %v2938
  %v3096 = vunpack.c.h.b16 %v2938
  %v3097 = vunpack.c.l.b16 %v2939
  %v3098 = vunpack.c.h.b16 %v2939
  %v3099 = vunpack.c.l.b16 %v2940
  %v3100 = vunpack.c.h.b16 %v2940
  %v3101 = vunpack.c.l.b16 %v2941
  %v3102 = vunpack.c.h.b16 %v2941
  %v3103 = vunpack.c.l.b16 %v2942
  %v3104 = vunpack.c.h.b16 %v2942
  %v3105 = vunpack.c.l.b16 %v2943
  %v3106 = vunpack.c.h.b16 %v2943
  %v3107 = vunpack.c.l.b16 %v2944
  %v3108 = vunpack.c.h.b16 %v2944
  %v3109 = vunpack.c.l.b16 %v2945
  %v3110 = vunpack.c.h.b16 %v2945
  %v3111 = vunpack.c.l.b16 %v2946
  %v3112 = vunpack.c.h.b16 %v2946
  %v3113 = vunpack.c.l.b16 %v2947
  %v3114 = vunpack.c.h.b16 %v2947
  %v3115 = vunpack.c.l.b16 %v2948
  %v3116 = vunpack.c.h.b16 %v2948
  %v3117 = vunpack.c.l.b16 %v2949
  %v3118 = vunpack.c.h.b16 %v2949
  %v3119 = vunpack.c.l.b16 %v2950
  %v3120 = vunpack.c.h.b16 %v2950
  %v3121 = vunpack.c.l.b16 %v2951
  %v3122 = vunpack.c.h.b16 %v2951
  %v3123 = vunpack.c.l.b16 %v2952
  %v3124 = vunpack.c.h.b16 %v2952
  %v3125 = vunpack.c.l.b16 %v2953
  %v3126 = vunpack.c.h.b16 %v2953
  %v3127 = vunpack.c.l.b16 %v2954
  %v3128 = vunpack.c.h.b16 %v2954
  %v3129 = vunpack.c.l.b16 %v2955
  %v3130 = vunpack.c.h.b16 %v2955
  %v3131 = vunpack.c.l.b16 %v2956
  %v3132 = vunpack.c.h.b16 %v2956
  %v3133 = vunpack.c.l.b16 %v2957
  %v3134 = vunpack.c.h.b16 %v2957
  %v3135 = vunpack.c.l.b16 %v2958
  %v3136 = vunpack.c.h.b16 %v2958
  %v3137 = vunpack.c.l.b16 %v2959
  %v3138 = vunpack.c.h.b16 %v2959
  %v3139 = vunpack.c.l.b16 %v2960
  %v3140 = vunpack.c.h.b16 %v2960
  %v3141 = vunpack.c.l.b16 %v2961
  %v3142 = vunpack.c.h.b16 %v2961
  %v3143 = vunpack.c.l.b16 %v2962
  %v3144 = vunpack.c.h.b16 %v2962
  %v3145 = vunpack.c.l.b16 %v2963
  %v3146 = vunpack.c.h.b16 %v2963
  %v3147 = vunpack.c.l.b16 %v2964
  %v3148 = vunpack.c.h.b16 %v2964
  %v3149 = vunpack.c.l.b16 %v2965
  %v3150 = vunpack.c.h.b16 %v2965
  %v3151 = vunpack.c.l.b16 %v2966
  %v3152 = vunpack.c.h.b16 %v2966
  %v3153 = vunpack.c.l.b16 %v2967
  %v3154 = vunpack.c.h.b16 %v2967
  %v3155 = vunpack.c.l.b16 %v2968
  %v3156 = vunpack.c.h.b16 %v2968
  %v3157 = vunpack.c.l.b16 %v2969
  %v3158 = vunpack.c.h.b16 %v2969
  %v3159 = vunpack.c.l.b16 %v2970
  %v3160 = vunpack.c.h.b16 %v2970
  %v3161 = vunpack.c.l.b16 %v2971
  %v3162 = vunpack.c.h.b16 %v2971
  %v3163 = vunpack.c.l.b16 %v2972
  %v3164 = vunpack.c.h.b16 %v2972
  %v3165 = vunpack.c.l.b16 %v2973
  %v3166 = vunpack.c.h.b16 %v2973
  %v3167 = vunpack.c.l.b16 %v2974
  %v3168 = vunpack.c.h.b16 %v2974
  %v3169 = vunpack.c.l.b16 %v2975
  %v3170 = vunpack.c.h.b16 %v2975
  %v3171 = vunpack.c.l.b16 %v2976
  %v3172 = vunpack.c.h.b16 %v2976
  %v3173 = vunpack.c.l.b16 %v2977
  %v3174 = vunpack.c.h.b16 %v2977
  %v3175 = vunpack.c.l.b16 %v2978
  %v3176 = vunpack.c.h.b16 %v2978
  %v3177 = vpack.c.b16 %v3053, %v3049
  %v3178 = vpack.c.b16 %v3054, %v3050
  %v3179 = vpack.c.b16 %v3055, %v3051
  %v3180 = vpack.c.b16 %v3056, %v3052
  %v3181 = vpack.c.b16 %v3061, %v3057
  %v3182 = vpack.c.b16 %v3062, %v3058
  %v3183 = vpack.c.b16 %v3063, %v3059
  %v3184 = vpack.c.b16 %v3064, %v3060
  %v3185 = vpack.c.b16 %v3069, %v3065
  %v3186 = vpack.c.b16 %v3070, %v3066
  %v3187 = vpack.c.b16 %v3071, %v3067
  %v3188 = vpack.c.b16 %v3072, %v3068
  %v3189 = vpack.c.b16 %v3077, %v3073
  %v3190 = vpack.c.b16 %v3078, %v3074
  %v3191 = vpack.c.b16 %v3079, %v3075
  %v3192 = vpack.c.b16 %v3080, %v3076
  %v3193 = vpack.c.b16 %v3085, %v3081
  %v3194 = vpack.c.b16 %v3086, %v3082
  %v3195 = vpack.c.b16 %v3087, %v3083
  %v3196 = vpack.c.b16 %v3088, %v3084
  %v3197 = vpack.c.b16 %v3093, %v3089
  %v3198 = vpack.c.b16 %v3094, %v3090
  %v3199 = vpack.c.b16 %v3095, %v3091
  %v3200 = vpack.c.b16 %v3096, %v3092
  %v3201 = vpack.c.b16 %v3101, %v3097
  %v3202 = vpack.c.b16 %v3102, %v3098
  %v3203 = vpack.c.b16 %v3103, %v3099
  %v3204 = vpack.c.b16 %v3104, %v3100
  %v3205 = vpack.c.b16 %v3109, %v3105
  %v3206 = vpack.c.b16 %v3110, %v3106
  %v3207 = vpack.c.b16 %v3111, %v3107
  %v3208 = vpack.c.b16 %v3112, %v3108
  %v3209 = vpack.c.b16 %v3117, %v3113
  %v3210 = vpack.c.b16 %v3118, %v3114
  %v3211 = vpack.c.b16 %v3119, %v3115
  %v3212 = vpack.c.b16 %v3120, %v3116
  %v3213 = vpack.c.b16 %v3125, %v3121
  %v3214 = vpack.c.b16 %v3126, %v3122
  %v3215 = vpack.c.b16 %v3127, %v3123
  %v3216 = vpack.c.b16 %v3128, %v3124
  %v3217 = vpack.c.b16 %v3133, %v3129
  %v3218 = vpack.c.b16 %v3134, %v3130
  %v3219 = vpack.c.b16 %v3135, %v3131
  %v3220 = vpack.c.b16 %v3136, %v3132
  %v3221 = vpack.c.b16 %v3141, %v3137
  %v3222 = vpack.c.b16 %v3142, %v3138
  %v3223 = vpack.c.b16 %v3143, %v3139
  %v3224 = vpack.c.b16 %v3144, %v3140
  %v3225 = vpack.c.b16 %v3149, %v3145
  %v3226 = vpack.c.b16 %v3150, %v3146
  %v3227 = vpack.c.b16 %v3151, %v3147
  %v3228 = vpack.c.b16 %v3152, %v3148
  %v3229 = vpack.c.b16 %v3157, %v3153
  %v3230 = vpack.c.b16 %v3158, %v3154
  %v3231 = vpack.c.b16 %v3159, %v3155
  %v3232 = vpack.c.b16 %v3160, %v3156
  %v3233 = vpack.c.b16 %v3165, %v3161
  %v3234 = vpack.c.b16 %v3166, %v3162
  %v3235 = vpack.c.b16 %v3167, %v3163
  %v3236 = vpack.c.b16 %v3168, %v3164
  %v3237 = vpack.c.b16 %v3173, %v3169
  %v3238 = vpack.c.b16 %v3174, %v3170
  %v3239 = vpack.c.b16 %v3175, %v3171
  %v3240 = vpack.c.b16 %v3176, %v3172
  %3305 = vmatprep.subr.bf16.mxu0 %v3178
  %3306 = vmatpush1.bf16.msra.mxu0 %v3177
  %3307 = vmatprep.subr.bf16.mxu0 %v3182
  %3308 = vmatpush1.bf16.msra.mxu0 %v3181
  %3309 = vmatprep.subr.bf16.mxu0 %v3186
  %3310 = vmatpush1.bf16.msra.mxu0 %v3185
  %3311 = vmatprep.subr.bf16.mxu0 %v3190
  %3312 = vmatpush1.bf16.msra.mxu0 %v3189
  %3313 = vmatprep.subr.bf16.mxu0 %v3194
  %3314 = vmatpush1.bf16.msra.mxu0 %v3193
  %3315 = vmatprep.subr.bf16.mxu0 %v3198
  %3316 = vmatpush1.bf16.msra.mxu0 %v3197
  %3317 = vmatprep.subr.bf16.mxu0 %v3202
  %3318 = vmatpush1.bf16.msra.mxu0 %v3201
  %3319 = vmatprep.subr.bf16.mxu0 %v3206
  %3320 = vmatpush1.bf16.msra.mxu0 %v3205
  %3321 = vmatprep.subr.bf16.mxu0 %v3210
  %3322 = vmatpush1.bf16.msra.mxu0 %v3209
  %3323 = vmatprep.subr.bf16.mxu0 %v3214
  %3324 = vmatpush1.bf16.msra.mxu0 %v3213
  %3325 = vmatprep.subr.bf16.mxu0 %v3218
  %3326 = vmatpush1.bf16.msra.mxu0 %v3217
  %3327 = vmatprep.subr.bf16.mxu0 %v3222
  %3328 = vmatpush1.bf16.msra.mxu0 %v3221
  %3329 = vmatprep.subr.bf16.mxu0 %v3226
  %3330 = vmatpush1.bf16.msra.mxu0 %v3225
  %3331 = vmatprep.subr.bf16.mxu0 %v3230
  %3332 = vmatpush1.bf16.msra.mxu0 %v3229
  %3333 = vmatprep.subr.bf16.mxu0 %v3234
  %3334 = vmatpush1.bf16.msra.mxu0 %v3233
  %3335 = vmatprep.subr.bf16.mxu0 %v3238
  %3336 = vmatpush1.bf16.msra.mxu0 %v3237
  %3337 = vmatprep.mubr.bf16.mxu0 %v2982
  %3338 = vmatmul.mubr.bf16.gmra.mrb[0].mxu0 %v2981
  %v3339 = vpop.f32.mrb[0].mxu0
  %v3340 = vadd.f32 0.0, %v3339
  %v3341 = vpop.f32.mrb[0].mxu0
  %v3342 = vadd.f32 0.0, %v3341
  %v3343 = vpop.f32.mrb[0].mxu0
  %v3344 = vpop.f32.mrb[0].mxu0
  %3345 = vdwg.mxu0
  %3346 = vmatprep.subr.bf16.mxu0 %v3180
  %3347 = vmatpush1.bf16.msra.mxu0 %v3179
  %3348 = vmatprep.subr.bf16.mxu0 %v3184
  %3349 = vmatpush1.bf16.msra.mxu0 %v3183
  %3350 = vmatprep.subr.bf16.mxu0 %v3188
  %3351 = vmatpush1.bf16.msra.mxu0 %v3187
  %3352 = vmatprep.subr.bf16.mxu0 %v3192
  %3353 = vmatpush1.bf16.msra.mxu0 %v3191
  %3354 = vmatprep.subr.bf16.mxu0 %v3196
  %3355 = vmatpush1.bf16.msra.mxu0 %v3195
  %3356 = vmatprep.subr.bf16.mxu0 %v3200
  %3357 = vmatpush1.bf16.msra.mxu0 %v3199
  %3358 = vmatprep.subr.bf16.mxu0 %v3204
  %3359 = vmatpush1.bf16.msra.mxu0 %v3203
  %3360 = vmatprep.subr.bf16.mxu0 %v3208
  %3361 = vmatpush1.bf16.msra.mxu0 %v3207
  %3362 = vmatprep.subr.bf16.mxu0 %v3212
  %3363 = vmatpush1.bf16.msra.mxu0 %v3211
  %3364 = vmatprep.subr.bf16.mxu0 %v3216
  %3365 = vmatpush1.bf16.msra.mxu0 %v3215
  %3366 = vmatprep.subr.bf16.mxu0 %v3220
  %3367 = vmatpush1.bf16.msra.mxu0 %v3219
  %3368 = vmatprep.subr.bf16.mxu0 %v3224
  %3369 = vmatpush1.bf16.msra.mxu0 %v3223
  %3370 = vmatprep.subr.bf16.mxu0 %v3228
  %3371 = vmatpush1.bf16.msra.mxu0 %v3227
  %3372 = vmatprep.subr.bf16.mxu0 %v3232
  %3373 = vmatpush1.bf16.msra.mxu0 %v3231
  %3374 = vmatprep.subr.bf16.mxu0 %v3236
  %3375 = vmatpush1.bf16.msra.mxu0 %v3235
  %3376 = vmatprep.subr.bf16.mxu0 %v3240
  %3377 = vmatpush1.bf16.msra.mxu0 %v3239
  %3378 = vmatprep.mubr.bf16.mxu0 %v2982
  %3379 = vmatmul.mubr.bf16.gmra.mrb[0].mxu0 %v2981
  %v3380 = vpop.f32.mrb[0].mxu0
  %v3381 = vadd.f32 0.0, %v3380
  %v3382 = vpop.f32.mrb[0].mxu0
  %v3383 = vadd.f32 0.0, %v3382
  %v3384 = vpop.f32.mrb[0].mxu0
  %v3385 = vpop.f32.mrb[0].mxu0
  %3386 = vdwg.mxu0
  %v3387 = vadd.f32 %v2911, %v3340
  %v3388 = vadd.f32 %v2912, %v3342
  %v3389 = vadd.f32 %v2913, %v3381
  %v3390 = vadd.f32 %v2914, %v3383
  %v3391 = vld [vmem:[%s9] sm:$0xf]
  %v3393 = vlaneseq
  %v3394 = vshrl.u32 %v3393, 7
  %v3395 = vsub.s32 0, %v3394
  %v3396 = vrot.slane %v3391, %v3395
  %v3397 = vlaneseq
  %v3398 = vshrl.u32 %v3397, 7
  %v3399 = vsub.s32 1, %v3398
  %v3400 = vrot.slane %v3391, %v3399
  %v3401 = vlaneseq
  %v3402 = vshrl.u32 %v3401, 7
  %v3403 = vsub.s32 2, %v3402
  %v3404 = vrot.slane %v3391, %v3403
  %v3405 = vlaneseq
  %v3406 = vshrl.u32 %v3405, 7
  %v3407 = vsub.s32 3, %v3406
  %v3408 = vrot.slane %v3391, %v3407
  %v3413 = vadd.f32 %v3387, %v3396
  %v3414 = vadd.f32 %v3388, %v3400
  %v3415 = vadd.f32 %v3389, %v3404
  %v3416 = vadd.f32 %v3390, %v3408
  %v3417 = vmul.f32 %v3413, %v3413
  %v3418 = vmul.f32 %v3414, %v3414
  %v3419 = vmul.f32 %v3415, %v3415
  %v3420 = vmul.f32 %v3416, %v3416
  %v3421 = vmul.f32 %v3413, %v3417
  %v3422 = vmul.f32 %v3414, %v3418
  %v3423 = vmul.f32 %v3415, %v3419
  %v3424 = vmul.f32 %v3416, %v3420
  %v3425 = vmul.f32 %v3421, 0.044715
  %v3426 = vmul.f32 %v3422, 0.044715
  %v3427 = vmul.f32 %v3423, 0.044715
  %v3428 = vmul.f32 %v3424, 0.044715
  %v3429 = vadd.f32 %v3413, %v3425
  %v3430 = vadd.f32 %v3414, %v3426
  %v3431 = vadd.f32 %v3415, %v3427
  %v3432 = vadd.f32 %v3416, %v3428
  %v3433 = vmul.f32 %v3429, 0.7978846
  %v3434 = vmul.f32 %v3430, 0.7978846
  %v3435 = vmul.f32 %v3431, 0.7978846
  %v3436 = vmul.f32 %v3432, 0.7978846
  %v3437 = vtanh.pop %v3433
  %v3438 = vtanh.pop %v3434
  %v3439 = vtanh.pop %v3435
  %v3440 = vtanh.pop %v3436
  %v3441 = vadd.f32 %v3437, 1.0
  %v3442 = vadd.f32 %v3438, 1.0
  %v3443 = vadd.f32 %v3439, 1.0
  %v3444 = vadd.f32 %v3440, 1.0
  %v3445 = vmul.f32 %v3441, 0.5
  %v3446 = vmul.f32 %v3442, 0.5
  %v3447 = vmul.f32 %v3443, 0.5
  %v3448 = vmul.f32 %v3444, 0.5
  %v3449 = vmul.f32 %v3413, %v3445
  %v3450 = vmul.f32 %v3414, %v3446
  %v3451 = vmul.f32 %v3415, %v3447
  %v3452 = vmul.f32 %v3416, %v3448
  %v3453 = vpack.c.bf16 %v3449, %v3449
  %v3454 = vpack.c.bf16 %v3450, %v3450
  %v3455 = vpack.c.bf16 %v3451, %v3451
  %v3456 = vpack.c.bf16 %v3452, %v3452
  %v3457 = vld [vmem:[%s10] sm:$0xf]
  %v3458 = vld [vmem:[%s10 + $0x4] sm:$0xf]
  %v3459 = vld [vmem:[%s10 + $0x8] sm:$0xf]
  %v3460 = vld [vmem:[%s10 + $0xc] sm:$0xf]
  %v3461 = vld [vmem:[%s10 + $0x10] sm:$0xf]
  %v3462 = vld [vmem:[%s10 + $0x14] sm:$0xf]
  %v3463 = vld [vmem:[%s10 + $0x18] sm:$0xf]
  %v3464 = vld [vmem:[%s10 + $0x1c] sm:$0xf]
  %v3465 = vld [vmem:[%s10 + $0x20] sm:$0xf]
  %v3466 = vld [vmem:[%s10 + $0x24] sm:$0xf]
  %v3467 = vld [vmem:[%s10 + $0x28] sm:$0xf]
  %v3468 = vld [vmem:[%s10 + $0x2c] sm:$0xf]
  %v3469 = vld [vmem:[%s10 + $0x30] sm:$0xf]
  %v3470 = vld [vmem:[%s10 + $0x34] sm:$0xf]
  %v3471 = vld [vmem:[%s10 + $0x38] sm:$0xf]
  %v3472 = vld [vmem:[%s10 + $0x3c] sm:$0xf]
  %v3473 = vld [vmem:[%s10 + $0x40] sm:$0xf]
  %v3474 = vld [vmem:[%s10 + $0x44] sm:$0xf]
  %v3475 = vld [vmem:[%s10 + $0x48] sm:$0xf]
  %v3476 = vld [vmem:[%s10 + $0x4c] sm:$0xf]
  %v3477 = vld [vmem:[%s10 + $0x50] sm:$0xf]
  %v3478 = vld [vmem:[%s10 + $0x54] sm:$0xf]
  %v3479 = vld [vmem:[%s10 + $0x58] sm:$0xf]
  %v3480 = vld [vmem:[%s10 + $0x5c] sm:$0xf]
  %v3481 = vld [vmem:[%s10 + $0x60] sm:$0xf]
  %v3482 = vld [vmem:[%s10 + $0x64] sm:$0xf]
  %v3483 = vld [vmem:[%s10 + $0x68] sm:$0xf]
  %v3484 = vld [vmem:[%s10 + $0x6c] sm:$0xf]
  %v3485 = vld [vmem:[%s10 + $0x70] sm:$0xf]
  %v3486 = vld [vmem:[%s10 + $0x74] sm:$0xf]
  %v3487 = vld [vmem:[%s10 + $0x78] sm:$0xf]
  %v3488 = vld [vmem:[%s10 + $0x7c] sm:$0xf]
  %v3489 = vld [vmem:[%s10 + $0x80] sm:$0xf]
  %v3490 = vld [vmem:[%s10 + $0x84] sm:$0xf]
  %v3491 = vld [vmem:[%s10 + $0x88] sm:$0xf]
  %v3492 = vld [vmem:[%s10 + $0x8c] sm:$0xf]
  %v3493 = vld [vmem:[%s10 + $0x90] sm:$0xf]
  %v3494 = vld [vmem:[%s10 + $0x94] sm:$0xf]
  %v3495 = vld [vmem:[%s10 + $0x98] sm:$0xf]
  %v3496 = vld [vmem:[%s10 + $0x9c] sm:$0xf]
  %v3497 = vld [vmem:[%s10 + $0xa0] sm:$0xf]
  %v3498 = vld [vmem:[%s10 + $0xa4] sm:$0xf]
  %v3499 = vld [vmem:[%s10 + $0xa8] sm:$0xf]
  %v3500 = vld [vmem:[%s10 + $0xac] sm:$0xf]
  %v3501 = vld [vmem:[%s10 + $0xb0] sm:$0xf]
  %v3502 = vld [vmem:[%s10 + $0xb4] sm:$0xf]
  %v3503 = vld [vmem:[%s10 + $0xb8] sm:$0xf]
  %v3504 = vld [vmem:[%s10 + $0xbc] sm:$0xf]
  %v3505 = vld [vmem:[%s10 + $0xc0] sm:$0xf]
  %v3506 = vld [vmem:[%s10 + $0xc4] sm:$0xf]
  %v3507 = vld [vmem:[%s10 + $0xc8] sm:$0xf]
  %v3508 = vld [vmem:[%s10 + $0xcc] sm:$0xf]
  %v3509 = vld [vmem:[%s10 + $0xd0] sm:$0xf]
  %v3510 = vld [vmem:[%s10 + $0xd4] sm:$0xf]
  %v3511 = vld [vmem:[%s10 + $0xd8] sm:$0xf]
  %v3512 = vld [vmem:[%s10 + $0xdc] sm:$0xf]
  %v3513 = vld [vmem:[%s10 + $0xe0] sm:$0xf]
  %v3514 = vld [vmem:[%s10 + $0xe4] sm:$0xf]
  %v3515 = vld [vmem:[%s10 + $0xe8] sm:$0xf]
  %v3516 = vld [vmem:[%s10 + $0xec] sm:$0xf]
  %v3517 = vld [vmem:[%s10 + $0xf0] sm:$0xf]
  %v3518 = vld [vmem:[%s10 + $0xf4] sm:$0xf]
  %v3519 = vld [vmem:[%s10 + $0xf8] sm:$0xf]
  %v3520 = vld [vmem:[%s10 + $0xfc] sm:$0xf]
  %v3521 = vld [vmem:[%s11] sm:$0x1]
  %v3523 = vlaneseq
  %v3524 = vshrl.u32 %v3523, 7
  %v3525 = vsub.s32 0, %v3524
  %v3526 = vrot.slane %v3521, %v3525
  %v3592 = vunpack.c.l.b16 %v3457
  %v3593 = vunpack.c.l.b16 %v3458
  %v3594 = vunpack.c.l.b16 %v3459
  %v3595 = vunpack.c.l.b16 %v3460
  %v3596 = vunpack.c.l.b16 %v3461
  %v3597 = vunpack.c.l.b16 %v3462
  %v3598 = vunpack.c.l.b16 %v3463
  %v3599 = vunpack.c.l.b16 %v3464
  %v3600 = vunpack.c.l.b16 %v3465
  %v3601 = vunpack.c.l.b16 %v3466
  %v3602 = vunpack.c.l.b16 %v3467
  %v3603 = vunpack.c.l.b16 %v3468
  %v3604 = vunpack.c.l.b16 %v3469
  %v3605 = vunpack.c.l.b16 %v3470
  %v3606 = vunpack.c.l.b16 %v3471
  %v3607 = vunpack.c.l.b16 %v3472
  %v3608 = vunpack.c.l.b16 %v3473
  %v3609 = vunpack.c.l.b16 %v3474
  %v3610 = vunpack.c.l.b16 %v3475
  %v3611 = vunpack.c.l.b16 %v3476
  %v3612 = vunpack.c.l.b16 %v3477
  %v3613 = vunpack.c.l.b16 %v3478
  %v3614 = vunpack.c.l.b16 %v3479
  %v3615 = vunpack.c.l.b16 %v3480
  %v3616 = vunpack.c.l.b16 %v3481
  %v3617 = vunpack.c.l.b16 %v3482
  %v3618 = vunpack.c.l.b16 %v3483
  %v3619 = vunpack.c.l.b16 %v3484
  %v3620 = vunpack.c.l.b16 %v3485
  %v3621 = vunpack.c.l.b16 %v3486
  %v3622 = vunpack.c.l.b16 %v3487
  %v3623 = vunpack.c.l.b16 %v3488
  %v3624 = vunpack.c.l.b16 %v3489
  %v3625 = vunpack.c.l.b16 %v3490
  %v3626 = vunpack.c.l.b16 %v3491
  %v3627 = vunpack.c.l.b16 %v3492
  %v3628 = vunpack.c.l.b16 %v3493
  %v3629 = vunpack.c.l.b16 %v3494
  %v3630 = vunpack.c.l.b16 %v3495
  %v3631 = vunpack.c.l.b16 %v3496
  %v3632 = vunpack.c.l.b16 %v3497
  %v3633 = vunpack.c.l.b16 %v3498
  %v3634 = vunpack.c.l.b16 %v3499
  %v3635 = vunpack.c.l.b16 %v3500
  %v3636 = vunpack.c.l.b16 %v3501
  %v3637 = vunpack.c.l.b16 %v3502
  %v3638 = vunpack.c.l.b16 %v3503
  %v3639 = vunpack.c.l.b16 %v3504
  %v3640 = vunpack.c.l.b16 %v3505
  %v3641 = vunpack.c.l.b16 %v3506
  %v3642 = vunpack.c.l.b16 %v3507
  %v3643 = vunpack.c.l.b16 %v3508
  %v3644 = vunpack.c.l.b16 %v3509
  %v3645 = vunpack.c.l.b16 %v3510
  %v3646 = vunpack.c.l.b16 %v3511
  %v3647 = vunpack.c.l.b16 %v3512
  %v3648 = vunpack.c.l.b16 %v3513
  %v3649 = vunpack.c.l.b16 %v3514
  %v3650 = vunpack.c.l.b16 %v3515
  %v3651 = vunpack.c.l.b16 %v3516
  %v3652 = vunpack.c.l.b16 %v3517
  %v3653 = vunpack.c.l.b16 %v3518
  %v3654 = vunpack.c.l.b16 %v3519
  %v3655 = vunpack.c.l.b16 %v3520
  %v3656 = vpack.c.b16 %v3593, %v3592
  %v3657 = vpack.c.b16 %v3595, %v3594
  %v3658 = vpack.c.b16 %v3597, %v3596
  %v3659 = vpack.c.b16 %v3599, %v3598
  %v3660 = vpack.c.b16 %v3601, %v3600
  %v3661 = vpack.c.b16 %v3603, %v3602
  %v3662 = vpack.c.b16 %v3605, %v3604
  %v3663 = vpack.c.b16 %v3607, %v3606
  %v3664 = vpack.c.b16 %v3609, %v3608
  %v3665 = vpack.c.b16 %v3611, %v3610
  %v3666 = vpack.c.b16 %v3613, %v3612
  %v3667 = vpack.c.b16 %v3615, %v3614
  %v3668 = vpack.c.b16 %v3617, %v3616
  %v3669 = vpack.c.b16 %v3619, %v3618
  %v3670 = vpack.c.b16 %v3621, %v3620
  %v3671 = vpack.c.b16 %v3623, %v3622
  %v3672 = vpack.c.b16 %v3625, %v3624
  %v3673 = vpack.c.b16 %v3627, %v3626
  %v3674 = vpack.c.b16 %v3629, %v3628
  %v3675 = vpack.c.b16 %v3631, %v3630
  %v3676 = vpack.c.b16 %v3633, %v3632
  %v3677 = vpack.c.b16 %v3635, %v3634
  %v3678 = vpack.c.b16 %v3637, %v3636
  %v3679 = vpack.c.b16 %v3639, %v3638
  %v3680 = vpack.c.b16 %v3641, %v3640
  %v3681 = vpack.c.b16 %v3643, %v3642
  %v3682 = vpack.c.b16 %v3645, %v3644
  %v3683 = vpack.c.b16 %v3647, %v3646
  %v3684 = vpack.c.b16 %v3649, %v3648
  %v3685 = vpack.c.b16 %v3651, %v3650
  %v3686 = vpack.c.b16 %v3653, %v3652
  %v3687 = vpack.c.b16 %v3655, %v3654
  %3720 = vmatprep.subr.bf16.mxu0 0
  %3721 = vmatpush1.bf16.msra.mxu0 %v3656
  %3722 = vmatprep.subr.bf16.mxu0 0
  %3723 = vmatpush1.bf16.msra.mxu0 %v3657
  %3724 = vmatprep.subr.bf16.mxu0 0
  %3725 = vmatpush1.bf16.msra.mxu0 %v3658
  %3726 = vmatprep.subr.bf16.mxu0 0
  %3727 = vmatpush1.bf16.msra.mxu0 %v3659
  %3728 = vmatprep.subr.bf16.mxu0 0
  %3729 = vmatpush1.bf16.msra.mxu0 %v3660
  %3730 = vmatprep.subr.bf16.mxu0 0
  %3731 = vmatpush1.bf16.msra.mxu0 %v3661
  %3732 = vmatprep.subr.bf16.mxu0 0
  %3733 = vmatpush1.bf16.msra.mxu0 %v3662
  %3734 = vmatprep.subr.bf16.mxu0 0
  %3735 = vmatpush1.bf16.msra.mxu0 %v3663
  %3736 = vmatprep.subr.bf16.mxu0 0
  %3737 = vmatpush1.bf16.msra.mxu0 %v3664
  %3738 = vmatprep.subr.bf16.mxu0 0
  %3739 = vmatpush1.bf16.msra.mxu0 %v3665
  %3740 = vmatprep.subr.bf16.mxu0 0
  %3741 = vmatpush1.bf16.msra.mxu0 %v3666
  %3742 = vmatprep.subr.bf16.mxu0 0
  %3743 = vmatpush1.bf16.msra.mxu0 %v3667
  %3744 = vmatprep.subr.bf16.mxu0 0
  %3745 = vmatpush1.bf16.msra.mxu0 %v3668
  %3746 = vmatprep.subr.bf16.mxu0 0
  %3747 = vmatpush1.bf16.msra.mxu0 %v3669
  %3748 = vmatprep.subr.bf16.mxu0 0
  %3749 = vmatpush1.bf16.msra.mxu0 %v3670
  %3750 = vmatprep.subr.bf16.mxu0 0
  %3751 = vmatpush1.bf16.msra.mxu0 %v3671
  %3752 = vmatprep.mubr.bf16.mxu0 %v3454
  %3753 = vmatmul.mubr.bf16.gmra.mrb[0].mxu0 %v3453
  %v3754 = vpop.f32.mrb[0].mxu0
  %v3755 = vadd.f32 %v3526, %v3754
  %v3756 = vpop.f32.mrb[0].mxu0
  %v3757 = vpop.f32.mrb[0].mxu0
  %v3758 = vpop.f32.mrb[0].mxu0
  %3759 = vdwg.mxu0
  %3760 = vmatprep.subr.bf16.mxu0 0
  %3761 = vmatpush1.bf16.msra.mxu0 %v3672
  %3762 = vmatprep.subr.bf16.mxu0 0
  %3763 = vmatpush1.bf16.msra.mxu0 %v3673
  %3764 = vmatprep.subr.bf16.mxu0 0
  %3765 = vmatpush1.bf16.msra.mxu0 %v3674
  %3766 = vmatprep.subr.bf16.mxu0 0
  %3767 = vmatpush1.bf16.msra.mxu0 %v3675
  %3768 = vmatprep.subr.bf16.mxu0 0
  %3769 = vmatpush1.bf16.msra.mxu0 %v3676
  %3770 = vmatprep.subr.bf16.mxu0 0
  %3771 = vmatpush1.bf16.msra.mxu0 %v3677
  %3772 = vmatprep.subr.bf16.mxu0 0
  %3773 = vmatpush1.bf16.msra.mxu0 %v3678
  %3774 = vmatprep.subr.bf16.mxu0 0
  %3775 = vmatpush1.bf16.msra.mxu0 %v3679
  %3776 = vmatprep.subr.bf16.mxu0 0
  %3777 = vmatpush1.bf16.msra.mxu0 %v3680
  %3778 = vmatprep.subr.bf16.mxu0 0
  %3779 = vmatpush1.bf16.msra.mxu0 %v3681
  %3780 = vmatprep.subr.bf16.mxu0 0
  %3781 = vmatpush1.bf16.msra.mxu0 %v3682
  %3782 = vmatprep.subr.bf16.mxu0 0
  %3783 = vmatpush1.bf16.msra.mxu0 %v3683
  %3784 = vmatprep.subr.bf16.mxu0 0
  %3785 = vmatpush1.bf16.msra.mxu0 %v3684
  %3786 = vmatprep.subr.bf16.mxu0 0
  %3787 = vmatpush1.bf16.msra.mxu0 %v3685
  %3788 = vmatprep.subr.bf16.mxu0 0
  %3789 = vmatpush1.bf16.msra.mxu0 %v3686
  %3790 = vmatprep.subr.bf16.mxu0 0
  %3791 = vmatpush1.bf16.msra.mxu0 %v3687
  %3792 = vmatprep.mubr.bf16.mxu0 %v3456
  %3793 = vmatmul.mubr.bf16.gmra.mrb[0].mxu0 %v3455
  %v3794 = vpop.f32.mrb[0].mxu0
  %v3795 = vadd.f32 %v3755, %v3794
  %v3796 = vpop.f32.mrb[0].mxu0
  %v3797 = vpop.f32.mrb[0].mxu0
  %v3798 = vpop.f32.mrb[0].mxu0
  %3799 = vdwg.mxu0
  %3800 = vst [vmem:[%s13] sm:$0xff] %v3795
  // Predicated region
  $region50: #{res_conv_encoder_forward.1} parent=0 // pred_check
    _
  $region51: #{res_conv_encoder_forward.1} parent=0 // pred_check_branch
    %3802 = sbr.rel (0) target = $region53
  $region52: #{res_conv_encoder_forward.1} parent=0 // pred_region
    _
  $region53: #{res_conv_encoder_forward.1} parent=0 // pred_fallthru
    _
  // Predicated region
  $region54: #{res_conv_encoder_forward.1} parent=0 // pred_check
    _
  $region55: #{res_conv_encoder_forward.1} parent=0 // pred_check_branch
    %3804 = sbr.rel (0) target = $region57
  $region56: #{res_conv_encoder_forward.1} parent=0 // pred_region
    _
  $region57: #{res_conv_encoder_forward.1} parent=0 // pred_fallthru
    _
  // Predicated region
  $region58: #{res_conv_encoder_forward.1} parent=0 // pred_check
    _
  $region59: #{res_conv_encoder_forward.1} parent=0 // pred_check_branch
    %3806 = sbr.rel (0) target = $region61
  $region60: #{res_conv_encoder_forward.1} parent=0 // pred_region
    _
  $region61: #{res_conv_encoder_forward.1} parent=0 // pred_fallthru
    _
  // Predicated region
  $region62: #{res_conv_encoder_forward.1} parent=0 // pred_check
    _
  $region63: #{res_conv_encoder_forward.1} parent=0 // pred_check_branch
    %3808 = sbr.rel (0) target = $region65
  $region64: #{res_conv_encoder_forward.1} parent=0 // pred_region
    _
  $region65: #{res_conv_encoder_forward.1} parent=0 // pred_fallthru
    _

</llo_original>
